<compile_context>
chip_gen: v7x
topology: tpu7x:2x2x1
jax: 0.10.0
libtpu: 0.0.40
codegen_flags: <defaults>
</compile_context>

<pallas_src>
import numpy as np
import jax
import jax.numpy as jnp
from jax import lax
from jax.experimental import pallas as pl
from jax.experimental.pallas import tpu as pltpu


LRELU_SLOPE = 0.2


def _leaky_relu(y):
    return jnp.maximum(y, LRELU_SLOPE * y)


# ---------------------------------------------------------------------------
# Fused kernel: the entire encode_img stack for one image.
# ---------------------------------------------------------------------------
def _fused_encode_kernel(x_ref, *refs):
    """x_ref : (H, W*3) bf16  flattened NHWC image (rows = H, lanes = W*3).

    refs  : (w1, s1, ..., w6, s6, w7, s7, w8, s8, o_ref)
      w_l (l=1..6): (4, Wi*Cin, Wo*Cout) bf16  banded per-row-tap weights
                    (column taps + BN scale folded in).
      s_l         : (1, Wo*Cout) f32           folded BN shift tiled over Wo.
      w7/w8       : (Cin, Cout) bf16           centre tap of the 3x3 convs.
      o_ref       : (1, ndf*8) f32             final embedding.
    """
    o_ref = refs[-1]
    prm = refs[:-1]

    y = x_ref[...]                             # (Hi, Wi*Cin) bf16
    hi = y.shape[0]

    # --- six 4x4 / stride-2 / pad-1 conv (+BN shift) + LeakyReLU layers -----
    for li in range(6):
        w_ref = prm[2 * li]
        s_ref = prm[2 * li + 1]
        ho = hi // 2
        n_out = w_ref.shape[2]
        acc = jnp.zeros((ho, n_out), jnp.float32)
        for kh in range(4):
            # slab[r, :] = y[2*r + kh - 1, :]   (zero rows where out of range)
            if ho == 1:
                if kh in (0, 3):               # rows -1 / 2 are pure padding
                    continue
                slab = y[kh - 1:kh, :]
            else:
                row = lax.broadcasted_iota(jnp.int32, (ho, hi), 0)
                col = lax.broadcasted_iota(jnp.int32, (ho, hi), 1)
                sel = jnp.where(col == 2 * row + (kh - 1), 1.0, 0.0)
                sel = sel.astype(jnp.bfloat16)          # exact 0/1 row gather
                slab = jnp.dot(sel, y, preferred_element_type=jnp.float32)
                slab = slab.astype(jnp.bfloat16)
            acc = acc + jnp.dot(slab, w_ref[kh],
                                preferred_element_type=jnp.float32)
        y = _leaky_relu(acc + s_ref[...]).astype(jnp.bfloat16)
        hi = ho

    # --- layers 7 & 8: conv3x3 pad=1 on 1x1 spatial == centre-tap matmul ----
    w7, s7, w8, s8 = prm[12], prm[13], prm[14], prm[15]
    y = _leaky_relu(jnp.dot(y, w7[...], preferred_element_type=jnp.float32)
                    + s7[...]).astype(jnp.bfloat16)
    y = _leaky_relu(jnp.dot(y, w8[...], preferred_element_type=jnp.float32)
                    + s8[...])
    o_ref[...] = y


def _const_spec(arr):
    nd = arr.ndim
    return pl.BlockSpec(arr.shape, lambda n, _nd=nd: (0,) * _nd)


def stage2_d_forward(image_nchw, fused_params):
    """image (N,3,H,W) NCHW -> embedding (N, ndf*8, 1, 1); == encode_img."""
    N, C, H, W = image_nchw.shape
    x = jnp.transpose(image_nchw, (0, 2, 3, 1)).astype(jnp.float32)   # NHWC
    x_flat = x.reshape(N, H, W * C).astype(jnp.bfloat16)

    flat = [a for pair in fused_params for a in pair]
    c_out = fused_params[-1][1].shape[-1]

    out = pl.pallas_call(
        _fused_encode_kernel,
        out_shape=jax.ShapeDtypeStruct((N, 1, c_out), jnp.float32),
        grid=(N,),
        in_specs=[pl.BlockSpec((None, H, W * C), lambda n: (n, 0, 0))]
                 + [_const_spec(a) for a in flat],
        out_specs=pl.BlockSpec((None, 1, c_out), lambda n: (n, 0, 0)),
        compiler_params=pltpu.CompilerParams(
            dimension_semantics=("parallel",)),
    )(x_flat, *flat)
    return out.reshape(N, c_out, 1, 1)                   # NCHW, 1x1 spatial


# ---------------------------------------------------------------------------
# Parameter construction (deterministic init, eval-mode BN folded into conv).
# ---------------------------------------------------------------------------
def make_layer_weights(key, df_dim):
    ndf = df_dim
    eps = 1e-5
    layer_defs = [
        (3,        ndf,       4, 2, 1, False),
        (ndf,      ndf * 2,   4, 2, 1, True),
        (ndf * 2,  ndf * 4,   4, 2, 1, True),
        (ndf * 4,  ndf * 8,   4, 2, 1, True),
        (ndf * 8,  ndf * 16,  4, 2, 1, True),
        (ndf * 16, ndf * 32,  4, 2, 1, True),
        (ndf * 32, ndf * 16,  3, 1, 1, True),
        (ndf * 16, ndf * 8,   3, 1, 1, True),
    ]
    layers = []
    for (cin, cout, k, s, p, has_bn) in layer_defs:
        key, kw_, kg, kb = jax.random.split(key, 4)
        w_pt = 0.05 * jax.random.normal(kw_, (cout, cin, k, k), jnp.float32)
        if has_bn:
            gamma = 1.0 + 0.1 * jax.random.normal(kg, (cout,), jnp.float32)
            beta = 0.1 * jax.random.normal(kb, (cout,), jnp.float32)
            mean = jnp.zeros((cout,), jnp.float32)      # eval-mode running stats
            var = jnp.ones((cout,), jnp.float32)
            scale = gamma / jnp.sqrt(var + eps)
            shift = beta - mean * scale
        else:
            scale = jnp.ones((cout,), jnp.float32)
            shift = jnp.zeros((cout,), jnp.float32)
        # Fold BN scale into the weight, go to HWIO, round to bf16 once so the
        # kernel and the XLA reference see identical weight values.
        w_hwio = (jnp.transpose(w_pt, (2, 3, 1, 0)) * scale).astype(jnp.bfloat16)
        layers.append(dict(cin=cin, cout=cout, k=k, stride=s, pad=p,
                           w_hwio=w_hwio, shift=shift))
    return layers


def build_fused_params(layers, image_hw):
    """Pack weights for the fused kernel.

    Layers 1..6 (4x4/s2/p1): per row-tap kh a banded matrix
        Wb[kh][wi*Cin + ci, j*Cout + co] = w[kh, kw, ci, co],  wi = 2*j + kw - 1
    so out[r] = sum_kh slab_kh[r] @ Wb[kh], slab_kh[r] = x_row[2r + kh - 1].
    Layers 7..8 (3x3/p1 on 1x1 spatial) reduce to their centre tap.
    """
    params = []
    spatial = image_hw
    for L in layers[:6]:
        cin, cout = L["cin"], L["cout"]
        wi_n, wo_n = spatial, spatial // 2
        w = np.asarray(L["w_hwio"].astype(jnp.float32))          # (4,4,cin,cout)
        wb = np.zeros((4, wi_n * cin, wo_n * cout), np.float32)
        for kh in range(4):
            for j in range(wo_n):
                for kw in range(4):
                    wi = 2 * j + kw - 1
                    if 0 <= wi < wi_n:
                        wb[kh, wi * cin:(wi + 1) * cin,
                           j * cout:(j + 1) * cout] = w[kh, kw]
        shift = np.tile(np.asarray(L["shift"]), wo_n).reshape(1, wo_n * cout)
        params.append((jnp.asarray(wb, jnp.bfloat16),
                       jnp.asarray(shift, jnp.float32)))
        spatial = wo_n
    assert spatial == 1, "weight packing is specialised to 64x64 input images"

    for L in layers[6:8]:
        w_c = np.asarray(L["w_hwio"].astype(jnp.float32))[1, 1]  # centre tap
        shift = np.asarray(L["shift"]).reshape(1, -1)
        params.append((jnp.asarray(w_c, jnp.bfloat16),
                       jnp.asarray(shift, jnp.float32)))
    return params


# ---------------------------------------------------------------------------
# Plain-XLA reference (identical folded weights) for validation.
# ---------------------------------------------------------------------------
def reference_forward(image_nchw, layers):
    x = jnp.transpose(image_nchw, (0, 2, 3, 1)).astype(jnp.float32)
    for L in layers:
        y = lax.conv_general_dilated(
            x, L["w_hwio"].astype(jnp.float32),
            window_strides=(L["stride"], L["stride"]),
            padding=((L["pad"], L["pad"]),) * 2,
            dimension_numbers=("NHWC", "HWIO", "NHWC"),
            precision=lax.Precision.HIGHEST)
        x = _leaky_relu(y + L["shift"])
    return jnp.transpose(x, (0, 3, 1, 2))


if __name__ == "__main__":
    key = jax.random.PRNGKey(0)
    k_img, k_par = jax.random.split(key)

    df_dim = 4          # ndf (small); condition_dim is unused by forward()
    batch = 2
    hw = 64             # 64x64 -> six stride-2 convs -> 1x1, then two 3x3 convs
    image = jax.random.normal(k_img, (batch, 3, hw, hw), dtype=jnp.float32)

    layers = make_layer_weights(k_par, df_dim)
    fused_params = build_fused_params(layers, hw)

    fwd = jax.jit(lambda img: stage2_d_forward(img, fused_params))
    out = jax.block_until_ready(fwd(image))

    expected_shape = (batch, df_dim * 8, 1, 1)
    assert out.shape == expected_shape, (out.shape, expected_shape)
    assert bool(jnp.all(jnp.isfinite(out)))

    # Cross-check vs. a plain-XLA f32 reference with identical folded weights
    # (the kernel feeds bf16 activations to the MXU, so tolerance is loose).
    ref = jax.block_until_ready(reference_forward(image, layers))
    rel_err = float(jnp.linalg.norm(out - ref) /
                    (jnp.linalg.norm(ref) + 1e-12))
    assert rel_err < 5e-2, f"mismatch vs XLA reference: rel_l2={rel_err:.4f}"

    print("KERNEL_OK")
</pallas_src>

<mosaic_0001>
module attributes {stable_mosaic.version = 11 : i64} {
  func.func @_fused_encode_kernel(%arg0: i32, %arg1: memref<1x64x192xbf16, #tpu.memory_space<vmem>>, %arg2: memref<4x192x128xbf16, #tpu.memory_space<vmem>>, %arg3: memref<1x128xf32, #tpu.memory_space<vmem>>, %arg4: memref<4x128x128xbf16, #tpu.memory_space<vmem>>, %arg5: memref<1x128xf32, #tpu.memory_space<vmem>>, %arg6: memref<4x128x128xbf16, #tpu.memory_space<vmem>>, %arg7: memref<1x128xf32, #tpu.memory_space<vmem>>, %arg8: memref<4x128x128xbf16, #tpu.memory_space<vmem>>, %arg9: memref<1x128xf32, #tpu.memory_space<vmem>>, %arg10: memref<4x128x128xbf16, #tpu.memory_space<vmem>>, %arg11: memref<1x128xf32, #tpu.memory_space<vmem>>, %arg12: memref<4x128x128xbf16, #tpu.memory_space<vmem>>, %arg13: memref<1x128xf32, #tpu.memory_space<vmem>>, %arg14: memref<128x64xbf16, #tpu.memory_space<vmem>>, %arg15: memref<1x64xf32, #tpu.memory_space<vmem>>, %arg16: memref<64x32xbf16, #tpu.memory_space<vmem>>, %arg17: memref<1x32xf32, #tpu.memory_space<vmem>>, %arg18: memref<1x1x32xf32, #tpu.memory_space<vmem>>) attributes {dimension_semantics = [#tpu.dimension_semantics<parallel>], iteration_bounds = array<i64: 2>, scalar_prefetch = 0 : i64, scratch_operands = 0 : i64, tpu.core_type = #tpu.core_type<tc>, window_params = [{transform_indices = @transform_0, window_bounds = array<i64: 1, 64, 192>}, {pipeline_mode = #tpu.pipeline_mode<synchronous>, transform_indices = @transform_1, window_bounds = array<i64: 4, 192, 128>}, {pipeline_mode = #tpu.pipeline_mode<synchronous>, transform_indices = @transform_2, window_bounds = array<i64: 1, 128>}, {pipeline_mode = #tpu.pipeline_mode<synchronous>, transform_indices = @transform_3, window_bounds = array<i64: 4, 128, 128>}, {pipeline_mode = #tpu.pipeline_mode<synchronous>, transform_indices = @transform_4, window_bounds = array<i64: 1, 128>}, {pipeline_mode = #tpu.pipeline_mode<synchronous>, transform_indices = @transform_5, window_bounds = array<i64: 4, 128, 128>}, {pipeline_mode = #tpu.pipeline_mode<synchronous>, transform_indices = @transform_6, window_bounds = array<i64: 1, 128>}, {pipeline_mode = #tpu.pipeline_mode<synchronous>, transform_indices = @transform_7, window_bounds = array<i64: 4, 128, 128>}, {pipeline_mode = #tpu.pipeline_mode<synchronous>, transform_indices = @transform_8, window_bounds = array<i64: 1, 128>}, {pipeline_mode = #tpu.pipeline_mode<synchronous>, transform_indices = @transform_9, window_bounds = array<i64: 4, 128, 128>}, {pipeline_mode = #tpu.pipeline_mode<synchronous>, transform_indices = @transform_10, window_bounds = array<i64: 1, 128>}, {pipeline_mode = #tpu.pipeline_mode<synchronous>, transform_indices = @transform_11, window_bounds = array<i64: 4, 128, 128>}, {pipeline_mode = #tpu.pipeline_mode<synchronous>, transform_indices = @transform_12, window_bounds = array<i64: 1, 128>}, {pipeline_mode = #tpu.pipeline_mode<synchronous>, transform_indices = @transform_13, window_bounds = array<i64: 128, 64>}, {pipeline_mode = #tpu.pipeline_mode<synchronous>, transform_indices = @transform_14, window_bounds = array<i64: 1, 64>}, {pipeline_mode = #tpu.pipeline_mode<synchronous>, transform_indices = @transform_15, window_bounds = array<i64: 64, 32>}, {pipeline_mode = #tpu.pipeline_mode<synchronous>, transform_indices = @transform_16, window_bounds = array<i64: 1, 32>}, {transform_indices = @transform_17, window_bounds = array<i64: 1, 1, 32>}]} {
    %c0 = arith.constant 0 : index
    %c0_0 = arith.constant 0 : index
    %c0_1 = arith.constant 0 : index
    %0 = vector.load %arg1[%c0, %c0_0, %c0_1] : memref<1x64x192xbf16, #tpu.memory_space<vmem>>, vector<1x64x192xbf16>
    %1 = vector.shape_cast %0 : vector<1x64x192xbf16> to vector<64x192xbf16>
    %cst = arith.constant 0.000000e+00 : f32
    %2 = vector.broadcast %cst : f32 to vector<32x128xf32>
    %3 = tpu.iota {dimensions = array<i32: 0>} : vector<32x64xi32>
    %4 = tpu.iota {dimensions = array<i32: 1>} : vector<32x64xi32>
    %c2_i32 = arith.constant 2 : i32
    %5 = vector.broadcast %c2_i32 : i32 to vector<32x64xi32>
    %6 = arith.muli %5, %3 : vector<32x64xi32>
    %c-1_i32 = arith.constant -1 : i32
    %7 = vector.broadcast %c-1_i32 : i32 to vector<32x64xi32>
    %8 = arith.addi %6, %7 : vector<32x64xi32>
    %9 = arith.cmpi eq, %4, %8 : vector<32x64xi32>
    %cst_2 = arith.constant 1.000000e+00 : f32
    %cst_3 = arith.constant 0.000000e+00 : f32
    %10 = vector.broadcast %cst_2 : f32 to vector<32x64xf32>
    %11 = vector.broadcast %cst_3 : f32 to vector<32x64xf32>
    %12 = arith.select %9, %10, %11 : vector<32x64xi1>, vector<32x64xf32>
    %13 = arith.truncf %12 : vector<32x64xf32> to vector<32x64xbf16>
    %cst_4 = arith.constant dense<0.000000e+00> : vector<32x192xf32>
    %14 = tpu.matmul %13, %1, %cst_4 {dimension_numbers = #tpu.dot_dimension_numbers<[1], [0], [0], [1], [0, 0, 1, 1], [], []>} : vector<32x64xbf16>, vector<64x192xbf16>, vector<32x192xf32> -> vector<32x192xf32>
    %15 = arith.truncf %14 : vector<32x192xf32> to vector<32x192xbf16>
    %c0_5 = arith.constant 0 : index
    %c0_6 = arith.constant 0 : index
    %c0_7 = arith.constant 0 : index
    %16 = vector.load %arg2[%c0_5, %c0_6, %c0_7] : memref<4x192x128xbf16, #tpu.memory_space<vmem>>, vector<1x192x128xbf16>
    %17 = vector.shape_cast %16 : vector<1x192x128xbf16> to vector<192x128xbf16>
    %cst_8 = arith.constant dense<0.000000e+00> : vector<32x128xf32>
    %18 = tpu.matmul %15, %17, %cst_8 {dimension_numbers = #tpu.dot_dimension_numbers<[1], [0], [0], [1], [0, 0, 1, 1], [], []>} : vector<32x192xbf16>, vector<192x128xbf16>, vector<32x128xf32> -> vector<32x128xf32>
    %19 = arith.addf %2, %18 : vector<32x128xf32>
    %20 = tpu.iota {dimensions = array<i32: 0>} : vector<32x64xi32>
    %21 = tpu.iota {dimensions = array<i32: 1>} : vector<32x64xi32>
    %c2_i32_9 = arith.constant 2 : i32
    %22 = vector.broadcast %c2_i32_9 : i32 to vector<32x64xi32>
    %23 = arith.muli %22, %20 : vector<32x64xi32>
    %c0_i32 = arith.constant 0 : i32
    %24 = vector.broadcast %c0_i32 : i32 to vector<32x64xi32>
    %25 = arith.addi %23, %24 : vector<32x64xi32>
    %26 = arith.cmpi eq, %21, %25 : vector<32x64xi32>
    %cst_10 = arith.constant 1.000000e+00 : f32
    %cst_11 = arith.constant 0.000000e+00 : f32
    %27 = vector.broadcast %cst_10 : f32 to vector<32x64xf32>
    %28 = vector.broadcast %cst_11 : f32 to vector<32x64xf32>
    %29 = arith.select %26, %27, %28 : vector<32x64xi1>, vector<32x64xf32>
    %30 = arith.truncf %29 : vector<32x64xf32> to vector<32x64xbf16>
    %cst_12 = arith.constant dense<0.000000e+00> : vector<32x192xf32>
    %31 = tpu.matmul %30, %1, %cst_12 {dimension_numbers = #tpu.dot_dimension_numbers<[1], [0], [0], [1], [0, 0, 1, 1], [], []>} : vector<32x64xbf16>, vector<64x192xbf16>, vector<32x192xf32> -> vector<32x192xf32>
    %32 = arith.truncf %31 : vector<32x192xf32> to vector<32x192xbf16>
    %c1 = arith.constant 1 : index
    %c0_13 = arith.constant 0 : index
    %c0_14 = arith.constant 0 : index
    %33 = vector.load %arg2[%c1, %c0_13, %c0_14] : memref<4x192x128xbf16, #tpu.memory_space<vmem>>, vector<1x192x128xbf16>
    %34 = vector.shape_cast %33 : vector<1x192x128xbf16> to vector<192x128xbf16>
    %cst_15 = arith.constant dense<0.000000e+00> : vector<32x128xf32>
    %35 = tpu.matmul %32, %34, %cst_15 {dimension_numbers = #tpu.dot_dimension_numbers<[1], [0], [0], [1], [0, 0, 1, 1], [], []>} : vector<32x192xbf16>, vector<192x128xbf16>, vector<32x128xf32> -> vector<32x128xf32>
    %36 = arith.addf %19, %35 : vector<32x128xf32>
    %37 = tpu.iota {dimensions = array<i32: 0>} : vector<32x64xi32>
    %38 = tpu.iota {dimensions = array<i32: 1>} : vector<32x64xi32>
    %c2_i32_16 = arith.constant 2 : i32
    %39 = vector.broadcast %c2_i32_16 : i32 to vector<32x64xi32>
    %40 = arith.muli %39, %37 : vector<32x64xi32>
    %c1_i32 = arith.constant 1 : i32
    %41 = vector.broadcast %c1_i32 : i32 to vector<32x64xi32>
    %42 = arith.addi %40, %41 : vector<32x64xi32>
    %43 = arith.cmpi eq, %38, %42 : vector<32x64xi32>
    %cst_17 = arith.constant 1.000000e+00 : f32
    %cst_18 = arith.constant 0.000000e+00 : f32
    %44 = vector.broadcast %cst_17 : f32 to vector<32x64xf32>
    %45 = vector.broadcast %cst_18 : f32 to vector<32x64xf32>
    %46 = arith.select %43, %44, %45 : vector<32x64xi1>, vector<32x64xf32>
    %47 = arith.truncf %46 : vector<32x64xf32> to vector<32x64xbf16>
    %cst_19 = arith.constant dense<0.000000e+00> : vector<32x192xf32>
    %48 = tpu.matmul %47, %1, %cst_19 {dimension_numbers = #tpu.dot_dimension_numbers<[1], [0], [0], [1], [0, 0, 1, 1], [], []>} : vector<32x64xbf16>, vector<64x192xbf16>, vector<32x192xf32> -> vector<32x192xf32>
    %49 = arith.truncf %48 : vector<32x192xf32> to vector<32x192xbf16>
    %c2 = arith.constant 2 : index
    %c0_20 = arith.constant 0 : index
    %c0_21 = arith.constant 0 : index
    %50 = vector.load %arg2[%c2, %c0_20, %c0_21] : memref<4x192x128xbf16, #tpu.memory_space<vmem>>, vector<1x192x128xbf16>
    %51 = vector.shape_cast %50 : vector<1x192x128xbf16> to vector<192x128xbf16>
    %cst_22 = arith.constant dense<0.000000e+00> : vector<32x128xf32>
    %52 = tpu.matmul %49, %51, %cst_22 {dimension_numbers = #tpu.dot_dimension_numbers<[1], [0], [0], [1], [0, 0, 1, 1], [], []>} : vector<32x192xbf16>, vector<192x128xbf16>, vector<32x128xf32> -> vector<32x128xf32>
    %53 = arith.addf %36, %52 : vector<32x128xf32>
    %54 = tpu.iota {dimensions = array<i32: 0>} : vector<32x64xi32>
    %55 = tpu.iota {dimensions = array<i32: 1>} : vector<32x64xi32>
    %c2_i32_23 = arith.constant 2 : i32
    %56 = vector.broadcast %c2_i32_23 : i32 to vector<32x64xi32>
    %57 = arith.muli %56, %54 : vector<32x64xi32>
    %c2_i32_24 = arith.constant 2 : i32
    %58 = vector.broadcast %c2_i32_24 : i32 to vector<32x64xi32>
    %59 = arith.addi %57, %58 : vector<32x64xi32>
    %60 = arith.cmpi eq, %55, %59 : vector<32x64xi32>
    %cst_25 = arith.constant 1.000000e+00 : f32
    %cst_26 = arith.constant 0.000000e+00 : f32
    %61 = vector.broadcast %cst_25 : f32 to vector<32x64xf32>
    %62 = vector.broadcast %cst_26 : f32 to vector<32x64xf32>
    %63 = arith.select %60, %61, %62 : vector<32x64xi1>, vector<32x64xf32>
    %64 = arith.truncf %63 : vector<32x64xf32> to vector<32x64xbf16>
    %cst_27 = arith.constant dense<0.000000e+00> : vector<32x192xf32>
    %65 = tpu.matmul %64, %1, %cst_27 {dimension_numbers = #tpu.dot_dimension_numbers<[1], [0], [0], [1], [0, 0, 1, 1], [], []>} : vector<32x64xbf16>, vector<64x192xbf16>, vector<32x192xf32> -> vector<32x192xf32>
    %66 = arith.truncf %65 : vector<32x192xf32> to vector<32x192xbf16>
    %c3 = arith.constant 3 : index
    %c0_28 = arith.constant 0 : index
    %c0_29 = arith.constant 0 : index
    %67 = vector.load %arg2[%c3, %c0_28, %c0_29] : memref<4x192x128xbf16, #tpu.memory_space<vmem>>, vector<1x192x128xbf16>
    %68 = vector.shape_cast %67 : vector<1x192x128xbf16> to vector<192x128xbf16>
    %cst_30 = arith.constant dense<0.000000e+00> : vector<32x128xf32>
    %69 = tpu.matmul %66, %68, %cst_30 {dimension_numbers = #tpu.dot_dimension_numbers<[1], [0], [0], [1], [0, 0, 1, 1], [], []>} : vector<32x192xbf16>, vector<192x128xbf16>, vector<32x128xf32> -> vector<32x128xf32>
    %70 = arith.addf %53, %69 : vector<32x128xf32>
    %c0_31 = arith.constant 0 : index
    %c0_32 = arith.constant 0 : index
    %71 = vector.load %arg3[%c0_31, %c0_32] : memref<1x128xf32, #tpu.memory_space<vmem>>, vector<1x128xf32>
    %72 = vector.broadcast %71 : vector<1x128xf32> to vector<32x128xf32>
    %73 = arith.addf %70, %72 : vector<32x128xf32>
    %cst_33 = arith.constant 2.000000e-01 : f32
    %74 = vector.broadcast %cst_33 : f32 to vector<32x128xf32>
    %75 = arith.mulf %74, %73 : vector<32x128xf32>
    %76 = arith.maximumf %73, %75 : vector<32x128xf32>
    %77 = arith.truncf %76 : vector<32x128xf32> to vector<32x128xbf16>
    %cst_34 = arith.constant 0.000000e+00 : f32
    %78 = vector.broadcast %cst_34 : f32 to vector<16x128xf32>
    %79 = tpu.iota {dimensions = array<i32: 0>} : vector<16x32xi32>
    %80 = tpu.iota {dimensions = array<i32: 1>} : vector<16x32xi32>
    %c2_i32_35 = arith.constant 2 : i32
    %81 = vector.broadcast %c2_i32_35 : i32 to vector<16x32xi32>
    %82 = arith.muli %81, %79 : vector<16x32xi32>
    %c-1_i32_36 = arith.constant -1 : i32
    %83 = vector.broadcast %c-1_i32_36 : i32 to vector<16x32xi32>
    %84 = arith.addi %82, %83 : vector<16x32xi32>
    %85 = arith.cmpi eq, %80, %84 : vector<16x32xi32>
    %cst_37 = arith.constant 1.000000e+00 : f32
    %cst_38 = arith.constant 0.000000e+00 : f32
    %86 = vector.broadcast %cst_37 : f32 to vector<16x32xf32>
    %87 = vector.broadcast %cst_38 : f32 to vector<16x32xf32>
    %88 = arith.select %85, %86, %87 : vector<16x32xi1>, vector<16x32xf32>
    %89 = arith.truncf %88 : vector<16x32xf32> to vector<16x32xbf16>
    %cst_39 = arith.constant dense<0.000000e+00> : vector<16x128xf32>
    %90 = tpu.matmul %89, %77, %cst_39 {dimension_numbers = #tpu.dot_dimension_numbers<[1], [0], [0], [1], [0, 0, 1, 1], [], []>} : vector<16x32xbf16>, vector<32x128xbf16>, vector<16x128xf32> -> vector<16x128xf32>
    %91 = arith.truncf %90 : vector<16x128xf32> to vector<16x128xbf16>
    %c0_40 = arith.constant 0 : index
    %c0_41 = arith.constant 0 : index
    %c0_42 = arith.constant 0 : index
    %92 = vector.load %arg4[%c0_40, %c0_41, %c0_42] : memref<4x128x128xbf16, #tpu.memory_space<vmem>>, vector<1x128x128xbf16>
    %93 = vector.shape_cast %92 : vector<1x128x128xbf16> to vector<128x128xbf16>
    %cst_43 = arith.constant dense<0.000000e+00> : vector<16x128xf32>
    %94 = tpu.matmul %91, %93, %cst_43 {dimension_numbers = #tpu.dot_dimension_numbers<[1], [0], [0], [1], [0, 0, 1, 1], [], []>} : vector<16x128xbf16>, vector<128x128xbf16>, vector<16x128xf32> -> vector<16x128xf32>
    %95 = arith.addf %78, %94 : vector<16x128xf32>
    %96 = tpu.iota {dimensions = array<i32: 0>} : vector<16x32xi32>
    %97 = tpu.iota {dimensions = array<i32: 1>} : vector<16x32xi32>
    %c2_i32_44 = arith.constant 2 : i32
    %98 = vector.broadcast %c2_i32_44 : i32 to vector<16x32xi32>
    %99 = arith.muli %98, %96 : vector<16x32xi32>
    %c0_i32_45 = arith.constant 0 : i32
    %100 = vector.broadcast %c0_i32_45 : i32 to vector<16x32xi32>
    %101 = arith.addi %99, %100 : vector<16x32xi32>
    %102 = arith.cmpi eq, %97, %101 : vector<16x32xi32>
    %cst_46 = arith.constant 1.000000e+00 : f32
    %cst_47 = arith.constant 0.000000e+00 : f32
    %103 = vector.broadcast %cst_46 : f32 to vector<16x32xf32>
    %104 = vector.broadcast %cst_47 : f32 to vector<16x32xf32>
    %105 = arith.select %102, %103, %104 : vector<16x32xi1>, vector<16x32xf32>
    %106 = arith.truncf %105 : vector<16x32xf32> to vector<16x32xbf16>
    %cst_48 = arith.constant dense<0.000000e+00> : vector<16x128xf32>
    %107 = tpu.matmul %106, %77, %cst_48 {dimension_numbers = #tpu.dot_dimension_numbers<[1], [0], [0], [1], [0, 0, 1, 1], [], []>} : vector<16x32xbf16>, vector<32x128xbf16>, vector<16x128xf32> -> vector<16x128xf32>
    %108 = arith.truncf %107 : vector<16x128xf32> to vector<16x128xbf16>
    %c1_49 = arith.constant 1 : index
    %c0_50 = arith.constant 0 : index
    %c0_51 = arith.constant 0 : index
    %109 = vector.load %arg4[%c1_49, %c0_50, %c0_51] : memref<4x128x128xbf16, #tpu.memory_space<vmem>>, vector<1x128x128xbf16>
    %110 = vector.shape_cast %109 : vector<1x128x128xbf16> to vector<128x128xbf16>
    %cst_52 = arith.constant dense<0.000000e+00> : vector<16x128xf32>
    %111 = tpu.matmul %108, %110, %cst_52 {dimension_numbers = #tpu.dot_dimension_numbers<[1], [0], [0], [1], [0, 0, 1, 1], [], []>} : vector<16x128xbf16>, vector<128x128xbf16>, vector<16x128xf32> -> vector<16x128xf32>
    %112 = arith.addf %95, %111 : vector<16x128xf32>
    %113 = tpu.iota {dimensions = array<i32: 0>} : vector<16x32xi32>
    %114 = tpu.iota {dimensions = array<i32: 1>} : vector<16x32xi32>
    %c2_i32_53 = arith.constant 2 : i32
    %115 = vector.broadcast %c2_i32_53 : i32 to vector<16x32xi32>
    %116 = arith.muli %115, %113 : vector<16x32xi32>
    %c1_i32_54 = arith.constant 1 : i32
    %117 = vector.broadcast %c1_i32_54 : i32 to vector<16x32xi32>
    %118 = arith.addi %116, %117 : vector<16x32xi32>
    %119 = arith.cmpi eq, %114, %118 : vector<16x32xi32>
    %cst_55 = arith.constant 1.000000e+00 : f32
    %cst_56 = arith.constant 0.000000e+00 : f32
    %120 = vector.broadcast %cst_55 : f32 to vector<16x32xf32>
    %121 = vector.broadcast %cst_56 : f32 to vector<16x32xf32>
    %122 = arith.select %119, %120, %121 : vector<16x32xi1>, vector<16x32xf32>
    %123 = arith.truncf %122 : vector<16x32xf32> to vector<16x32xbf16>
    %cst_57 = arith.constant dense<0.000000e+00> : vector<16x128xf32>
    %124 = tpu.matmul %123, %77, %cst_57 {dimension_numbers = #tpu.dot_dimension_numbers<[1], [0], [0], [1], [0, 0, 1, 1], [], []>} : vector<16x32xbf16>, vector<32x128xbf16>, vector<16x128xf32> -> vector<16x128xf32>
    %125 = arith.truncf %124 : vector<16x128xf32> to vector<16x128xbf16>
    %c2_58 = arith.constant 2 : index
    %c0_59 = arith.constant 0 : index
    %c0_60 = arith.constant 0 : index
    %126 = vector.load %arg4[%c2_58, %c0_59, %c0_60] : memref<4x128x128xbf16, #tpu.memory_space<vmem>>, vector<1x128x128xbf16>
    %127 = vector.shape_cast %126 : vector<1x128x128xbf16> to vector<128x128xbf16>
    %cst_61 = arith.constant dense<0.000000e+00> : vector<16x128xf32>
    %128 = tpu.matmul %125, %127, %cst_61 {dimension_numbers = #tpu.dot_dimension_numbers<[1], [0], [0], [1], [0, 0, 1, 1], [], []>} : vector<16x128xbf16>, vector<128x128xbf16>, vector<16x128xf32> -> vector<16x128xf32>
    %129 = arith.addf %112, %128 : vector<16x128xf32>
    %130 = tpu.iota {dimensions = array<i32: 0>} : vector<16x32xi32>
    %131 = tpu.iota {dimensions = array<i32: 1>} : vector<16x32xi32>
    %c2_i32_62 = arith.constant 2 : i32
    %132 = vector.broadcast %c2_i32_62 : i32 to vector<16x32xi32>
    %133 = arith.muli %132, %130 : vector<16x32xi32>
    %c2_i32_63 = arith.constant 2 : i32
    %134 = vector.broadcast %c2_i32_63 : i32 to vector<16x32xi32>
    %135 = arith.addi %133, %134 : vector<16x32xi32>
    %136 = arith.cmpi eq, %131, %135 : vector<16x32xi32>
    %cst_64 = arith.constant 1.000000e+00 : f32
    %cst_65 = arith.constant 0.000000e+00 : f32
    %137 = vector.broadcast %cst_64 : f32 to vector<16x32xf32>
    %138 = vector.broadcast %cst_65 : f32 to vector<16x32xf32>
    %139 = arith.select %136, %137, %138 : vector<16x32xi1>, vector<16x32xf32>
    %140 = arith.truncf %139 : vector<16x32xf32> to vector<16x32xbf16>
    %cst_66 = arith.constant dense<0.000000e+00> : vector<16x128xf32>
    %141 = tpu.matmul %140, %77, %cst_66 {dimension_numbers = #tpu.dot_dimension_numbers<[1], [0], [0], [1], [0, 0, 1, 1], [], []>} : vector<16x32xbf16>, vector<32x128xbf16>, vector<16x128xf32> -> vector<16x128xf32>
    %142 = arith.truncf %141 : vector<16x128xf32> to vector<16x128xbf16>
    %c3_67 = arith.constant 3 : index
    %c0_68 = arith.constant 0 : index
    %c0_69 = arith.constant 0 : index
    %143 = vector.load %arg4[%c3_67, %c0_68, %c0_69] : memref<4x128x128xbf16, #tpu.memory_space<vmem>>, vector<1x128x128xbf16>
    %144 = vector.shape_cast %143 : vector<1x128x128xbf16> to vector<128x128xbf16>
    %cst_70 = arith.constant dense<0.000000e+00> : vector<16x128xf32>
    %145 = tpu.matmul %142, %144, %cst_70 {dimension_numbers = #tpu.dot_dimension_numbers<[1], [0], [0], [1], [0, 0, 1, 1], [], []>} : vector<16x128xbf16>, vector<128x128xbf16>, vector<16x128xf32> -> vector<16x128xf32>
    %146 = arith.addf %129, %145 : vector<16x128xf32>
    %c0_71 = arith.constant 0 : index
    %c0_72 = arith.constant 0 : index
    %147 = vector.load %arg5[%c0_71, %c0_72] : memref<1x128xf32, #tpu.memory_space<vmem>>, vector<1x128xf32>
    %148 = vector.broadcast %147 : vector<1x128xf32> to vector<16x128xf32>
    %149 = arith.addf %146, %148 : vector<16x128xf32>
    %cst_73 = arith.constant 2.000000e-01 : f32
    %150 = vector.broadcast %cst_73 : f32 to vector<16x128xf32>
    %151 = arith.mulf %150, %149 : vector<16x128xf32>
    %152 = arith.maximumf %149, %151 : vector<16x128xf32>
    %153 = arith.truncf %152 : vector<16x128xf32> to vector<16x128xbf16>
    %cst_74 = arith.constant 0.000000e+00 : f32
    %154 = vector.broadcast %cst_74 : f32 to vector<8x128xf32>
    %155 = tpu.iota {dimensions = array<i32: 0>} : vector<8x16xi32>
    %156 = tpu.iota {dimensions = array<i32: 1>} : vector<8x16xi32>
    %c2_i32_75 = arith.constant 2 : i32
    %157 = vector.broadcast %c2_i32_75 : i32 to vector<8x16xi32>
    %158 = arith.muli %157, %155 : vector<8x16xi32>
    %c-1_i32_76 = arith.constant -1 : i32
    %159 = vector.broadcast %c-1_i32_76 : i32 to vector<8x16xi32>
    %160 = arith.addi %158, %159 : vector<8x16xi32>
    %161 = arith.cmpi eq, %156, %160 : vector<8x16xi32>
    %cst_77 = arith.constant 1.000000e+00 : f32
    %cst_78 = arith.constant 0.000000e+00 : f32
    %162 = vector.broadcast %cst_77 : f32 to vector<8x16xf32>
    %163 = vector.broadcast %cst_78 : f32 to vector<8x16xf32>
    %164 = arith.select %161, %162, %163 : vector<8x16xi1>, vector<8x16xf32>
    %165 = arith.truncf %164 : vector<8x16xf32> to vector<8x16xbf16>
    %cst_79 = arith.constant dense<0.000000e+00> : vector<8x128xf32>
    %166 = tpu.matmul %165, %153, %cst_79 {dimension_numbers = #tpu.dot_dimension_numbers<[1], [0], [0], [1], [0, 0, 1, 1], [], []>} : vector<8x16xbf16>, vector<16x128xbf16>, vector<8x128xf32> -> vector<8x128xf32>
    %167 = arith.truncf %166 : vector<8x128xf32> to vector<8x128xbf16>
    %c0_80 = arith.constant 0 : index
    %c0_81 = arith.constant 0 : index
    %c0_82 = arith.constant 0 : index
    %168 = vector.load %arg6[%c0_80, %c0_81, %c0_82] : memref<4x128x128xbf16, #tpu.memory_space<vmem>>, vector<1x128x128xbf16>
    %169 = vector.shape_cast %168 : vector<1x128x128xbf16> to vector<128x128xbf16>
    %cst_83 = arith.constant dense<0.000000e+00> : vector<8x128xf32>
    %170 = tpu.matmul %167, %169, %cst_83 {dimension_numbers = #tpu.dot_dimension_numbers<[1], [0], [0], [1], [0, 0, 1, 1], [], []>} : vector<8x128xbf16>, vector<128x128xbf16>, vector<8x128xf32> -> vector<8x128xf32>
    %171 = arith.addf %154, %170 : vector<8x128xf32>
    %172 = tpu.iota {dimensions = array<i32: 0>} : vector<8x16xi32>
    %173 = tpu.iota {dimensions = array<i32: 1>} : vector<8x16xi32>
    %c2_i32_84 = arith.constant 2 : i32
    %174 = vector.broadcast %c2_i32_84 : i32 to vector<8x16xi32>
    %175 = arith.muli %174, %172 : vector<8x16xi32>
    %c0_i32_85 = arith.constant 0 : i32
    %176 = vector.broadcast %c0_i32_85 : i32 to vector<8x16xi32>
    %177 = arith.addi %175, %176 : vector<8x16xi32>
    %178 = arith.cmpi eq, %173, %177 : vector<8x16xi32>
    %cst_86 = arith.constant 1.000000e+00 : f32
    %cst_87 = arith.constant 0.000000e+00 : f32
    %179 = vector.broadcast %cst_86 : f32 to vector<8x16xf32>
    %180 = vector.broadcast %cst_87 : f32 to vector<8x16xf32>
    %181 = arith.select %178, %179, %180 : vector<8x16xi1>, vector<8x16xf32>
    %182 = arith.truncf %181 : vector<8x16xf32> to vector<8x16xbf16>
    %cst_88 = arith.constant dense<0.000000e+00> : vector<8x128xf32>
    %183 = tpu.matmul %182, %153, %cst_88 {dimension_numbers = #tpu.dot_dimension_numbers<[1], [0], [0], [1], [0, 0, 1, 1], [], []>} : vector<8x16xbf16>, vector<16x128xbf16>, vector<8x128xf32> -> vector<8x128xf32>
    %184 = arith.truncf %183 : vector<8x128xf32> to vector<8x128xbf16>
    %c1_89 = arith.constant 1 : index
    %c0_90 = arith.constant 0 : index
    %c0_91 = arith.constant 0 : index
    %185 = vector.load %arg6[%c1_89, %c0_90, %c0_91] : memref<4x128x128xbf16, #tpu.memory_space<vmem>>, vector<1x128x128xbf16>
    %186 = vector.shape_cast %185 : vector<1x128x128xbf16> to vector<128x128xbf16>
    %cst_92 = arith.constant dense<0.000000e+00> : vector<8x128xf32>
    %187 = tpu.matmul %184, %186, %cst_92 {dimension_numbers = #tpu.dot_dimension_numbers<[1], [0], [0], [1], [0, 0, 1, 1], [], []>} : vector<8x128xbf16>, vector<128x128xbf16>, vector<8x128xf32> -> vector<8x128xf32>
    %188 = arith.addf %171, %187 : vector<8x128xf32>
    %189 = tpu.iota {dimensions = array<i32: 0>} : vector<8x16xi32>
    %190 = tpu.iota {dimensions = array<i32: 1>} : vector<8x16xi32>
    %c2_i32_93 = arith.constant 2 : i32
    %191 = vector.broadcast %c2_i32_93 : i32 to vector<8x16xi32>
    %192 = arith.muli %191, %189 : vector<8x16xi32>
    %c1_i32_94 = arith.constant 1 : i32
    %193 = vector.broadcast %c1_i32_94 : i32 to vector<8x16xi32>
    %194 = arith.addi %192, %193 : vector<8x16xi32>
    %195 = arith.cmpi eq, %190, %194 : vector<8x16xi32>
    %cst_95 = arith.constant 1.000000e+00 : f32
    %cst_96 = arith.constant 0.000000e+00 : f32
    %196 = vector.broadcast %cst_95 : f32 to vector<8x16xf32>
    %197 = vector.broadcast %cst_96 : f32 to vector<8x16xf32>
    %198 = arith.select %195, %196, %197 : vector<8x16xi1>, vector<8x16xf32>
    %199 = arith.truncf %198 : vector<8x16xf32> to vector<8x16xbf16>
    %cst_97 = arith.constant dense<0.000000e+00> : vector<8x128xf32>
    %200 = tpu.matmul %199, %153, %cst_97 {dimension_numbers = #tpu.dot_dimension_numbers<[1], [0], [0], [1], [0, 0, 1, 1], [], []>} : vector<8x16xbf16>, vector<16x128xbf16>, vector<8x128xf32> -> vector<8x128xf32>
    %201 = arith.truncf %200 : vector<8x128xf32> to vector<8x128xbf16>
    %c2_98 = arith.constant 2 : index
    %c0_99 = arith.constant 0 : index
    %c0_100 = arith.constant 0 : index
    %202 = vector.load %arg6[%c2_98, %c0_99, %c0_100] : memref<4x128x128xbf16, #tpu.memory_space<vmem>>, vector<1x128x128xbf16>
    %203 = vector.shape_cast %202 : vector<1x128x128xbf16> to vector<128x128xbf16>
    %cst_101 = arith.constant dense<0.000000e+00> : vector<8x128xf32>
    %204 = tpu.matmul %201, %203, %cst_101 {dimension_numbers = #tpu.dot_dimension_numbers<[1], [0], [0], [1], [0, 0, 1, 1], [], []>} : vector<8x128xbf16>, vector<128x128xbf16>, vector<8x128xf32> -> vector<8x128xf32>
    %205 = arith.addf %188, %204 : vector<8x128xf32>
    %206 = tpu.iota {dimensions = array<i32: 0>} : vector<8x16xi32>
    %207 = tpu.iota {dimensions = array<i32: 1>} : vector<8x16xi32>
    %c2_i32_102 = arith.constant 2 : i32
    %208 = vector.broadcast %c2_i32_102 : i32 to vector<8x16xi32>
    %209 = arith.muli %208, %206 : vector<8x16xi32>
    %c2_i32_103 = arith.constant 2 : i32
    %210 = vector.broadcast %c2_i32_103 : i32 to vector<8x16xi32>
    %211 = arith.addi %209, %210 : vector<8x16xi32>
    %212 = arith.cmpi eq, %207, %211 : vector<8x16xi32>
    %cst_104 = arith.constant 1.000000e+00 : f32
    %cst_105 = arith.constant 0.000000e+00 : f32
    %213 = vector.broadcast %cst_104 : f32 to vector<8x16xf32>
    %214 = vector.broadcast %cst_105 : f32 to vector<8x16xf32>
    %215 = arith.select %212, %213, %214 : vector<8x16xi1>, vector<8x16xf32>
    %216 = arith.truncf %215 : vector<8x16xf32> to vector<8x16xbf16>
    %cst_106 = arith.constant dense<0.000000e+00> : vector<8x128xf32>
    %217 = tpu.matmul %216, %153, %cst_106 {dimension_numbers = #tpu.dot_dimension_numbers<[1], [0], [0], [1], [0, 0, 1, 1], [], []>} : vector<8x16xbf16>, vector<16x128xbf16>, vector<8x128xf32> -> vector<8x128xf32>
    %218 = arith.truncf %217 : vector<8x128xf32> to vector<8x128xbf16>
    %c3_107 = arith.constant 3 : index
    %c0_108 = arith.constant 0 : index
    %c0_109 = arith.constant 0 : index
    %219 = vector.load %arg6[%c3_107, %c0_108, %c0_109] : memref<4x128x128xbf16, #tpu.memory_space<vmem>>, vector<1x128x128xbf16>
    %220 = vector.shape_cast %219 : vector<1x128x128xbf16> to vector<128x128xbf16>
    %cst_110 = arith.constant dense<0.000000e+00> : vector<8x128xf32>
    %221 = tpu.matmul %218, %220, %cst_110 {dimension_numbers = #tpu.dot_dimension_numbers<[1], [0], [0], [1], [0, 0, 1, 1], [], []>} : vector<8x128xbf16>, vector<128x128xbf16>, vector<8x128xf32> -> vector<8x128xf32>
    %222 = arith.addf %205, %221 : vector<8x128xf32>
    %c0_111 = arith.constant 0 : index
    %c0_112 = arith.constant 0 : index
    %223 = vector.load %arg7[%c0_111, %c0_112] : memref<1x128xf32, #tpu.memory_space<vmem>>, vector<1x128xf32>
    %224 = vector.broadcast %223 : vector<1x128xf32> to vector<8x128xf32>
    %225 = arith.addf %222, %224 : vector<8x128xf32>
    %cst_113 = arith.constant 2.000000e-01 : f32
    %226 = vector.broadcast %cst_113 : f32 to vector<8x128xf32>
    %227 = arith.mulf %226, %225 : vector<8x128xf32>
    %228 = arith.maximumf %225, %227 : vector<8x128xf32>
    %229 = arith.truncf %228 : vector<8x128xf32> to vector<8x128xbf16>
    %cst_114 = arith.constant 0.000000e+00 : f32
    %230 = vector.broadcast %cst_114 : f32 to vector<4x128xf32>
    %231 = tpu.iota {dimensions = array<i32: 0>} : vector<4x8xi32>
    %232 = tpu.iota {dimensions = array<i32: 1>} : vector<4x8xi32>
    %c2_i32_115 = arith.constant 2 : i32
    %233 = vector.broadcast %c2_i32_115 : i32 to vector<4x8xi32>
    %234 = arith.muli %233, %231 : vector<4x8xi32>
    %c-1_i32_116 = arith.constant -1 : i32
    %235 = vector.broadcast %c-1_i32_116 : i32 to vector<4x8xi32>
    %236 = arith.addi %234, %235 : vector<4x8xi32>
    %237 = arith.cmpi eq, %232, %236 : vector<4x8xi32>
    %cst_117 = arith.constant 1.000000e+00 : f32
    %cst_118 = arith.constant 0.000000e+00 : f32
    %238 = vector.broadcast %cst_117 : f32 to vector<4x8xf32>
    %239 = vector.broadcast %cst_118 : f32 to vector<4x8xf32>
    %240 = arith.select %237, %238, %239 : vector<4x8xi1>, vector<4x8xf32>
    %241 = arith.truncf %240 : vector<4x8xf32> to vector<4x8xbf16>
    %cst_119 = arith.constant dense<0.000000e+00> : vector<4x128xf32>
    %242 = tpu.matmul %241, %229, %cst_119 {dimension_numbers = #tpu.dot_dimension_numbers<[1], [0], [0], [1], [0, 0, 1, 1], [], []>} : vector<4x8xbf16>, vector<8x128xbf16>, vector<4x128xf32> -> vector<4x128xf32>
    %243 = arith.truncf %242 : vector<4x128xf32> to vector<4x128xbf16>
    %c0_120 = arith.constant 0 : index
    %c0_121 = arith.constant 0 : index
    %c0_122 = arith.constant 0 : index
    %244 = vector.load %arg8[%c0_120, %c0_121, %c0_122] : memref<4x128x128xbf16, #tpu.memory_space<vmem>>, vector<1x128x128xbf16>
    %245 = vector.shape_cast %244 : vector<1x128x128xbf16> to vector<128x128xbf16>
    %cst_123 = arith.constant dense<0.000000e+00> : vector<4x128xf32>
    %246 = tpu.matmul %243, %245, %cst_123 {dimension_numbers = #tpu.dot_dimension_numbers<[1], [0], [0], [1], [0, 0, 1, 1], [], []>} : vector<4x128xbf16>, vector<128x128xbf16>, vector<4x128xf32> -> vector<4x128xf32>
    %247 = arith.addf %230, %246 : vector<4x128xf32>
    %248 = tpu.iota {dimensions = array<i32: 0>} : vector<4x8xi32>
    %249 = tpu.iota {dimensions = array<i32: 1>} : vector<4x8xi32>
    %c2_i32_124 = arith.constant 2 : i32
    %250 = vector.broadcast %c2_i32_124 : i32 to vector<4x8xi32>
    %251 = arith.muli %250, %248 : vector<4x8xi32>
    %c0_i32_125 = arith.constant 0 : i32
    %252 = vector.broadcast %c0_i32_125 : i32 to vector<4x8xi32>
    %253 = arith.addi %251, %252 : vector<4x8xi32>
    %254 = arith.cmpi eq, %249, %253 : vector<4x8xi32>
    %cst_126 = arith.constant 1.000000e+00 : f32
    %cst_127 = arith.constant 0.000000e+00 : f32
    %255 = vector.broadcast %cst_126 : f32 to vector<4x8xf32>
    %256 = vector.broadcast %cst_127 : f32 to vector<4x8xf32>
    %257 = arith.select %254, %255, %256 : vector<4x8xi1>, vector<4x8xf32>
    %258 = arith.truncf %257 : vector<4x8xf32> to vector<4x8xbf16>
    %cst_128 = arith.constant dense<0.000000e+00> : vector<4x128xf32>
    %259 = tpu.matmul %258, %229, %cst_128 {dimension_numbers = #tpu.dot_dimension_numbers<[1], [0], [0], [1], [0, 0, 1, 1], [], []>} : vector<4x8xbf16>, vector<8x128xbf16>, vector<4x128xf32> -> vector<4x128xf32>
    %260 = arith.truncf %259 : vector<4x128xf32> to vector<4x128xbf16>
    %c1_129 = arith.constant 1 : index
    %c0_130 = arith.constant 0 : index
    %c0_131 = arith.constant 0 : index
    %261 = vector.load %arg8[%c1_129, %c0_130, %c0_131] : memref<4x128x128xbf16, #tpu.memory_space<vmem>>, vector<1x128x128xbf16>
    %262 = vector.shape_cast %261 : vector<1x128x128xbf16> to vector<128x128xbf16>
    %cst_132 = arith.constant dense<0.000000e+00> : vector<4x128xf32>
    %263 = tpu.matmul %260, %262, %cst_132 {dimension_numbers = #tpu.dot_dimension_numbers<[1], [0], [0], [1], [0, 0, 1, 1], [], []>} : vector<4x128xbf16>, vector<128x128xbf16>, vector<4x128xf32> -> vector<4x128xf32>
    %264 = arith.addf %247, %263 : vector<4x128xf32>
    %265 = tpu.iota {dimensions = array<i32: 0>} : vector<4x8xi32>
    %266 = tpu.iota {dimensions = array<i32: 1>} : vector<4x8xi32>
    %c2_i32_133 = arith.constant 2 : i32
    %267 = vector.broadcast %c2_i32_133 : i32 to vector<4x8xi32>
    %268 = arith.muli %267, %265 : vector<4x8xi32>
    %c1_i32_134 = arith.constant 1 : i32
    %269 = vector.broadcast %c1_i32_134 : i32 to vector<4x8xi32>
    %270 = arith.addi %268, %269 : vector<4x8xi32>
    %271 = arith.cmpi eq, %266, %270 : vector<4x8xi32>
    %cst_135 = arith.constant 1.000000e+00 : f32
    %cst_136 = arith.constant 0.000000e+00 : f32
    %272 = vector.broadcast %cst_135 : f32 to vector<4x8xf32>
    %273 = vector.broadcast %cst_136 : f32 to vector<4x8xf32>
    %274 = arith.select %271, %272, %273 : vector<4x8xi1>, vector<4x8xf32>
    %275 = arith.truncf %274 : vector<4x8xf32> to vector<4x8xbf16>
    %cst_137 = arith.constant dense<0.000000e+00> : vector<4x128xf32>
    %276 = tpu.matmul %275, %229, %cst_137 {dimension_numbers = #tpu.dot_dimension_numbers<[1], [0], [0], [1], [0, 0, 1, 1], [], []>} : vector<4x8xbf16>, vector<8x128xbf16>, vector<4x128xf32> -> vector<4x128xf32>
    %277 = arith.truncf %276 : vector<4x128xf32> to vector<4x128xbf16>
    %c2_138 = arith.constant 2 : index
    %c0_139 = arith.constant 0 : index
    %c0_140 = arith.constant 0 : index
    %278 = vector.load %arg8[%c2_138, %c0_139, %c0_140] : memref<4x128x128xbf16, #tpu.memory_space<vmem>>, vector<1x128x128xbf16>
    %279 = vector.shape_cast %278 : vector<1x128x128xbf16> to vector<128x128xbf16>
    %cst_141 = arith.constant dense<0.000000e+00> : vector<4x128xf32>
    %280 = tpu.matmul %277, %279, %cst_141 {dimension_numbers = #tpu.dot_dimension_numbers<[1], [0], [0], [1], [0, 0, 1, 1], [], []>} : vector<4x128xbf16>, vector<128x128xbf16>, vector<4x128xf32> -> vector<4x128xf32>
    %281 = arith.addf %264, %280 : vector<4x128xf32>
    %282 = tpu.iota {dimensions = array<i32: 0>} : vector<4x8xi32>
    %283 = tpu.iota {dimensions = array<i32: 1>} : vector<4x8xi32>
    %c2_i32_142 = arith.constant 2 : i32
    %284 = vector.broadcast %c2_i32_142 : i32 to vector<4x8xi32>
    %285 = arith.muli %284, %282 : vector<4x8xi32>
    %c2_i32_143 = arith.constant 2 : i32
    %286 = vector.broadcast %c2_i32_143 : i32 to vector<4x8xi32>
    %287 = arith.addi %285, %286 : vector<4x8xi32>
    %288 = arith.cmpi eq, %283, %287 : vector<4x8xi32>
    %cst_144 = arith.constant 1.000000e+00 : f32
    %cst_145 = arith.constant 0.000000e+00 : f32
    %289 = vector.broadcast %cst_144 : f32 to vector<4x8xf32>
    %290 = vector.broadcast %cst_145 : f32 to vector<4x8xf32>
    %291 = arith.select %288, %289, %290 : vector<4x8xi1>, vector<4x8xf32>
    %292 = arith.truncf %291 : vector<4x8xf32> to vector<4x8xbf16>
    %cst_146 = arith.constant dense<0.000000e+00> : vector<4x128xf32>
    %293 = tpu.matmul %292, %229, %cst_146 {dimension_numbers = #tpu.dot_dimension_numbers<[1], [0], [0], [1], [0, 0, 1, 1], [], []>} : vector<4x8xbf16>, vector<8x128xbf16>, vector<4x128xf32> -> vector<4x128xf32>
    %294 = arith.truncf %293 : vector<4x128xf32> to vector<4x128xbf16>
    %c3_147 = arith.constant 3 : index
    %c0_148 = arith.constant 0 : index
    %c0_149 = arith.constant 0 : index
    %295 = vector.load %arg8[%c3_147, %c0_148, %c0_149] : memref<4x128x128xbf16, #tpu.memory_space<vmem>>, vector<1x128x128xbf16>
    %296 = vector.shape_cast %295 : vector<1x128x128xbf16> to vector<128x128xbf16>
    %cst_150 = arith.constant dense<0.000000e+00> : vector<4x128xf32>
    %297 = tpu.matmul %294, %296, %cst_150 {dimension_numbers = #tpu.dot_dimension_numbers<[1], [0], [0], [1], [0, 0, 1, 1], [], []>} : vector<4x128xbf16>, vector<128x128xbf16>, vector<4x128xf32> -> vector<4x128xf32>
    %298 = arith.addf %281, %297 : vector<4x128xf32>
    %c0_151 = arith.constant 0 : index
    %c0_152 = arith.constant 0 : index
    %299 = vector.load %arg9[%c0_151, %c0_152] : memref<1x128xf32, #tpu.memory_space<vmem>>, vector<1x128xf32>
    %300 = vector.broadcast %299 : vector<1x128xf32> to vector<4x128xf32>
    %301 = arith.addf %298, %300 : vector<4x128xf32>
    %cst_153 = arith.constant 2.000000e-01 : f32
    %302 = vector.broadcast %cst_153 : f32 to vector<4x128xf32>
    %303 = arith.mulf %302, %301 : vector<4x128xf32>
    %304 = arith.maximumf %301, %303 : vector<4x128xf32>
    %305 = arith.truncf %304 : vector<4x128xf32> to vector<4x128xbf16>
    %cst_154 = arith.constant 0.000000e+00 : f32
    %306 = vector.broadcast %cst_154 : f32 to vector<2x128xf32>
    %307 = tpu.iota {dimensions = array<i32: 0>} : vector<2x4xi32>
    %308 = tpu.iota {dimensions = array<i32: 1>} : vector<2x4xi32>
    %c2_i32_155 = arith.constant 2 : i32
    %309 = vector.broadcast %c2_i32_155 : i32 to vector<2x4xi32>
    %310 = arith.muli %309, %307 : vector<2x4xi32>
    %c-1_i32_156 = arith.constant -1 : i32
    %311 = vector.broadcast %c-1_i32_156 : i32 to vector<2x4xi32>
    %312 = arith.addi %310, %311 : vector<2x4xi32>
    %313 = arith.cmpi eq, %308, %312 : vector<2x4xi32>
    %cst_157 = arith.constant 1.000000e+00 : f32
    %cst_158 = arith.constant 0.000000e+00 : f32
    %314 = vector.broadcast %cst_157 : f32 to vector<2x4xf32>
    %315 = vector.broadcast %cst_158 : f32 to vector<2x4xf32>
    %316 = arith.select %313, %314, %315 : vector<2x4xi1>, vector<2x4xf32>
    %317 = arith.truncf %316 : vector<2x4xf32> to vector<2x4xbf16>
    %cst_159 = arith.constant dense<0.000000e+00> : vector<2x128xf32>
    %318 = tpu.matmul %317, %305, %cst_159 {dimension_numbers = #tpu.dot_dimension_numbers<[1], [0], [0], [1], [0, 0, 1, 1], [], []>} : vector<2x4xbf16>, vector<4x128xbf16>, vector<2x128xf32> -> vector<2x128xf32>
    %319 = arith.truncf %318 : vector<2x128xf32> to vector<2x128xbf16>
    %c0_160 = arith.constant 0 : index
    %c0_161 = arith.constant 0 : index
    %c0_162 = arith.constant 0 : index
    %320 = vector.load %arg10[%c0_160, %c0_161, %c0_162] : memref<4x128x128xbf16, #tpu.memory_space<vmem>>, vector<1x128x128xbf16>
    %321 = vector.shape_cast %320 : vector<1x128x128xbf16> to vector<128x128xbf16>
    %cst_163 = arith.constant dense<0.000000e+00> : vector<2x128xf32>
    %322 = tpu.matmul %319, %321, %cst_163 {dimension_numbers = #tpu.dot_dimension_numbers<[1], [0], [0], [1], [0, 0, 1, 1], [], []>} : vector<2x128xbf16>, vector<128x128xbf16>, vector<2x128xf32> -> vector<2x128xf32>
    %323 = arith.addf %306, %322 : vector<2x128xf32>
    %324 = tpu.iota {dimensions = array<i32: 0>} : vector<2x4xi32>
    %325 = tpu.iota {dimensions = array<i32: 1>} : vector<2x4xi32>
    %c2_i32_164 = arith.constant 2 : i32
    %326 = vector.broadcast %c2_i32_164 : i32 to vector<2x4xi32>
    %327 = arith.muli %326, %324 : vector<2x4xi32>
    %c0_i32_165 = arith.constant 0 : i32
    %328 = vector.broadcast %c0_i32_165 : i32 to vector<2x4xi32>
    %329 = arith.addi %327, %328 : vector<2x4xi32>
    %330 = arith.cmpi eq, %325, %329 : vector<2x4xi32>
    %cst_166 = arith.constant 1.000000e+00 : f32
    %cst_167 = arith.constant 0.000000e+00 : f32
    %331 = vector.broadcast %cst_166 : f32 to vector<2x4xf32>
    %332 = vector.broadcast %cst_167 : f32 to vector<2x4xf32>
    %333 = arith.select %330, %331, %332 : vector<2x4xi1>, vector<2x4xf32>
    %334 = arith.truncf %333 : vector<2x4xf32> to vector<2x4xbf16>
    %cst_168 = arith.constant dense<0.000000e+00> : vector<2x128xf32>
    %335 = tpu.matmul %334, %305, %cst_168 {dimension_numbers = #tpu.dot_dimension_numbers<[1], [0], [0], [1], [0, 0, 1, 1], [], []>} : vector<2x4xbf16>, vector<4x128xbf16>, vector<2x128xf32> -> vector<2x128xf32>
    %336 = arith.truncf %335 : vector<2x128xf32> to vector<2x128xbf16>
    %c1_169 = arith.constant 1 : index
    %c0_170 = arith.constant 0 : index
    %c0_171 = arith.constant 0 : index
    %337 = vector.load %arg10[%c1_169, %c0_170, %c0_171] : memref<4x128x128xbf16, #tpu.memory_space<vmem>>, vector<1x128x128xbf16>
    %338 = vector.shape_cast %337 : vector<1x128x128xbf16> to vector<128x128xbf16>
    %cst_172 = arith.constant dense<0.000000e+00> : vector<2x128xf32>
    %339 = tpu.matmul %336, %338, %cst_172 {dimension_numbers = #tpu.dot_dimension_numbers<[1], [0], [0], [1], [0, 0, 1, 1], [], []>} : vector<2x128xbf16>, vector<128x128xbf16>, vector<2x128xf32> -> vector<2x128xf32>
    %340 = arith.addf %323, %339 : vector<2x128xf32>
    %341 = tpu.iota {dimensions = array<i32: 0>} : vector<2x4xi32>
    %342 = tpu.iota {dimensions = array<i32: 1>} : vector<2x4xi32>
    %c2_i32_173 = arith.constant 2 : i32
    %343 = vector.broadcast %c2_i32_173 : i32 to vector<2x4xi32>
    %344 = arith.muli %343, %341 : vector<2x4xi32>
    %c1_i32_174 = arith.constant 1 : i32
    %345 = vector.broadcast %c1_i32_174 : i32 to vector<2x4xi32>
    %346 = arith.addi %344, %345 : vector<2x4xi32>
    %347 = arith.cmpi eq, %342, %346 : vector<2x4xi32>
    %cst_175 = arith.constant 1.000000e+00 : f32
    %cst_176 = arith.constant 0.000000e+00 : f32
    %348 = vector.broadcast %cst_175 : f32 to vector<2x4xf32>
    %349 = vector.broadcast %cst_176 : f32 to vector<2x4xf32>
    %350 = arith.select %347, %348, %349 : vector<2x4xi1>, vector<2x4xf32>
    %351 = arith.truncf %350 : vector<2x4xf32> to vector<2x4xbf16>
    %cst_177 = arith.constant dense<0.000000e+00> : vector<2x128xf32>
    %352 = tpu.matmul %351, %305, %cst_177 {dimension_numbers = #tpu.dot_dimension_numbers<[1], [0], [0], [1], [0, 0, 1, 1], [], []>} : vector<2x4xbf16>, vector<4x128xbf16>, vector<2x128xf32> -> vector<2x128xf32>
    %353 = arith.truncf %352 : vector<2x128xf32> to vector<2x128xbf16>
    %c2_178 = arith.constant 2 : index
    %c0_179 = arith.constant 0 : index
    %c0_180 = arith.constant 0 : index
    %354 = vector.load %arg10[%c2_178, %c0_179, %c0_180] : memref<4x128x128xbf16, #tpu.memory_space<vmem>>, vector<1x128x128xbf16>
    %355 = vector.shape_cast %354 : vector<1x128x128xbf16> to vector<128x128xbf16>
    %cst_181 = arith.constant dense<0.000000e+00> : vector<2x128xf32>
    %356 = tpu.matmul %353, %355, %cst_181 {dimension_numbers = #tpu.dot_dimension_numbers<[1], [0], [0], [1], [0, 0, 1, 1], [], []>} : vector<2x128xbf16>, vector<128x128xbf16>, vector<2x128xf32> -> vector<2x128xf32>
    %357 = arith.addf %340, %356 : vector<2x128xf32>
    %358 = tpu.iota {dimensions = array<i32: 0>} : vector<2x4xi32>
    %359 = tpu.iota {dimensions = array<i32: 1>} : vector<2x4xi32>
    %c2_i32_182 = arith.constant 2 : i32
    %360 = vector.broadcast %c2_i32_182 : i32 to vector<2x4xi32>
    %361 = arith.muli %360, %358 : vector<2x4xi32>
    %c2_i32_183 = arith.constant 2 : i32
    %362 = vector.broadcast %c2_i32_183 : i32 to vector<2x4xi32>
    %363 = arith.addi %361, %362 : vector<2x4xi32>
    %364 = arith.cmpi eq, %359, %363 : vector<2x4xi32>
    %cst_184 = arith.constant 1.000000e+00 : f32
    %cst_185 = arith.constant 0.000000e+00 : f32
    %365 = vector.broadcast %cst_184 : f32 to vector<2x4xf32>
    %366 = vector.broadcast %cst_185 : f32 to vector<2x4xf32>
    %367 = arith.select %364, %365, %366 : vector<2x4xi1>, vector<2x4xf32>
    %368 = arith.truncf %367 : vector<2x4xf32> to vector<2x4xbf16>
    %cst_186 = arith.constant dense<0.000000e+00> : vector<2x128xf32>
    %369 = tpu.matmul %368, %305, %cst_186 {dimension_numbers = #tpu.dot_dimension_numbers<[1], [0], [0], [1], [0, 0, 1, 1], [], []>} : vector<2x4xbf16>, vector<4x128xbf16>, vector<2x128xf32> -> vector<2x128xf32>
    %370 = arith.truncf %369 : vector<2x128xf32> to vector<2x128xbf16>
    %c3_187 = arith.constant 3 : index
    %c0_188 = arith.constant 0 : index
    %c0_189 = arith.constant 0 : index
    %371 = vector.load %arg10[%c3_187, %c0_188, %c0_189] : memref<4x128x128xbf16, #tpu.memory_space<vmem>>, vector<1x128x128xbf16>
    %372 = vector.shape_cast %371 : vector<1x128x128xbf16> to vector<128x128xbf16>
    %cst_190 = arith.constant dense<0.000000e+00> : vector<2x128xf32>
    %373 = tpu.matmul %370, %372, %cst_190 {dimension_numbers = #tpu.dot_dimension_numbers<[1], [0], [0], [1], [0, 0, 1, 1], [], []>} : vector<2x128xbf16>, vector<128x128xbf16>, vector<2x128xf32> -> vector<2x128xf32>
    %374 = arith.addf %357, %373 : vector<2x128xf32>
    %c0_191 = arith.constant 0 : index
    %c0_192 = arith.constant 0 : index
    %375 = vector.load %arg11[%c0_191, %c0_192] : memref<1x128xf32, #tpu.memory_space<vmem>>, vector<1x128xf32>
    %376 = vector.broadcast %375 : vector<1x128xf32> to vector<2x128xf32>
    %377 = arith.addf %374, %376 : vector<2x128xf32>
    %cst_193 = arith.constant 2.000000e-01 : f32
    %378 = vector.broadcast %cst_193 : f32 to vector<2x128xf32>
    %379 = arith.mulf %378, %377 : vector<2x128xf32>
    %380 = arith.maximumf %377, %379 : vector<2x128xf32>
    %381 = arith.truncf %380 : vector<2x128xf32> to vector<2x128xbf16>
    %cst_194 = arith.constant 0.000000e+00 : f32
    %382 = vector.broadcast %cst_194 : f32 to vector<1x128xf32>
    %383 = vector.extract_strided_slice %381 {offsets = [0, 0], sizes = [1, 128], strides = [1, 1]} : vector<2x128xbf16> to vector<1x128xbf16>
    %c1_195 = arith.constant 1 : index
    %c0_196 = arith.constant 0 : index
    %c0_197 = arith.constant 0 : index
    %384 = vector.load %arg12[%c1_195, %c0_196, %c0_197] : memref<4x128x128xbf16, #tpu.memory_space<vmem>>, vector<1x128x128xbf16>
    %385 = vector.shape_cast %384 : vector<1x128x128xbf16> to vector<128x128xbf16>
    %cst_198 = arith.constant dense<0.000000e+00> : vector<1x128xf32>
    %386 = tpu.matmul %383, %385, %cst_198 {dimension_numbers = #tpu.dot_dimension_numbers<[1], [0], [0], [1], [0, 0, 1, 1], [], []>} : vector<1x128xbf16>, vector<128x128xbf16>, vector<1x128xf32> -> vector<1x128xf32>
    %387 = arith.addf %382, %386 : vector<1x128xf32>
    %388 = vector.extract_strided_slice %381 {offsets = [1, 0], sizes = [1, 128], strides = [1, 1]} : vector<2x128xbf16> to vector<1x128xbf16>
    %c2_199 = arith.constant 2 : index
    %c0_200 = arith.constant 0 : index
    %c0_201 = arith.constant 0 : index
    %389 = vector.load %arg12[%c2_199, %c0_200, %c0_201] : memref<4x128x128xbf16, #tpu.memory_space<vmem>>, vector<1x128x128xbf16>
    %390 = vector.shape_cast %389 : vector<1x128x128xbf16> to vector<128x128xbf16>
    %cst_202 = arith.constant dense<0.000000e+00> : vector<1x128xf32>
    %391 = tpu.matmul %388, %390, %cst_202 {dimension_numbers = #tpu.dot_dimension_numbers<[1], [0], [0], [1], [0, 0, 1, 1], [], []>} : vector<1x128xbf16>, vector<128x128xbf16>, vector<1x128xf32> -> vector<1x128xf32>
    %392 = arith.addf %387, %391 : vector<1x128xf32>
    %c0_203 = arith.constant 0 : index
    %c0_204 = arith.constant 0 : index
    %393 = vector.load %arg13[%c0_203, %c0_204] : memref<1x128xf32, #tpu.memory_space<vmem>>, vector<1x128xf32>
    %394 = arith.addf %392, %393 : vector<1x128xf32>
    %cst_205 = arith.constant 2.000000e-01 : f32
    %395 = vector.broadcast %cst_205 : f32 to vector<1x128xf32>
    %396 = arith.mulf %395, %394 : vector<1x128xf32>
    %397 = arith.maximumf %394, %396 : vector<1x128xf32>
    %398 = arith.truncf %397 : vector<1x128xf32> to vector<1x128xbf16>
    %c0_206 = arith.constant 0 : index
    %c0_207 = arith.constant 0 : index
    %399 = vector.load %arg14[%c0_206, %c0_207] : memref<128x64xbf16, #tpu.memory_space<vmem>>, vector<128x64xbf16>
    %cst_208 = arith.constant dense<0.000000e+00> : vector<1x64xf32>
    %400 = tpu.matmul %398, %399, %cst_208 {dimension_numbers = #tpu.dot_dimension_numbers<[1], [0], [0], [1], [0, 0, 1, 1], [], []>} : vector<1x128xbf16>, vector<128x64xbf16>, vector<1x64xf32> -> vector<1x64xf32>
    %c0_209 = arith.constant 0 : index
    %c0_210 = arith.constant 0 : index
    %401 = vector.load %arg15[%c0_209, %c0_210] : memref<1x64xf32, #tpu.memory_space<vmem>>, vector<1x64xf32>
    %402 = arith.addf %400, %401 : vector<1x64xf32>
    %cst_211 = arith.constant 2.000000e-01 : f32
    %403 = vector.broadcast %cst_211 : f32 to vector<1x64xf32>
    %404 = arith.mulf %403, %402 : vector<1x64xf32>
    %405 = arith.maximumf %402, %404 : vector<1x64xf32>
    %406 = arith.truncf %405 : vector<1x64xf32> to vector<1x64xbf16>
    %c0_212 = arith.constant 0 : index
    %c0_213 = arith.constant 0 : index
    %407 = vector.load %arg16[%c0_212, %c0_213] : memref<64x32xbf16, #tpu.memory_space<vmem>>, vector<64x32xbf16>
    %cst_214 = arith.constant dense<0.000000e+00> : vector<1x32xf32>
    %408 = tpu.matmul %406, %407, %cst_214 {dimension_numbers = #tpu.dot_dimension_numbers<[1], [0], [0], [1], [0, 0, 1, 1], [], []>} : vector<1x64xbf16>, vector<64x32xbf16>, vector<1x32xf32> -> vector<1x32xf32>
    %c0_215 = arith.constant 0 : index
    %c0_216 = arith.constant 0 : index
    %409 = vector.load %arg17[%c0_215, %c0_216] : memref<1x32xf32, #tpu.memory_space<vmem>>, vector<1x32xf32>
    %410 = arith.addf %408, %409 : vector<1x32xf32>
    %cst_217 = arith.constant 2.000000e-01 : f32
    %411 = vector.broadcast %cst_217 : f32 to vector<1x32xf32>
    %412 = arith.mulf %411, %410 : vector<1x32xf32>
    %413 = arith.maximumf %410, %412 : vector<1x32xf32>
    %c0_218 = arith.constant 0 : index
    %c0_219 = arith.constant 0 : index
    %c0_220 = arith.constant 0 : index
    %414 = vector.load %arg18[%c0_218, %c0_219, %c0_220] : memref<1x1x32xf32, #tpu.memory_space<vmem>>, vector<1x1x32xf32>
    %415 = vector.shape_cast %414 : vector<1x1x32xf32> to vector<1x32xf32>
    %416 = vector.shape_cast %413 : vector<1x32xf32> to vector<1x1x32xf32>
    tpu.vector_store %arg18[%c0_218, %c0_219, %c0_220], %416 {strides = array<i32>} : memref<1x1x32xf32, #tpu.memory_space<vmem>>, vector<1x1x32xf32>,
    return
  }
  func.func @transform_0(%arg0: i32) -> (i32, i32, i32) {
    %c0_i32 = arith.constant 0 : i32
    %c0_i32_0 = arith.constant 0 : i32
    %c0_i32_1 = arith.constant 0 : i32
    return %arg0, %c0_i32, %c0_i32_0 : i32, i32, i32
  }
  func.func @transform_1(%arg0: i32) -> (i32, i32, i32) {
    %c0_i32 = arith.constant 0 : i32
    %c0_i32_0 = arith.constant 0 : i32
    %c0_i32_1 = arith.constant 0 : i32
    %c0_i32_2 = arith.constant 0 : i32
    return %c0_i32, %c0_i32_0, %c0_i32_1 : i32, i32, i32
  }
  func.func @transform_2(%arg0: i32) -> (i32, i32) {
    %c0_i32 = arith.constant 0 : i32
    %c0_i32_0 = arith.constant 0 : i32
    %c0_i32_1 = arith.constant 0 : i32
    return %c0_i32, %c0_i32_0 : i32, i32
  }
  func.func @transform_3(%arg0: i32) -> (i32, i32, i32) {
    %c0_i32 = arith.constant 0 : i32
    %c0_i32_0 = arith.constant 0 : i32
    %c0_i32_1 = arith.constant 0 : i32
    %c0_i32_2 = arith.constant 0 : i32
    return %c0_i32, %c0_i32_0, %c0_i32_1 : i32, i32, i32
  }
  func.func @transform_4(%arg0: i32) -> (i32, i32) {
    %c0_i32 = arith.constant 0 : i32
    %c0_i32_0 = arith.constant 0 : i32
    %c0_i32_1 = arith.constant 0 : i32
    return %c0_i32, %c0_i32_0 : i32, i32
  }
  func.func @transform_5(%arg0: i32) -> (i32, i32, i32) {
    %c0_i32 = arith.constant 0 : i32
    %c0_i32_0 = arith.constant 0 : i32
    %c0_i32_1 = arith.constant 0 : i32
    %c0_i32_2 = arith.constant 0 : i32
    return %c0_i32, %c0_i32_0, %c0_i32_1 : i32, i32, i32
  }
  func.func @transform_6(%arg0: i32) -> (i32, i32) {
    %c0_i32 = arith.constant 0 : i32
    %c0_i32_0 = arith.constant 0 : i32
    %c0_i32_1 = arith.constant 0 : i32
    return %c0_i32, %c0_i32_0 : i32, i32
  }
  func.func @transform_7(%arg0: i32) -> (i32, i32, i32) {
    %c0_i32 = arith.constant 0 : i32
    %c0_i32_0 = arith.constant 0 : i32
    %c0_i32_1 = arith.constant 0 : i32
    %c0_i32_2 = arith.constant 0 : i32
    return %c0_i32, %c0_i32_0, %c0_i32_1 : i32, i32, i32
  }
  func.func @transform_8(%arg0: i32) -> (i32, i32) {
    %c0_i32 = arith.constant 0 : i32
    %c0_i32_0 = arith.constant 0 : i32
    %c0_i32_1 = arith.constant 0 : i32
    return %c0_i32, %c0_i32_0 : i32, i32
  }
  func.func @transform_9(%arg0: i32) -> (i32, i32, i32) {
    %c0_i32 = arith.constant 0 : i32
    %c0_i32_0 = arith.constant 0 : i32
    %c0_i32_1 = arith.constant 0 : i32
    %c0_i32_2 = arith.constant 0 : i32
    return %c0_i32, %c0_i32_0, %c0_i32_1 : i32, i32, i32
  }
  func.func @transform_10(%arg0: i32) -> (i32, i32) {
    %c0_i32 = arith.constant 0 : i32
    %c0_i32_0 = arith.constant 0 : i32
    %c0_i32_1 = arith.constant 0 : i32
    return %c0_i32, %c0_i32_0 : i32, i32
  }
  func.func @transform_11(%arg0: i32) -> (i32, i32, i32) {
    %c0_i32 = arith.constant 0 : i32
    %c0_i32_0 = arith.constant 0 : i32
    %c0_i32_1 = arith.constant 0 : i32
    %c0_i32_2 = arith.constant 0 : i32
    return %c0_i32, %c0_i32_0, %c0_i32_1 : i32, i32, i32
  }
  func.func @transform_12(%arg0: i32) -> (i32, i32) {
    %c0_i32 = arith.constant 0 : i32
    %c0_i32_0 = arith.constant 0 : i32
    %c0_i32_1 = arith.constant 0 : i32
    return %c0_i32, %c0_i32_0 : i32, i32
  }
  func.func @transform_13(%arg0: i32) -> (i32, i32) {
    %c0_i32 = arith.constant 0 : i32
    %c0_i32_0 = arith.constant 0 : i32
    %c0_i32_1 = arith.constant 0 : i32
    return %c0_i32, %c0_i32_0 : i32, i32
  }
  func.func @transform_14(%arg0: i32) -> (i32, i32) {
    %c0_i32 = arith.constant 0 : i32
    %c0_i32_0 = arith.constant 0 : i32
    %c0_i32_1 = arith.constant 0 : i32
    return %c0_i32, %c0_i32_0 : i32, i32
  }
  func.func @transform_15(%arg0: i32) -> (i32, i32) {
    %c0_i32 = arith.constant 0 : i32
    %c0_i32_0 = arith.constant 0 : i32
    %c0_i32_1 = arith.constant 0 : i32
    return %c0_i32, %c0_i32_0 : i32, i32
  }
  func.func @transform_16(%arg0: i32) -> (i32, i32) {
    %c0_i32 = arith.constant 0 : i32
    %c0_i32_0 = arith.constant 0 : i32
    %c0_i32_1 = arith.constant 0 : i32
    return %c0_i32, %c0_i32_0 : i32, i32
  }
  func.func @transform_17(%arg0: i32) -> (i32, i32, i32) {
    %c0_i32 = arith.constant 0 : i32
    %c0_i32_0 = arith.constant 0 : i32
    %c0_i32_1 = arith.constant 0 : i32
    return %arg0, %c0_i32, %c0_i32_0 : i32, i32, i32
  }
}

</mosaic_0001>

<llo_original>
// kernel: _lambda_.1
$region0: #{_lambda_.1}
  #allocation0 [shape = 'u32[]', space=smem, size = 0x4, offset = 0x4, fixed_abs, tag = 'smem constant byte address 0x4 - core index']
  #allocation1 [shape = 'u32[144,128]{1,0:T(1,128)}', space=vmem, size = 0x12000, scoped, tag = 'internal scratch']
  %s0 = inlined_call_operand.vmem [shape: bf16[2,64,192], index: 0, kind: input, shape index: {}]
  %s1 = inlined_call_operand.vmem [shape: bf16[4,192,128], index: 1, kind: input, shape index: {}]
  %s2 = inlined_call_operand.vmem [shape: f32[1,128], index: 2, kind: input, shape index: {}]
  %s3 = inlined_call_operand.vmem [shape: bf16[4,128,128], index: 3, kind: input, shape index: {}]
  %s4 = inlined_call_operand.vmem [shape: f32[1,128], index: 4, kind: input, shape index: {}]
  %s5 = inlined_call_operand.hbm [shape: bf16[4,128,128], index: 5, kind: input, shape index: {}]
  %s6 = inlined_call_operand.vmem [shape: f32[1,128], index: 6, kind: input, shape index: {}]
  %s7 = inlined_call_operand.hbm [shape: bf16[4,128,128], index: 7, kind: input, shape index: {}]
  %s8 = inlined_call_operand.vmem [shape: f32[1,128], index: 8, kind: input, shape index: {}]
  %s9 = inlined_call_operand.vmem [shape: bf16[4,128,128], index: 9, kind: input, shape index: {}]
  %s10 = inlined_call_operand.vmem [shape: f32[1,128], index: 10, kind: input, shape index: {}]
  %s11 = inlined_call_operand.vmem [shape: bf16[4,128,128], index: 11, kind: input, shape index: {}]
  %s12 = inlined_call_operand.vmem [shape: f32[1,128], index: 12, kind: input, shape index: {}]
  %s13 = inlined_call_operand.vmem [shape: bf16[128,64], index: 13, kind: input, shape index: {}]
  %s14 = inlined_call_operand.vmem [shape: f32[1,64], index: 14, kind: input, shape index: {}]
  %s15 = inlined_call_operand.vmem [shape: bf16[64,32], index: 15, kind: input, shape index: {}]
  %s16 = inlined_call_operand.vmem [shape: f32[1,32], index: 16, kind: input, shape index: {}]
  %s17 = inlined_call_operand.hbm [shape: f32[2,1,32], index: 17, kind: output, shape index: {}]
  %s18 = sld [smem:[#allocation0]]
  $region109: #{_lambda_.1} parent=0
    _
  %s20 = ssub.s32 1, %s18
  %s21 = scalar_select 0, %s20, %s18
  $region1: #{_lambda_.1} parent=0
    #allocation2 [shape = 'u8[131072]{0}', space=vmem, size = 0x20000, scoped, tag = 'input window, operand 5, single buffered']
    #allocation3 [shape = 's32[2]{0}', space=sflag, size = 0x8, scoped, tag = 'scoped memory for _lambda_.1']
    #allocation4 [shape = 's32[2]{0}', space=sflag, size = 0x8, scoped, tag = 'scoped memory for _lambda_.1']
    #allocation5 [shape = 'u8[131072]{0}', space=vmem, size = 0x20000, scoped, tag = 'input window, operand 7, single buffered']
    #allocation6 [shape = 's32[1]{0}', space=sflag, size = 0x4, scoped, tag = 'scoped memory for _lambda_.1']
    #allocation7 [shape = 'u8[1024]{0}', space=vmem, size = 0x400, scoped, tag = 'output window, operand 0']
    %22 = vsyncpa [#allocation3], 0
    %23 = vsyncpa [#allocation6], 0
    %24 = vsyncpa [#allocation4], 0
    %s25 = scalar_lea.sflag [#allocation4], 1
    %26 = vsyncpa %s25, 0
    loop: start=0, step=1, limit=4
    $region2: #{_lambda_.1} parent=1 // loop_pre_header
      _
    $region3: #{_lambda_.1} parent=1 // loop_header
      %s28 = sphi 0, %s32
      %p29 = scmp.ge.s32.totalorder %s28, 4
      %s38 = sphi 0, %s40
      %s41 = sphi 0, %s38
      %s42 = sphi 0, %s41
      %s58 = sphi 0, %s42
      %s62 = sphi 0, %s62
      %s64 = sphi 0, %s62
      %s65 = sphi 0, %s64
      %s79 = sphi 0, %s65
      %s83 = sphi 0, %s83
      %s85 = sphi 0, %s83
      %s86 = sphi 0, %s85
      %s100 = sphi 0, %s86
      %s104 = sphi 0, %s104
      %s106 = sphi 0, %s104
      %s107 = sphi 0, %s106
      %s121 = sphi 0, %s107
      %s125 = sphi 0, %s125
      %s127 = sphi 0, %s125
      %s128 = sphi 0, %s127
      %s142 = sphi 0, %s128
      %s146 = sphi 0, %s146
      %s148 = sphi 0, %s146
      %s149 = sphi 0, %s148
      %s163 = sphi 0, %s149
      %s167 = sphi 0, %s167
      %s169 = sphi 0, %s167
      %s170 = sphi 0, %s169
      %s184 = sphi 0, %s170
      %s188 = sphi 0, %s188
      %s190 = sphi 0, %s188
      %s191 = sphi 0, %s190
      %s205 = sphi 0, %s191
      %s209 = sphi 0, %s209
      %s211 = sphi 0, %s209
      %s212 = sphi 0, %s211
      %s226 = sphi 0, %s212
      %s230 = sphi 0, %s230
      %s232 = sphi 0, %s230
      %s233 = sphi 0, %s232
      %s247 = sphi 0, %s233
      %s251 = sphi 0, %s251
      %s253 = sphi 0, %s251
      %s254 = sphi 0, %s253
      %s268 = sphi 0, %s254
      %s272 = sphi 0, %s272
      %s274 = sphi 0, %s272
      %s275 = sphi 0, %s274
      %s289 = sphi 0, %s275
      %s293 = sphi 0, %s293
      %s295 = sphi 0, %s293
      %s296 = sphi 0, %s295
      %s310 = sphi 0, %s296
      %s314 = sphi 0, %s314
      %s316 = sphi 0, %s314
      %s317 = sphi 0, %s316
      %s331 = sphi 0, %s317
      %s335 = sphi 0, %s335
      %s337 = sphi 0, %s335
      %s338 = sphi 0, %s337
      %s352 = sphi 0, %s338
      %s356 = sphi 0, %s356
      %s358 = sphi 0, %s356
      %s359 = sphi 0, %s358
      %s373 = sphi 0, %s359
      %s377 = sphi 0, %s377
      %s379 = sphi 0, %s377
      %s380 = sphi 0, %s379
      %s394 = sphi 0, %s380
      %s400 = sphi 0, %s402
      %s403 = sphi 0, %s400
      %s404 = sphi 0, %s403
      %s420 = sphi 0, %s404
    $region4: #{_lambda_.1} parent=1 // loop_header_branch
      %31 = sbr.rel (%p29) target = $region8
    $region5: #{_lambda_.1} parent=1 // loop_body
      %s33 = ssub.s32 %s28, 1
      %s34 = ssub.s32 %s28, 2
      %s35 = sadd.s32 %s28, 1
      %s36 = ssub.s32 %s28, %s35
      %p37 = scmp.eq.s32.totalorder %s36, 0
      %s39 = sadd.s32 %s38, 1
      %s40 = scalar_select %p37, %s38, %s39
      %p43 = pneg %p37
      %p44 = scmp.eq.s32.totalorder %s28, 1
      %p45 = por %p43, %p44
      %p46 = scmp.ne.s32.totalorder %s38, %s41
      %p47 = scmp.eq.s32.totalorder %s28, 0
      %p48 = por %p46, %p47
      %p49 = scmp.ne.s32.totalorder %s38, %s41
      %p50 = scmp.eq.s32.totalorder %s33, 1
      %p51 = por %p49, %p50
      %p52 = scmp.ne.s32.totalorder %s41, %s42
      %p53 = scmp.eq.s32.totalorder %s33, 0
      %p54 = por %p52, %p53
      %p55 = scmp.ne.s32.totalorder %s41, %s42
      %p56 = scmp.eq.s32.totalorder %s34, 1
      %p57 = por %p55, %p56
      %p59 = scmp.ne.s32.totalorder %s42, %s58
      %p60 = scmp.eq.s32.totalorder %s34, 0
      %p61 = por %p59, %p60
      %s63 = sadd.s32 %s62, 1
      %p66 = scmp.eq.s32.totalorder %s28, 1
      %p67 = scmp.ne.s32.totalorder %s62, %s64
      %p68 = scmp.eq.s32.totalorder %s28, 0
      %p69 = por %p67, %p68
      %p70 = scmp.ne.s32.totalorder %s62, %s64
      %p71 = scmp.eq.s32.totalorder %s33, 1
      %p72 = por %p70, %p71
      %p73 = scmp.ne.s32.totalorder %s64, %s65
      %p74 = scmp.eq.s32.totalorder %s33, 0
      %p75 = por %p73, %p74
      %p76 = scmp.ne.s32.totalorder %s64, %s65
      %p77 = scmp.eq.s32.totalorder %s34, 1
      %p78 = por %p76, %p77
      %p80 = scmp.ne.s32.totalorder %s65, %s79
      %p81 = scmp.eq.s32.totalorder %s34, 0
      %p82 = por %p80, %p81
      %s84 = sadd.s32 %s83, 1
      %p87 = scmp.eq.s32.totalorder %s28, 1
      %p88 = scmp.ne.s32.totalorder %s83, %s85
      %p89 = scmp.eq.s32.totalorder %s28, 0
      %p90 = por %p88, %p89
      %p91 = scmp.ne.s32.totalorder %s83, %s85
      %p92 = scmp.eq.s32.totalorder %s33, 1
      %p93 = por %p91, %p92
      %p94 = scmp.ne.s32.totalorder %s85, %s86
      %p95 = scmp.eq.s32.totalorder %s33, 0
      %p96 = por %p94, %p95
      %p97 = scmp.ne.s32.totalorder %s85, %s86
      %p98 = scmp.eq.s32.totalorder %s34, 1
      %p99 = por %p97, %p98
      %p101 = scmp.ne.s32.totalorder %s86, %s100
      %p102 = scmp.eq.s32.totalorder %s34, 0
      %p103 = por %p101, %p102
      %s105 = sadd.s32 %s104, 1
      %p108 = scmp.eq.s32.totalorder %s28, 1
      %p109 = scmp.ne.s32.totalorder %s104, %s106
      %p110 = scmp.eq.s32.totalorder %s28, 0
      %p111 = por %p109, %p110
      %p112 = scmp.ne.s32.totalorder %s104, %s106
      %p113 = scmp.eq.s32.totalorder %s33, 1
      %p114 = por %p112, %p113
      %p115 = scmp.ne.s32.totalorder %s106, %s107
      %p116 = scmp.eq.s32.totalorder %s33, 0
      %p117 = por %p115, %p116
      %p118 = scmp.ne.s32.totalorder %s106, %s107
      %p119 = scmp.eq.s32.totalorder %s34, 1
      %p120 = por %p118, %p119
      %p122 = scmp.ne.s32.totalorder %s107, %s121
      %p123 = scmp.eq.s32.totalorder %s34, 0
      %p124 = por %p122, %p123
      %s126 = sadd.s32 %s125, 1
      %p129 = scmp.eq.s32.totalorder %s28, 1
      %p130 = scmp.ne.s32.totalorder %s125, %s127
      %p131 = scmp.eq.s32.totalorder %s28, 0
      %p132 = por %p130, %p131
      %p133 = scmp.ne.s32.totalorder %s125, %s127
      %p134 = scmp.eq.s32.totalorder %s33, 1
      %p135 = por %p133, %p134
      %p136 = scmp.ne.s32.totalorder %s127, %s128
      %p137 = scmp.eq.s32.totalorder %s33, 0
      %p138 = por %p136, %p137
      %p139 = scmp.ne.s32.totalorder %s127, %s128
      %p140 = scmp.eq.s32.totalorder %s34, 1
      %p141 = por %p139, %p140
      %p143 = scmp.ne.s32.totalorder %s128, %s142
      %p144 = scmp.eq.s32.totalorder %s34, 0
      %p145 = por %p143, %p144
      %s147 = sadd.s32 %s146, 1
      %p150 = scmp.eq.s32.totalorder %s28, 1
      %p151 = scmp.ne.s32.totalorder %s146, %s148
      %p152 = scmp.eq.s32.totalorder %s28, 0
      %p153 = por %p151, %p152
      %p154 = scmp.ne.s32.totalorder %s146, %s148
      %p155 = scmp.eq.s32.totalorder %s33, 1
      %p156 = por %p154, %p155
      %p157 = scmp.ne.s32.totalorder %s148, %s149
      %p158 = scmp.eq.s32.totalorder %s33, 0
      %p159 = por %p157, %p158
      %p160 = scmp.ne.s32.totalorder %s148, %s149
      %p161 = scmp.eq.s32.totalorder %s34, 1
      %p162 = por %p160, %p161
      %p164 = scmp.ne.s32.totalorder %s149, %s163
      %p165 = scmp.eq.s32.totalorder %s34, 0
      %p166 = por %p164, %p165
      %s168 = sadd.s32 %s167, 1
      %p171 = scmp.eq.s32.totalorder %s28, 1
      %p172 = scmp.ne.s32.totalorder %s167, %s169
      %p173 = scmp.eq.s32.totalorder %s28, 0
      %p174 = por %p172, %p173
      %p175 = scmp.ne.s32.totalorder %s167, %s169
      %p176 = scmp.eq.s32.totalorder %s33, 1
      %p177 = por %p175, %p176
      %p178 = scmp.ne.s32.totalorder %s169, %s170
      %p179 = scmp.eq.s32.totalorder %s33, 0
      %p180 = por %p178, %p179
      %p181 = scmp.ne.s32.totalorder %s169, %s170
      %p182 = scmp.eq.s32.totalorder %s34, 1
      %p183 = por %p181, %p182
      %p185 = scmp.ne.s32.totalorder %s170, %s184
      %p186 = scmp.eq.s32.totalorder %s34, 0
      %p187 = por %p185, %p186
      %s189 = sadd.s32 %s188, 1
      %p192 = scmp.eq.s32.totalorder %s28, 1
      %p193 = scmp.ne.s32.totalorder %s188, %s190
      %p194 = scmp.eq.s32.totalorder %s28, 0
      %p195 = por %p193, %p194
      %p196 = scmp.ne.s32.totalorder %s188, %s190
      %p197 = scmp.eq.s32.totalorder %s33, 1
      %p198 = por %p196, %p197
      %p199 = scmp.ne.s32.totalorder %s190, %s191
      %p200 = scmp.eq.s32.totalorder %s33, 0
      %p201 = por %p199, %p200
      %p202 = scmp.ne.s32.totalorder %s190, %s191
      %p203 = scmp.eq.s32.totalorder %s34, 1
      %p204 = por %p202, %p203
      %p206 = scmp.ne.s32.totalorder %s191, %s205
      %p207 = scmp.eq.s32.totalorder %s34, 0
      %p208 = por %p206, %p207
      %s210 = sadd.s32 %s209, 1
      %p213 = scmp.eq.s32.totalorder %s28, 1
      %p214 = scmp.ne.s32.totalorder %s209, %s211
      %p215 = scmp.eq.s32.totalorder %s28, 0
      %p216 = por %p214, %p215
      %p217 = scmp.ne.s32.totalorder %s209, %s211
      %p218 = scmp.eq.s32.totalorder %s33, 1
      %p219 = por %p217, %p218
      %p220 = scmp.ne.s32.totalorder %s211, %s212
      %p221 = scmp.eq.s32.totalorder %s33, 0
      %p222 = por %p220, %p221
      %p223 = scmp.ne.s32.totalorder %s211, %s212
      %p224 = scmp.eq.s32.totalorder %s34, 1
      %p225 = por %p223, %p224
      %p227 = scmp.ne.s32.totalorder %s212, %s226
      %p228 = scmp.eq.s32.totalorder %s34, 0
      %p229 = por %p227, %p228
      %s231 = sadd.s32 %s230, 1
      %p234 = scmp.eq.s32.totalorder %s28, 1
      %p235 = scmp.ne.s32.totalorder %s230, %s232
      %p236 = scmp.eq.s32.totalorder %s28, 0
      %p237 = por %p235, %p236
      %p238 = scmp.ne.s32.totalorder %s230, %s232
      %p239 = scmp.eq.s32.totalorder %s33, 1
      %p240 = por %p238, %p239
      %p241 = scmp.ne.s32.totalorder %s232, %s233
      %p242 = scmp.eq.s32.totalorder %s33, 0
      %p243 = por %p241, %p242
      %p244 = scmp.ne.s32.totalorder %s232, %s233
      %p245 = scmp.eq.s32.totalorder %s34, 1
      %p246 = por %p244, %p245
      %p248 = scmp.ne.s32.totalorder %s233, %s247
      %p249 = scmp.eq.s32.totalorder %s34, 0
      %p250 = por %p248, %p249
      %s252 = sadd.s32 %s251, 1
      %p255 = scmp.eq.s32.totalorder %s28, 1
      %p256 = scmp.ne.s32.totalorder %s251, %s253
      %p257 = scmp.eq.s32.totalorder %s28, 0
      %p258 = por %p256, %p257
      %p259 = scmp.ne.s32.totalorder %s251, %s253
      %p260 = scmp.eq.s32.totalorder %s33, 1
      %p261 = por %p259, %p260
      %p262 = scmp.ne.s32.totalorder %s253, %s254
      %p263 = scmp.eq.s32.totalorder %s33, 0
      %p264 = por %p262, %p263
      %p265 = scmp.ne.s32.totalorder %s253, %s254
      %p266 = scmp.eq.s32.totalorder %s34, 1
      %p267 = por %p265, %p266
      %p269 = scmp.ne.s32.totalorder %s254, %s268
      %p270 = scmp.eq.s32.totalorder %s34, 0
      %p271 = por %p269, %p270
      %s273 = sadd.s32 %s272, 1
      %p276 = scmp.eq.s32.totalorder %s28, 1
      %p277 = scmp.ne.s32.totalorder %s272, %s274
      %p278 = scmp.eq.s32.totalorder %s28, 0
      %p279 = por %p277, %p278
      %p280 = scmp.ne.s32.totalorder %s272, %s274
      %p281 = scmp.eq.s32.totalorder %s33, 1
      %p282 = por %p280, %p281
      %p283 = scmp.ne.s32.totalorder %s274, %s275
      %p284 = scmp.eq.s32.totalorder %s33, 0
      %p285 = por %p283, %p284
      %p286 = scmp.ne.s32.totalorder %s274, %s275
      %p287 = scmp.eq.s32.totalorder %s34, 1
      %p288 = por %p286, %p287
      %p290 = scmp.ne.s32.totalorder %s275, %s289
      %p291 = scmp.eq.s32.totalorder %s34, 0
      %p292 = por %p290, %p291
      %s294 = sadd.s32 %s293, 1
      %p297 = scmp.eq.s32.totalorder %s28, 1
      %p298 = scmp.ne.s32.totalorder %s293, %s295
      %p299 = scmp.eq.s32.totalorder %s28, 0
      %p300 = por %p298, %p299
      %p301 = scmp.ne.s32.totalorder %s293, %s295
      %p302 = scmp.eq.s32.totalorder %s33, 1
      %p303 = por %p301, %p302
      %p304 = scmp.ne.s32.totalorder %s295, %s296
      %p305 = scmp.eq.s32.totalorder %s33, 0
      %p306 = por %p304, %p305
      %p307 = scmp.ne.s32.totalorder %s295, %s296
      %p308 = scmp.eq.s32.totalorder %s34, 1
      %p309 = por %p307, %p308
      %p311 = scmp.ne.s32.totalorder %s296, %s310
      %p312 = scmp.eq.s32.totalorder %s34, 0
      %p313 = por %p311, %p312
      %s315 = sadd.s32 %s314, 1
      %p318 = scmp.eq.s32.totalorder %s28, 1
      %p319 = scmp.ne.s32.totalorder %s314, %s316
      %p320 = scmp.eq.s32.totalorder %s28, 0
      %p321 = por %p319, %p320
      %p322 = scmp.ne.s32.totalorder %s314, %s316
      %p323 = scmp.eq.s32.totalorder %s33, 1
      %p324 = por %p322, %p323
      %p325 = scmp.ne.s32.totalorder %s316, %s317
      %p326 = scmp.eq.s32.totalorder %s33, 0
      %p327 = por %p325, %p326
      %p328 = scmp.ne.s32.totalorder %s316, %s317
      %p329 = scmp.eq.s32.totalorder %s34, 1
      %p330 = por %p328, %p329
      %p332 = scmp.ne.s32.totalorder %s317, %s331
      %p333 = scmp.eq.s32.totalorder %s34, 0
      %p334 = por %p332, %p333
      %s336 = sadd.s32 %s335, 1
      %p339 = scmp.eq.s32.totalorder %s28, 1
      %p340 = scmp.ne.s32.totalorder %s335, %s337
      %p341 = scmp.eq.s32.totalorder %s28, 0
      %p342 = por %p340, %p341
      %p343 = scmp.ne.s32.totalorder %s335, %s337
      %p344 = scmp.eq.s32.totalorder %s33, 1
      %p345 = por %p343, %p344
      %p346 = scmp.ne.s32.totalorder %s337, %s338
      %p347 = scmp.eq.s32.totalorder %s33, 0
      %p348 = por %p346, %p347
      %p349 = scmp.ne.s32.totalorder %s337, %s338
      %p350 = scmp.eq.s32.totalorder %s34, 1
      %p351 = por %p349, %p350
      %p353 = scmp.ne.s32.totalorder %s338, %s352
      %p354 = scmp.eq.s32.totalorder %s34, 0
      %p355 = por %p353, %p354
      %s357 = sadd.s32 %s356, 1
      %p360 = scmp.eq.s32.totalorder %s28, 1
      %p361 = scmp.ne.s32.totalorder %s356, %s358
      %p362 = scmp.eq.s32.totalorder %s28, 0
      %p363 = por %p361, %p362
      %p364 = scmp.ne.s32.totalorder %s356, %s358
      %p365 = scmp.eq.s32.totalorder %s33, 1
      %p366 = por %p364, %p365
      %p367 = scmp.ne.s32.totalorder %s358, %s359
      %p368 = scmp.eq.s32.totalorder %s33, 0
      %p369 = por %p367, %p368
      %p370 = scmp.ne.s32.totalorder %s358, %s359
      %p371 = scmp.eq.s32.totalorder %s34, 1
      %p372 = por %p370, %p371
      %p374 = scmp.ne.s32.totalorder %s359, %s373
      %p375 = scmp.eq.s32.totalorder %s34, 0
      %p376 = por %p374, %p375
      %s378 = sadd.s32 %s377, 1
      %p381 = scmp.eq.s32.totalorder %s28, 1
      %p382 = scmp.ne.s32.totalorder %s377, %s379
      %p383 = scmp.eq.s32.totalorder %s28, 0
      %p384 = por %p382, %p383
      %p385 = scmp.ne.s32.totalorder %s377, %s379
      %p386 = scmp.eq.s32.totalorder %s33, 1
      %p387 = por %p385, %p386
      %p388 = scmp.ne.s32.totalorder %s379, %s380
      %p389 = scmp.eq.s32.totalorder %s33, 0
      %p390 = por %p388, %p389
      %p391 = scmp.ne.s32.totalorder %s379, %s380
      %p392 = scmp.eq.s32.totalorder %s34, 1
      %p393 = por %p391, %p392
      %p395 = scmp.ne.s32.totalorder %s380, %s394
      %p396 = scmp.eq.s32.totalorder %s34, 0
      %p397 = por %p395, %p396
      %s398 = ssub.s32 %s28, %s35
      %p399 = scmp.eq.s32.totalorder %s398, 0
      %s401 = sadd.s32 %s400, 1
      %s402 = scalar_select %p399, %s400, %s401
      %p405 = pneg %p399
      %p406 = scmp.eq.s32.totalorder %s28, 1
      %p407 = por %p405, %p406
      %p408 = scmp.ne.s32.totalorder %s400, %s403
      %p409 = scmp.eq.s32.totalorder %s28, 0
      %p410 = por %p408, %p409
      %p411 = scmp.ne.s32.totalorder %s400, %s403
      %p412 = scmp.eq.s32.totalorder %s33, 1
      %p413 = por %p411, %p412
      %p414 = scmp.ne.s32.totalorder %s403, %s404
      %p415 = scmp.eq.s32.totalorder %s33, 0
      %p416 = por %p414, %p415
      %p417 = scmp.ne.s32.totalorder %s403, %s404
      %p418 = scmp.eq.s32.totalorder %s34, 1
      %p419 = por %p417, %p418
      %p421 = scmp.ne.s32.totalorder %s404, %s420
      %p422 = scmp.eq.s32.totalorder %s34, 0
      %p423 = por %p421, %p422
      %p424 = scmp.le.s32.totalorder 1, %s28
      %p425 = scmp.lt.s32.totalorder %s28, 3
      %p426 = pnand %p424, %p425
      %p427 = pneg %p426
      // Predicated region
      $region9: #{_lambda_.1} parent=5 // pred_check
        _
      $region10: #{_lambda_.1} parent=5 // pred_check_branch
        %429 = sbr.rel (%p426) target = $region12
      $region11: #{_lambda_.1} parent=5 // pred_region
        %s430 = ssub.s32 %s28, 1
        // Predicated region
        $region13: #{_lambda_.1} parent=11 // pred_check
          %p431 = pneg %p75
        $region14: #{_lambda_.1} parent=11 // pred_check_branch
          %433 = sbr.rel (%p431) target = $region16
        $region15: #{_lambda_.1} parent=11 // pred_region
          _
        $region16: #{_lambda_.1} parent=11 // pred_fallthru
          _
        // Predicated region
        $region17: #{_lambda_.1} parent=11 // pred_check
          %p434 = pneg %p96
        $region18: #{_lambda_.1} parent=11 // pred_check_branch
          %436 = sbr.rel (%p434) target = $region20
        $region19: #{_lambda_.1} parent=11 // pred_region
          _
        $region20: #{_lambda_.1} parent=11 // pred_fallthru
          _
        // Predicated region
        $region21: #{_lambda_.1} parent=11 // pred_check
          %p437 = pneg %p117
        $region22: #{_lambda_.1} parent=11 // pred_check_branch
          %439 = sbr.rel (%p437) target = $region24
        $region23: #{_lambda_.1} parent=11 // pred_region
          _
        $region24: #{_lambda_.1} parent=11 // pred_fallthru
          _
        // Predicated region
        $region25: #{_lambda_.1} parent=11 // pred_check
          %p440 = pneg %p138
        $region26: #{_lambda_.1} parent=11 // pred_check_branch
          %442 = sbr.rel (%p440) target = $region28
        $region27: #{_lambda_.1} parent=11 // pred_region
          _
        $region28: #{_lambda_.1} parent=11 // pred_fallthru
          _
        // Predicated region
        $region29: #{_lambda_.1} parent=11 // pred_check
          %p443 = pneg %p159
        $region30: #{_lambda_.1} parent=11 // pred_check_branch
          %445 = sbr.rel (%p443) target = $region32
        $region31: #{_lambda_.1} parent=11 // pred_region
          %s447 = ssub.s32 4096, 4096
          %448 = vsyncadd [#allocation3], %s447
          %s449 = sshll.u32 [#allocation2], 4
          %s450 = int_to_ptr.vmem [resolvable:$true] %s449
          %455 = dma.hbm_to_vmem [thread:$0]  %s5, 4096, %s450, [#allocation3], 64, 64, 4
        $region32: #{_lambda_.1} parent=11 // pred_fallthru
          _
        // Predicated region
        $region33: #{_lambda_.1} parent=11 // pred_check
          %p456 = pneg %p180
        $region34: #{_lambda_.1} parent=11 // pred_check_branch
          %458 = sbr.rel (%p456) target = $region36
        $region35: #{_lambda_.1} parent=11 // pred_region
          _
        $region36: #{_lambda_.1} parent=11 // pred_fallthru
          _
        // Predicated region
        $region37: #{_lambda_.1} parent=11 // pred_check
          %p459 = pneg %p201
        $region38: #{_lambda_.1} parent=11 // pred_check_branch
          %461 = sbr.rel (%p459) target = $region40
        $region39: #{_lambda_.1} parent=11 // pred_region
          %s463 = ssub.s32 4096, 4096
          %464 = vsyncadd [#allocation6], %s463
          %s465 = sshll.u32 [#allocation5], 4
          %s466 = int_to_ptr.vmem [resolvable:$true] %s465
          %471 = dma.hbm_to_vmem [thread:$0]  %s7, 4096, %s466, [#allocation6], 64, 64, 4
        $region40: #{_lambda_.1} parent=11 // pred_fallthru
          _
        // Predicated region
        $region41: #{_lambda_.1} parent=11 // pred_check
          %p472 = pneg %p222
        $region42: #{_lambda_.1} parent=11 // pred_check_branch
          %474 = sbr.rel (%p472) target = $region44
        $region43: #{_lambda_.1} parent=11 // pred_region
          _
        $region44: #{_lambda_.1} parent=11 // pred_fallthru
          _
        // Predicated region
        $region45: #{_lambda_.1} parent=11 // pred_check
          %p475 = pneg %p243
        $region46: #{_lambda_.1} parent=11 // pred_check_branch
          %477 = sbr.rel (%p475) target = $region48
        $region47: #{_lambda_.1} parent=11 // pred_region
          _
        $region48: #{_lambda_.1} parent=11 // pred_fallthru
          _
        // Predicated region
        $region49: #{_lambda_.1} parent=11 // pred_check
          %p478 = pneg %p264
        $region50: #{_lambda_.1} parent=11 // pred_check_branch
          %480 = sbr.rel (%p478) target = $region52
        $region51: #{_lambda_.1} parent=11 // pred_region
          _
        $region52: #{_lambda_.1} parent=11 // pred_fallthru
          _
        // Predicated region
        $region53: #{_lambda_.1} parent=11 // pred_check
          %p481 = pneg %p285
        $region54: #{_lambda_.1} parent=11 // pred_check_branch
          %483 = sbr.rel (%p481) target = $region56
        $region55: #{_lambda_.1} parent=11 // pred_region
          _
        $region56: #{_lambda_.1} parent=11 // pred_fallthru
          _
        // Predicated region
        $region57: #{_lambda_.1} parent=11 // pred_check
          %p484 = pneg %p306
        $region58: #{_lambda_.1} parent=11 // pred_check_branch
          %486 = sbr.rel (%p484) target = $region60
        $region59: #{_lambda_.1} parent=11 // pred_region
          _
        $region60: #{_lambda_.1} parent=11 // pred_fallthru
          _
        // Predicated region
        $region61: #{_lambda_.1} parent=11 // pred_check
          %p487 = pneg %p327
        $region62: #{_lambda_.1} parent=11 // pred_check_branch
          %489 = sbr.rel (%p487) target = $region64
        $region63: #{_lambda_.1} parent=11 // pred_region
          _
        $region64: #{_lambda_.1} parent=11 // pred_fallthru
          _
        // Predicated region
        $region65: #{_lambda_.1} parent=11 // pred_check
          %p490 = pneg %p348
        $region66: #{_lambda_.1} parent=11 // pred_check_branch
          %492 = sbr.rel (%p490) target = $region68
        $region67: #{_lambda_.1} parent=11 // pred_region
          _
        $region68: #{_lambda_.1} parent=11 // pred_fallthru
          _
        // Predicated region
        $region69: #{_lambda_.1} parent=11 // pred_check
          %p493 = pneg %p369
        $region70: #{_lambda_.1} parent=11 // pred_check_branch
          %495 = sbr.rel (%p493) target = $region72
        $region71: #{_lambda_.1} parent=11 // pred_region
          _
        $region72: #{_lambda_.1} parent=11 // pred_fallthru
          _
        // Predicated region
        $region73: #{_lambda_.1} parent=11 // pred_check
          %p496 = pneg %p390
        $region74: #{_lambda_.1} parent=11 // pred_check_branch
          %498 = sbr.rel (%p496) target = $region76
        $region75: #{_lambda_.1} parent=11 // pred_region
          _
        $region76: #{_lambda_.1} parent=11 // pred_fallthru
          _
      $region12: #{_lambda_.1} parent=5 // pred_fallthru
        _
      %p499 = scmp.lt.s32.totalorder %s28, 2
      // Predicated region
      $region77: #{_lambda_.1} parent=5 // pred_check
        %p500 = pneg %p499
      $region78: #{_lambda_.1} parent=5 // pred_check_branch
        %502 = sbr.rel (%p500) target = $region80
      $region79: #{_lambda_.1} parent=5 // pred_region
        // Predicated region
        $region81: #{_lambda_.1} parent=79 // pred_check
          %p503 = pneg %p48
        $region82: #{_lambda_.1} parent=79 // pred_check_branch
          %505 = sbr.rel (%p503) target = $region84
        $region83: #{_lambda_.1} parent=79 // pred_region
          %p506 = scmp.lt.s32.totalorder %s28, 1
          %s507 = scalar_select %p506, %s28, 1
          %s508 = smul.addr %s507, 16
          %s509 = smul.addr %s508, 4
          %s510 = scalar_lea.vmem %s0, %s509
        $region84: #{_lambda_.1} parent=79 // pred_fallthru
          _
      $region80: #{_lambda_.1} parent=5 // pred_fallthru
        _
      %p511 = scmp.le.s32.totalorder 1, %s28
      %p512 = scmp.lt.s32.totalorder %s28, 3
      %p513 = pnand %p511, %p512
      %p514 = pneg %p513
      // Predicated region
      $region85: #{_lambda_.1} parent=5 // pred_check
        _
      $region86: #{_lambda_.1} parent=5 // pred_check_branch
        %516 = sbr.rel (%p513) target = $region88
      $region87: #{_lambda_.1} parent=5 // pred_region
        %s517 = ssub.s32 %s28, 1
        // Predicated region
        $region89: #{_lambda_.1} parent=87 // pred_check
          %p518 = pneg %p159
        $region90: #{_lambda_.1} parent=87 // pred_check_branch
          %520 = sbr.rel (%p518) target = $region92
        $region91: #{_lambda_.1} parent=87 // pred_region
          %521 = dma.done [#allocation3], 4096
        $region92: #{_lambda_.1} parent=87 // pred_fallthru
          _
        // Predicated region
        $region93: #{_lambda_.1} parent=87 // pred_check
          %p522 = pneg %p201
        $region94: #{_lambda_.1} parent=87 // pred_check_branch
          %524 = sbr.rel (%p522) target = $region96
        $region95: #{_lambda_.1} parent=87 // pred_region
          %525 = dma.done [#allocation6], 4096
        $region96: #{_lambda_.1} parent=87 // pred_fallthru
          _
        %p526 = scmp.lt.s32.totalorder %s33, 1
        %s527 = scalar_select %p526, %s33, 1
        %s528 = smul.addr %s527, 16
        %s529 = smul.addr %s528, 4
        %s530 = scalar_lea.vmem %s0, %s529
        %p531 = pneg %p54
        %p532 = pneg %p51
        %p533 = pneg %p75
        %p534 = pneg %p72
        %p535 = pneg %p96
        %p536 = pneg %p93
        %p537 = pneg %p117
        %p538 = pneg %p114
        %p539 = pneg %p138
        %p540 = pneg %p135
        %p541 = pneg %p159
        %p542 = pneg %p156
        %p543 = pneg %p180
        %p544 = pneg %p177
        %p545 = pneg %p201
        %p546 = pneg %p198
        %p547 = pneg %p222
        %p548 = pneg %p219
        %p549 = pneg %p243
        %p550 = pneg %p240
        %p551 = pneg %p264
        %p552 = pneg %p261
        %p553 = pneg %p285
        %p554 = pneg %p282
        %p555 = pneg %p306
        %p556 = pneg %p303
        %p557 = pneg %p327
        %p558 = pneg %p324
        %p559 = pneg %p348
        %p560 = pneg %p345
        %p561 = pneg %p369
        %p562 = pneg %p366
        %p563 = pneg %p390
        %p564 = pneg %p387
        %p565 = pneg %p416
        %p566 = pneg %p413
        %s567 = sand.u32 %s403, 1
        %s568 = scalar_lea.sflag [#allocation4], %s567
        %s569 = sand.u32 %s403, 1
        %s570 = scalar_lea.vmem [#allocation7], %s569
        %p571 = scmp.lt.s32.totalorder %s33, 1
        %s572 = scalar_select %p571, %s33, 1
        %s573 = smul.addr %s572, 16
        %s574 = smul.addr %s573, 4
        %s575 = scalar_lea.vmem %s0, %s574
        %v577 = vld [vmem:[%s575] sm:$0xff]
        %v578 = vld [vmem:[%s575 + $0x8] sm:$0xff]
        %v579 = vld [vmem:[%s575 + $0x10] sm:$0xff]
        %v580 = vld [vmem:[%s575 + $0x18] sm:$0xff]
        %v581 = vld [vmem:[%s575 + $0x20] sm:$0xff]
        %v582 = vld [vmem:[%s575 + $0x28] sm:$0xff]
        %v583 = vld [vmem:[%s575 + $0x30] sm:$0xff]
        %v584 = vld [vmem:[%s575 + $0x38] sm:$0xff]
        %v585 = vlaneseq
        %v586 = vshrl.u32 %v585, 7
        %v587 = vadd.s32 %v586, 8
        %v588 = vadd.s32 %v586, 16
        %v589 = vadd.s32 %v586, 24
        %v590 = vlaneseq
        %v591 = vand.u32 %v590, 127
        %v592 = vmul.u32 %v586, 2
        %v593 = vmul.u32 %v587, 2
        %v594 = vmul.u32 %v588, 2
        %v595 = vmul.u32 %v589, 2
        %v596 = vadd.s32 %v592, 4294967295
        %v597 = vadd.s32 %v593, 4294967295
        %v598 = vadd.s32 %v594, 4294967295
        %v599 = vadd.s32 %v595, 4294967295
        %vm600 = vcmp.eq.s32.totalorder %v591, %v596
        %vm601 = vcmp.eq.s32.totalorder %v591, %v597
        %vm602 = vcmp.eq.s32.totalorder %v591, %v598
        %vm603 = vcmp.eq.s32.totalorder %v591, %v599
        %v604 = vsel %vm600, 1.0, 0.0
        %v605 = vsel %vm601, 1.0, 0.0
        %v606 = vsel %vm602, 1.0, 0.0
        %v607 = vsel %vm603, 1.0, 0.0
        %v608 = vpack.c.bf16 %v605, %v604
        %v609 = vpack.c.bf16 %v607, %v606
        %v618 = vunpack.c.l.b16 %v577
        %v619 = vunpack.c.h.b16 %v577
        %v620 = vunpack.c.l.b16 %v578
        %v621 = vunpack.c.h.b16 %v578
        %v622 = vunpack.c.l.b16 %v579
        %v623 = vunpack.c.h.b16 %v579
        %v624 = vunpack.c.l.b16 %v580
        %v625 = vunpack.c.h.b16 %v580
        %v626 = vunpack.c.l.b16 %v581
        %v627 = vunpack.c.h.b16 %v581
        %v628 = vunpack.c.l.b16 %v582
        %v629 = vunpack.c.h.b16 %v582
        %v630 = vunpack.c.l.b16 %v583
        %v631 = vunpack.c.h.b16 %v583
        %v632 = vunpack.c.l.b16 %v584
        %v633 = vunpack.c.h.b16 %v584
        %v634 = vpack.c.b16 %v620, %v618
        %v635 = vpack.c.b16 %v621, %v619
        %v636 = vpack.c.b16 %v624, %v622
        %v637 = vpack.c.b16 %v625, %v623
        %v638 = vpack.c.b16 %v628, %v626
        %v639 = vpack.c.b16 %v629, %v627
        %v640 = vpack.c.b16 %v632, %v630
        %v641 = vpack.c.b16 %v633, %v631
        %vm650 = vcmask 523264
        %v652 = vsel %vm650, %v608, 0
        %v655 = vsel %vm650, %v609, 0
        %657 = vmatprep.subr.bf16.mxu0 %v635
        %658 = vmatpush1.bf16.msra.mxu0 %v634
        %659 = vmatprep.subr.bf16.mxu0 %v637
        %660 = vmatpush1.bf16.msra.mxu0 %v636
        %661 = vmatprep.subr.bf16.mxu0 %v639
        %662 = vmatpush1.bf16.msra.mxu0 %v638
        %663 = vmatprep.subr.bf16.mxu0 %v641
        %664 = vmatpush1.bf16.msra.mxu0 %v640
        %665 = vmatprep.subr.bf16.mxu0 0
        %666 = vmatpush1.bf16.msra.mxu0 0
        %667 = vmatprep.subr.bf16.mxu0 0
        %668 = vmatpush1.bf16.msra.mxu0 0
        %669 = vmatprep.subr.bf16.mxu0 0
        %670 = vmatpush1.bf16.msra.mxu0 0
        %671 = vmatprep.subr.bf16.mxu0 0
        %672 = vmatpush1.bf16.msra.mxu0 0
        %673 = vmatprep.subr.bf16.mxu0 0
        %674 = vmatpush1.bf16.msra.mxu0 0
        %675 = vmatprep.subr.bf16.mxu0 0
        %676 = vmatpush1.bf16.msra.mxu0 0
        %677 = vmatprep.subr.bf16.mxu0 0
        %678 = vmatpush1.bf16.msra.mxu0 0
        %679 = vmatprep.subr.bf16.mxu0 0
        %680 = vmatpush1.bf16.msra.mxu0 0
        %681 = vmatprep.subr.bf16.mxu0 0
        %682 = vmatpush1.bf16.msra.mxu0 0
        %683 = vmatprep.subr.bf16.mxu0 0
        %684 = vmatpush1.bf16.msra.mxu0 0
        %685 = vmatprep.subr.bf16.mxu0 0
        %686 = vmatpush1.bf16.msra.mxu0 0
        %687 = vmatprep.subr.bf16.mxu0 0
        %688 = vmatpush1.bf16.msra.mxu0 0
        %689 = vmatprep.mubr.bf16.mxu0 0
        %690 = vmatmul.mubr.bf16.gmra.mrb[0].mxu0 %v652
        %v691 = vpop.f32.mrb[0].mxu0
        %v692 = vadd.f32 0.0, %v691
        %v693 = vpop.f32.mrb[0].mxu0
        %v694 = vadd.f32 0.0, %v693
        %v695 = vpop.f32.mrb[0].mxu0
        %v696 = vadd.f32 0.0, %v695
        %v697 = vpop.f32.mrb[0].mxu0
        %v698 = vadd.f32 0.0, %v697
        %699 = vmatprep.mubr.bf16.mxu0 0
        %700 = vmatmul.mubr.bf16.gmra.mrb[0].mxu0 %v655
        %v701 = vpop.f32.mrb[0].mxu0
        %v702 = vadd.f32 0.0, %v701
        %v703 = vpop.f32.mrb[0].mxu0
        %v704 = vadd.f32 0.0, %v703
        %v705 = vpop.f32.mrb[0].mxu0
        %v706 = vadd.f32 0.0, %v705
        %v707 = vpop.f32.mrb[0].mxu0
        %v708 = vadd.f32 0.0, %v707
        %709 = vdwg.mxu0
        %v710 = vpack.c.bf16 %v696, %v692
        %v711 = vpack.c.bf16 %v698, %v694
        %v712 = vpack.c.bf16 %v706, %v702
        %v713 = vpack.c.bf16 %v708, %v704
        %v714 = vld [vmem:[%s1] sm:$0xf]
        %v715 = vld [vmem:[%s1 + $0x4] sm:$0xf]
        %v716 = vld [vmem:[%s1 + $0x8] sm:$0xf]
        %v717 = vld [vmem:[%s1 + $0xc] sm:$0xf]
        %v718 = vld [vmem:[%s1 + $0x10] sm:$0xf]
        %v719 = vld [vmem:[%s1 + $0x14] sm:$0xf]
        %v720 = vld [vmem:[%s1 + $0x18] sm:$0xf]
        %v721 = vld [vmem:[%s1 + $0x1c] sm:$0xf]
        %v722 = vld [vmem:[%s1 + $0x20] sm:$0xf]
        %v723 = vld [vmem:[%s1 + $0x24] sm:$0xf]
        %v724 = vld [vmem:[%s1 + $0x28] sm:$0xf]
        %v725 = vld [vmem:[%s1 + $0x2c] sm:$0xf]
        %v726 = vld [vmem:[%s1 + $0x30] sm:$0xf]
        %v727 = vld [vmem:[%s1 + $0x34] sm:$0xf]
        %v728 = vld [vmem:[%s1 + $0x38] sm:$0xf]
        %v729 = vld [vmem:[%s1 + $0x3c] sm:$0xf]
        %v730 = vld [vmem:[%s1 + $0x40] sm:$0xf]
        %v731 = vld [vmem:[%s1 + $0x44] sm:$0xf]
        %v732 = vld [vmem:[%s1 + $0x48] sm:$0xf]
        %v733 = vld [vmem:[%s1 + $0x4c] sm:$0xf]
        %v734 = vld [vmem:[%s1 + $0x50] sm:$0xf]
        %v735 = vld [vmem:[%s1 + $0x54] sm:$0xf]
        %v736 = vld [vmem:[%s1 + $0x58] sm:$0xf]
        %v737 = vld [vmem:[%s1 + $0x5c] sm:$0xf]
        %vm738 = vcmp.eq.s32.totalorder %v591, %v592
        %vm739 = vcmp.eq.s32.totalorder %v591, %v593
        %vm740 = vcmp.eq.s32.totalorder %v591, %v594
        %vm741 = vcmp.eq.s32.totalorder %v591, %v595
        %v742 = vsel %vm738, 1.0, 0.0
        %v743 = vsel %vm739, 1.0, 0.0
        %v744 = vsel %vm740, 1.0, 0.0
        %v745 = vsel %vm741, 1.0, 0.0
        %v746 = vpack.c.bf16 %v743, %v742
        %v747 = vpack.c.bf16 %v745, %v744
        %v749 = vsel %vm650, %v746, 0
        %v752 = vsel %vm650, %v747, 0
        %754 = vmatprep.subr.bf16.mxu0 %v635
        %755 = vmatpush1.bf16.msra.mxu0 %v634
        %756 = vmatprep.subr.bf16.mxu0 %v637
        %757 = vmatpush1.bf16.msra.mxu0 %v636
        %758 = vmatprep.subr.bf16.mxu0 %v639
        %759 = vmatpush1.bf16.msra.mxu0 %v638
        %760 = vmatprep.subr.bf16.mxu0 %v641
        %761 = vmatpush1.bf16.msra.mxu0 %v640
        %762 = vmatprep.subr.bf16.mxu0 0
        %763 = vmatpush1.bf16.msra.mxu0 0
        %764 = vmatprep.subr.bf16.mxu0 0
        %765 = vmatpush1.bf16.msra.mxu0 0
        %766 = vmatprep.subr.bf16.mxu0 0
        %767 = vmatpush1.bf16.msra.mxu0 0
        %768 = vmatprep.subr.bf16.mxu0 0
        %769 = vmatpush1.bf16.msra.mxu0 0
        %770 = vmatprep.subr.bf16.mxu0 0
        %771 = vmatpush1.bf16.msra.mxu0 0
        %772 = vmatprep.subr.bf16.mxu0 0
        %773 = vmatpush1.bf16.msra.mxu0 0
        %774 = vmatprep.subr.bf16.mxu0 0
        %775 = vmatpush1.bf16.msra.mxu0 0
        %776 = vmatprep.subr.bf16.mxu0 0
        %777 = vmatpush1.bf16.msra.mxu0 0
        %778 = vmatprep.subr.bf16.mxu0 0
        %779 = vmatpush1.bf16.msra.mxu0 0
        %780 = vmatprep.subr.bf16.mxu0 0
        %781 = vmatpush1.bf16.msra.mxu0 0
        %782 = vmatprep.subr.bf16.mxu0 0
        %783 = vmatpush1.bf16.msra.mxu0 0
        %784 = vmatprep.subr.bf16.mxu0 0
        %785 = vmatpush1.bf16.msra.mxu0 0
        %786 = vmatprep.mubr.bf16.mxu0 0
        %787 = vmatmul.mubr.bf16.gmra.mrb[0].mxu0 %v749
        %v788 = vpop.f32.mrb[0].mxu0
        %v789 = vadd.f32 0.0, %v788
        %v790 = vpop.f32.mrb[0].mxu0
        %v791 = vadd.f32 0.0, %v790
        %v792 = vpop.f32.mrb[0].mxu0
        %v793 = vadd.f32 0.0, %v792
        %v794 = vpop.f32.mrb[0].mxu0
        %v795 = vadd.f32 0.0, %v794
        %796 = vmatprep.mubr.bf16.mxu0 0
        %797 = vmatmul.mubr.bf16.gmra.mrb[0].mxu0 %v752
        %v798 = vpop.f32.mrb[0].mxu0
        %v799 = vadd.f32 0.0, %v798
        %v800 = vpop.f32.mrb[0].mxu0
        %v801 = vadd.f32 0.0, %v800
        %v802 = vpop.f32.mrb[0].mxu0
        %v803 = vadd.f32 0.0, %v802
        %v804 = vpop.f32.mrb[0].mxu0
        %v805 = vadd.f32 0.0, %v804
        %806 = vdwg.mxu0
        %v807 = vpack.c.bf16 %v793, %v789
        %v808 = vpack.c.bf16 %v795, %v791
        %v809 = vpack.c.bf16 %v803, %v799
        %v810 = vpack.c.bf16 %v805, %v801
        %s811 = scalar_lea.vmem %s1, 96
        %v812 = vld [vmem:[%s811] sm:$0xf]
        %v813 = vld [vmem:[%s811 + $0x4] sm:$0xf]
        %v814 = vld [vmem:[%s811 + $0x8] sm:$0xf]
        %v815 = vld [vmem:[%s811 + $0xc] sm:$0xf]
        %v816 = vld [vmem:[%s811 + $0x10] sm:$0xf]
        %v817 = vld [vmem:[%s811 + $0x14] sm:$0xf]
        %v818 = vld [vmem:[%s811 + $0x18] sm:$0xf]
        %v819 = vld [vmem:[%s811 + $0x1c] sm:$0xf]
        %v820 = vld [vmem:[%s811 + $0x20] sm:$0xf]
        %v821 = vld [vmem:[%s811 + $0x24] sm:$0xf]
        %v822 = vld [vmem:[%s811 + $0x28] sm:$0xf]
        %v823 = vld [vmem:[%s811 + $0x2c] sm:$0xf]
        %v824 = vld [vmem:[%s811 + $0x30] sm:$0xf]
        %v825 = vld [vmem:[%s811 + $0x34] sm:$0xf]
        %v826 = vld [vmem:[%s811 + $0x38] sm:$0xf]
        %v827 = vld [vmem:[%s811 + $0x3c] sm:$0xf]
        %v828 = vld [vmem:[%s811 + $0x40] sm:$0xf]
        %v829 = vld [vmem:[%s811 + $0x44] sm:$0xf]
        %v830 = vld [vmem:[%s811 + $0x48] sm:$0xf]
        %v831 = vld [vmem:[%s811 + $0x4c] sm:$0xf]
        %v832 = vld [vmem:[%s811 + $0x50] sm:$0xf]
        %v833 = vld [vmem:[%s811 + $0x54] sm:$0xf]
        %v834 = vld [vmem:[%s811 + $0x58] sm:$0xf]
        %v835 = vld [vmem:[%s811 + $0x5c] sm:$0xf]
        %v860 = vunpack.c.l.b16 %v812
        %v861 = vunpack.c.l.b16 %v813
        %v862 = vunpack.c.l.b16 %v814
        %v863 = vunpack.c.l.b16 %v815
        %v864 = vunpack.c.l.b16 %v816
        %v865 = vunpack.c.l.b16 %v817
        %v866 = vunpack.c.l.b16 %v818
        %v867 = vunpack.c.l.b16 %v819
        %v868 = vunpack.c.l.b16 %v820
        %v869 = vunpack.c.l.b16 %v821
        %v870 = vunpack.c.l.b16 %v822
        %v871 = vunpack.c.l.b16 %v823
        %v872 = vunpack.c.l.b16 %v824
        %v873 = vunpack.c.l.b16 %v825
        %v874 = vunpack.c.l.b16 %v826
        %v875 = vunpack.c.l.b16 %v827
        %v876 = vunpack.c.l.b16 %v828
        %v877 = vunpack.c.l.b16 %v829
        %v878 = vunpack.c.l.b16 %v830
        %v879 = vunpack.c.l.b16 %v831
        %v880 = vunpack.c.l.b16 %v832
        %v881 = vunpack.c.l.b16 %v833
        %v882 = vunpack.c.l.b16 %v834
        %v883 = vunpack.c.l.b16 %v835
        %v884 = vpack.c.b16 %v861, %v860
        %v885 = vpack.c.b16 %v863, %v862
        %v886 = vpack.c.b16 %v865, %v864
        %v887 = vpack.c.b16 %v867, %v866
        %v888 = vpack.c.b16 %v869, %v868
        %v889 = vpack.c.b16 %v871, %v870
        %v890 = vpack.c.b16 %v873, %v872
        %v891 = vpack.c.b16 %v875, %v874
        %v892 = vpack.c.b16 %v877, %v876
        %v893 = vpack.c.b16 %v879, %v878
        %v894 = vpack.c.b16 %v881, %v880
        %v895 = vpack.c.b16 %v883, %v882
        %v909 = vsel %vm650, %v808, 0
        %v912 = vsel %vm650, %v810, 0
        %914 = vmatprep.subr.bf16.mxu0 0
        %915 = vmatpush1.bf16.msra.mxu0 %v884
        %916 = vmatprep.subr.bf16.mxu0 0
        %917 = vmatpush1.bf16.msra.mxu0 %v885
        %918 = vmatprep.subr.bf16.mxu0 0
        %919 = vmatpush1.bf16.msra.mxu0 %v886
        %920 = vmatprep.subr.bf16.mxu0 0
        %921 = vmatpush1.bf16.msra.mxu0 %v887
        %922 = vmatprep.subr.bf16.mxu0 0
        %923 = vmatpush1.bf16.msra.mxu0 %v888
        %924 = vmatprep.subr.bf16.mxu0 0
        %925 = vmatpush1.bf16.msra.mxu0 %v889
        %926 = vmatprep.subr.bf16.mxu0 0
        %927 = vmatpush1.bf16.msra.mxu0 %v890
        %928 = vmatprep.subr.bf16.mxu0 0
        %929 = vmatpush1.bf16.msra.mxu0 %v891
        %930 = vmatprep.subr.bf16.mxu0 0
        %931 = vmatpush1.bf16.msra.mxu0 %v892
        %932 = vmatprep.subr.bf16.mxu0 0
        %933 = vmatpush1.bf16.msra.mxu0 %v893
        %934 = vmatprep.subr.bf16.mxu0 0
        %935 = vmatpush1.bf16.msra.mxu0 %v894
        %936 = vmatprep.subr.bf16.mxu0 0
        %937 = vmatpush1.bf16.msra.mxu0 %v895
        %938 = vmatprep.subr.bf16.mxu0 0
        %939 = vmatpush1.bf16.msra.mxu0 0
        %940 = vmatprep.subr.bf16.mxu0 0
        %941 = vmatpush1.bf16.msra.mxu0 0
        %942 = vmatprep.subr.bf16.mxu0 0
        %943 = vmatpush1.bf16.msra.mxu0 0
        %944 = vmatprep.subr.bf16.mxu0 0
        %945 = vmatpush1.bf16.msra.mxu0 0
        %946 = vmatprep.mubr.bf16.mxu0 %v909
        %947 = vmatmul.mubr.bf16.gmra.mrb[0].mxu0 %v807
        %v948 = vpop.f32.mrb[0].mxu0
        %v949 = vadd.f32 0.0, %v948
        %v950 = vpop.f32.mrb[0].mxu0
        %v951 = vpop.f32.mrb[0].mxu0
        %v952 = vadd.f32 0.0, %v951
        %v953 = vpop.f32.mrb[0].mxu0
        %954 = vmatprep.mubr.bf16.mxu0 %v912
        %955 = vmatmul.mubr.bf16.gmra.mrb[0].mxu0 %v809
        %v956 = vpop.f32.mrb[0].mxu0
        %v957 = vadd.f32 0.0, %v956
        %v958 = vpop.f32.mrb[0].mxu0
        %v959 = vpop.f32.mrb[0].mxu0
        %v960 = vadd.f32 0.0, %v959
        %v961 = vpop.f32.mrb[0].mxu0
        %962 = vdwg.mxu0
        %v987 = vunpack.c.l.b16 %v714
        %v988 = vunpack.c.l.b16 %v715
        %v989 = vunpack.c.l.b16 %v716
        %v990 = vunpack.c.l.b16 %v717
        %v991 = vunpack.c.l.b16 %v718
        %v992 = vunpack.c.l.b16 %v719
        %v993 = vunpack.c.l.b16 %v720
        %v994 = vunpack.c.l.b16 %v721
        %v995 = vunpack.c.l.b16 %v722
        %v996 = vunpack.c.l.b16 %v723
        %v997 = vunpack.c.l.b16 %v724
        %v998 = vunpack.c.l.b16 %v725
        %v999 = vunpack.c.l.b16 %v726
        %v1000 = vunpack.c.l.b16 %v727
        %v1001 = vunpack.c.l.b16 %v728
        %v1002 = vunpack.c.l.b16 %v729
        %v1003 = vunpack.c.l.b16 %v730
        %v1004 = vunpack.c.l.b16 %v731
        %v1005 = vunpack.c.l.b16 %v732
        %v1006 = vunpack.c.l.b16 %v733
        %v1007 = vunpack.c.l.b16 %v734
        %v1008 = vunpack.c.l.b16 %v735
        %v1009 = vunpack.c.l.b16 %v736
        %v1010 = vunpack.c.l.b16 %v737
        %v1011 = vpack.c.b16 %v988, %v987
        %v1012 = vpack.c.b16 %v990, %v989
        %v1013 = vpack.c.b16 %v992, %v991
        %v1014 = vpack.c.b16 %v994, %v993
        %v1015 = vpack.c.b16 %v996, %v995
        %v1016 = vpack.c.b16 %v998, %v997
        %v1017 = vpack.c.b16 %v1000, %v999
        %v1018 = vpack.c.b16 %v1002, %v1001
        %v1019 = vpack.c.b16 %v1004, %v1003
        %v1020 = vpack.c.b16 %v1006, %v1005
        %v1021 = vpack.c.b16 %v1008, %v1007
        %v1022 = vpack.c.b16 %v1010, %v1009
        %v1036 = vsel %vm650, %v711, 0
        %v1039 = vsel %vm650, %v713, 0
        %1041 = vmatprep.subr.bf16.mxu0 0
        %1042 = vmatpush1.bf16.msra.mxu0 %v1011
        %1043 = vmatprep.subr.bf16.mxu0 0
        %1044 = vmatpush1.bf16.msra.mxu0 %v1012
        %1045 = vmatprep.subr.bf16.mxu0 0
        %1046 = vmatpush1.bf16.msra.mxu0 %v1013
        %1047 = vmatprep.subr.bf16.mxu0 0
        %1048 = vmatpush1.bf16.msra.mxu0 %v1014
        %1049 = vmatprep.subr.bf16.mxu0 0
        %1050 = vmatpush1.bf16.msra.mxu0 %v1015
        %1051 = vmatprep.subr.bf16.mxu0 0
        %1052 = vmatpush1.bf16.msra.mxu0 %v1016
        %1053 = vmatprep.subr.bf16.mxu0 0
        %1054 = vmatpush1.bf16.msra.mxu0 %v1017
        %1055 = vmatprep.subr.bf16.mxu0 0
        %1056 = vmatpush1.bf16.msra.mxu0 %v1018
        %1057 = vmatprep.subr.bf16.mxu0 0
        %1058 = vmatpush1.bf16.msra.mxu0 %v1019
        %1059 = vmatprep.subr.bf16.mxu0 0
        %1060 = vmatpush1.bf16.msra.mxu0 %v1020
        %1061 = vmatprep.subr.bf16.mxu0 0
        %1062 = vmatpush1.bf16.msra.mxu0 %v1021
        %1063 = vmatprep.subr.bf16.mxu0 0
        %1064 = vmatpush1.bf16.msra.mxu0 %v1022
        %1065 = vmatprep.subr.bf16.mxu0 0
        %1066 = vmatpush1.bf16.msra.mxu0 0
        %1067 = vmatprep.subr.bf16.mxu0 0
        %1068 = vmatpush1.bf16.msra.mxu0 0
        %1069 = vmatprep.subr.bf16.mxu0 0
        %1070 = vmatpush1.bf16.msra.mxu0 0
        %1071 = vmatprep.subr.bf16.mxu0 0
        %1072 = vmatpush1.bf16.msra.mxu0 0
        %1073 = vmatprep.mubr.bf16.mxu0 %v1036
        %1074 = vmatmul.mubr.bf16.gmra.mrb[0].mxu0 %v710
        %v1075 = vpop.f32.mrb[0].mxu0
        %v1076 = vadd.f32 %v949, %v1075
        %v1077 = vpop.f32.mrb[0].mxu0
        %v1078 = vpop.f32.mrb[0].mxu0
        %v1079 = vadd.f32 %v952, %v1078
        %v1080 = vpop.f32.mrb[0].mxu0
        %1081 = vmatprep.mubr.bf16.mxu0 %v1039
        %1082 = vmatmul.mubr.bf16.gmra.mrb[0].mxu0 %v712
        %v1083 = vpop.f32.mrb[0].mxu0
        %v1084 = vadd.f32 %v957, %v1083
        %v1085 = vpop.f32.mrb[0].mxu0
        %v1086 = vpop.f32.mrb[0].mxu0
        %v1087 = vadd.f32 %v960, %v1086
        %v1088 = vpop.f32.mrb[0].mxu0
        %1089 = vdwg.mxu0
        %v1090 = vadd.s32 %v592, 1
        %v1091 = vadd.s32 %v593, 1
        %v1092 = vadd.s32 %v594, 1
        %v1093 = vadd.s32 %v595, 1
        %vm1094 = vcmp.eq.s32.totalorder %v591, %v1090
        %vm1095 = vcmp.eq.s32.totalorder %v591, %v1091
        %vm1096 = vcmp.eq.s32.totalorder %v591, %v1092
        %vm1097 = vcmp.eq.s32.totalorder %v591, %v1093
        %v1098 = vsel %vm1094, 1.0, 0.0
        %v1099 = vsel %vm1095, 1.0, 0.0
        %v1100 = vsel %vm1096, 1.0, 0.0
        %v1101 = vsel %vm1097, 1.0, 0.0
        %v1102 = vpack.c.bf16 %v1099, %v1098
        %v1103 = vpack.c.bf16 %v1101, %v1100
        %v1105 = vsel %vm650, %v1102, 0
        %v1108 = vsel %vm650, %v1103, 0
        %1110 = vmatprep.subr.bf16.mxu0 %v635
        %1111 = vmatpush1.bf16.msra.mxu0 %v634
        %1112 = vmatprep.subr.bf16.mxu0 %v637
        %1113 = vmatpush1.bf16.msra.mxu0 %v636
        %1114 = vmatprep.subr.bf16.mxu0 %v639
        %1115 = vmatpush1.bf16.msra.mxu0 %v638
        %1116 = vmatprep.subr.bf16.mxu0 %v641
        %1117 = vmatpush1.bf16.msra.mxu0 %v640
        %1118 = vmatprep.subr.bf16.mxu0 0
        %1119 = vmatpush1.bf16.msra.mxu0 0
        %1120 = vmatprep.subr.bf16.mxu0 0
        %1121 = vmatpush1.bf16.msra.mxu0 0
        %1122 = vmatprep.subr.bf16.mxu0 0
        %1123 = vmatpush1.bf16.msra.mxu0 0
        %1124 = vmatprep.subr.bf16.mxu0 0
        %1125 = vmatpush1.bf16.msra.mxu0 0
        %1126 = vmatprep.subr.bf16.mxu0 0
        %1127 = vmatpush1.bf16.msra.mxu0 0
        %1128 = vmatprep.subr.bf16.mxu0 0
        %1129 = vmatpush1.bf16.msra.mxu0 0
        %1130 = vmatprep.subr.bf16.mxu0 0
        %1131 = vmatpush1.bf16.msra.mxu0 0
        %1132 = vmatprep.subr.bf16.mxu0 0
        %1133 = vmatpush1.bf16.msra.mxu0 0
        %1134 = vmatprep.subr.bf16.mxu0 0
        %1135 = vmatpush1.bf16.msra.mxu0 0
        %1136 = vmatprep.subr.bf16.mxu0 0
        %1137 = vmatpush1.bf16.msra.mxu0 0
        %1138 = vmatprep.subr.bf16.mxu0 0
        %1139 = vmatpush1.bf16.msra.mxu0 0
        %1140 = vmatprep.subr.bf16.mxu0 0
        %1141 = vmatpush1.bf16.msra.mxu0 0
        %1142 = vmatprep.mubr.bf16.mxu0 0
        %1143 = vmatmul.mubr.bf16.gmra.mrb[0].mxu0 %v1105
        %v1144 = vpop.f32.mrb[0].mxu0
        %v1145 = vadd.f32 0.0, %v1144
        %v1146 = vpop.f32.mrb[0].mxu0
        %v1147 = vadd.f32 0.0, %v1146
        %v1148 = vpop.f32.mrb[0].mxu0
        %v1149 = vadd.f32 0.0, %v1148
        %v1150 = vpop.f32.mrb[0].mxu0
        %v1151 = vadd.f32 0.0, %v1150
        %1152 = vmatprep.mubr.bf16.mxu0 0
        %1153 = vmatmul.mubr.bf16.gmra.mrb[0].mxu0 %v1108
        %v1154 = vpop.f32.mrb[0].mxu0
        %v1155 = vadd.f32 0.0, %v1154
        %v1156 = vpop.f32.mrb[0].mxu0
        %v1157 = vadd.f32 0.0, %v1156
        %v1158 = vpop.f32.mrb[0].mxu0
        %v1159 = vadd.f32 0.0, %v1158
        %v1160 = vpop.f32.mrb[0].mxu0
        %v1161 = vadd.f32 0.0, %v1160
        %1162 = vdwg.mxu0
        %v1163 = vpack.c.bf16 %v1149, %v1145
        %v1164 = vpack.c.bf16 %v1151, %v1147
        %v1165 = vpack.c.bf16 %v1159, %v1155
        %v1166 = vpack.c.bf16 %v1161, %v1157
        %s1167 = scalar_lea.vmem %s1, 192
        %v1168 = vld [vmem:[%s1167] sm:$0xf]
        %v1169 = vld [vmem:[%s1167 + $0x4] sm:$0xf]
        %v1170 = vld [vmem:[%s1167 + $0x8] sm:$0xf]
        %v1171 = vld [vmem:[%s1167 + $0xc] sm:$0xf]
        %v1172 = vld [vmem:[%s1167 + $0x10] sm:$0xf]
        %v1173 = vld [vmem:[%s1167 + $0x14] sm:$0xf]
        %v1174 = vld [vmem:[%s1167 + $0x18] sm:$0xf]
        %v1175 = vld [vmem:[%s1167 + $0x1c] sm:$0xf]
        %v1176 = vld [vmem:[%s1167 + $0x20] sm:$0xf]
        %v1177 = vld [vmem:[%s1167 + $0x24] sm:$0xf]
        %v1178 = vld [vmem:[%s1167 + $0x28] sm:$0xf]
        %v1179 = vld [vmem:[%s1167 + $0x2c] sm:$0xf]
        %v1180 = vld [vmem:[%s1167 + $0x30] sm:$0xf]
        %v1181 = vld [vmem:[%s1167 + $0x34] sm:$0xf]
        %v1182 = vld [vmem:[%s1167 + $0x38] sm:$0xf]
        %v1183 = vld [vmem:[%s1167 + $0x3c] sm:$0xf]
        %v1184 = vld [vmem:[%s1167 + $0x40] sm:$0xf]
        %v1185 = vld [vmem:[%s1167 + $0x44] sm:$0xf]
        %v1186 = vld [vmem:[%s1167 + $0x48] sm:$0xf]
        %v1187 = vld [vmem:[%s1167 + $0x4c] sm:$0xf]
        %v1188 = vld [vmem:[%s1167 + $0x50] sm:$0xf]
        %v1189 = vld [vmem:[%s1167 + $0x54] sm:$0xf]
        %v1190 = vld [vmem:[%s1167 + $0x58] sm:$0xf]
        %v1191 = vld [vmem:[%s1167 + $0x5c] sm:$0xf]
        %v1216 = vunpack.c.l.b16 %v1168
        %v1217 = vunpack.c.l.b16 %v1169
        %v1218 = vunpack.c.l.b16 %v1170
        %v1219 = vunpack.c.l.b16 %v1171
        %v1220 = vunpack.c.l.b16 %v1172
        %v1221 = vunpack.c.l.b16 %v1173
        %v1222 = vunpack.c.l.b16 %v1174
        %v1223 = vunpack.c.l.b16 %v1175
        %v1224 = vunpack.c.l.b16 %v1176
        %v1225 = vunpack.c.l.b16 %v1177
        %v1226 = vunpack.c.l.b16 %v1178
        %v1227 = vunpack.c.l.b16 %v1179
        %v1228 = vunpack.c.l.b16 %v1180
        %v1229 = vunpack.c.l.b16 %v1181
        %v1230 = vunpack.c.l.b16 %v1182
        %v1231 = vunpack.c.l.b16 %v1183
        %v1232 = vunpack.c.l.b16 %v1184
        %v1233 = vunpack.c.l.b16 %v1185
        %v1234 = vunpack.c.l.b16 %v1186
        %v1235 = vunpack.c.l.b16 %v1187
        %v1236 = vunpack.c.l.b16 %v1188
        %v1237 = vunpack.c.l.b16 %v1189
        %v1238 = vunpack.c.l.b16 %v1190
        %v1239 = vunpack.c.l.b16 %v1191
        %v1240 = vpack.c.b16 %v1217, %v1216
        %v1241 = vpack.c.b16 %v1219, %v1218
        %v1242 = vpack.c.b16 %v1221, %v1220
        %v1243 = vpack.c.b16 %v1223, %v1222
        %v1244 = vpack.c.b16 %v1225, %v1224
        %v1245 = vpack.c.b16 %v1227, %v1226
        %v1246 = vpack.c.b16 %v1229, %v1228
        %v1247 = vpack.c.b16 %v1231, %v1230
        %v1248 = vpack.c.b16 %v1233, %v1232
        %v1249 = vpack.c.b16 %v1235, %v1234
        %v1250 = vpack.c.b16 %v1237, %v1236
        %v1251 = vpack.c.b16 %v1239, %v1238
        %v1265 = vsel %vm650, %v1164, 0
        %v1268 = vsel %vm650, %v1166, 0
        %1270 = vmatprep.subr.bf16.mxu0 0
        %1271 = vmatpush1.bf16.msra.mxu0 %v1240
        %1272 = vmatprep.subr.bf16.mxu0 0
        %1273 = vmatpush1.bf16.msra.mxu0 %v1241
        %1274 = vmatprep.subr.bf16.mxu0 0
        %1275 = vmatpush1.bf16.msra.mxu0 %v1242
        %1276 = vmatprep.subr.bf16.mxu0 0
        %1277 = vmatpush1.bf16.msra.mxu0 %v1243
        %1278 = vmatprep.subr.bf16.mxu0 0
        %1279 = vmatpush1.bf16.msra.mxu0 %v1244
        %1280 = vmatprep.subr.bf16.mxu0 0
        %1281 = vmatpush1.bf16.msra.mxu0 %v1245
        %1282 = vmatprep.subr.bf16.mxu0 0
        %1283 = vmatpush1.bf16.msra.mxu0 %v1246
        %1284 = vmatprep.subr.bf16.mxu0 0
        %1285 = vmatpush1.bf16.msra.mxu0 %v1247
        %1286 = vmatprep.subr.bf16.mxu0 0
        %1287 = vmatpush1.bf16.msra.mxu0 %v1248
        %1288 = vmatprep.subr.bf16.mxu0 0
        %1289 = vmatpush1.bf16.msra.mxu0 %v1249
        %1290 = vmatprep.subr.bf16.mxu0 0
        %1291 = vmatpush1.bf16.msra.mxu0 %v1250
        %1292 = vmatprep.subr.bf16.mxu0 0
        %1293 = vmatpush1.bf16.msra.mxu0 %v1251
        %1294 = vmatprep.subr.bf16.mxu0 0
        %1295 = vmatpush1.bf16.msra.mxu0 0
        %1296 = vmatprep.subr.bf16.mxu0 0
        %1297 = vmatpush1.bf16.msra.mxu0 0
        %1298 = vmatprep.subr.bf16.mxu0 0
        %1299 = vmatpush1.bf16.msra.mxu0 0
        %1300 = vmatprep.subr.bf16.mxu0 0
        %1301 = vmatpush1.bf16.msra.mxu0 0
        %1302 = vmatprep.mubr.bf16.mxu0 %v1265
        %1303 = vmatmul.mubr.bf16.gmra.mrb[0].mxu0 %v1163
        %v1304 = vpop.f32.mrb[0].mxu0
        %v1305 = vadd.f32 0.0, %v1304
        %v1306 = vpop.f32.mrb[0].mxu0
        %v1307 = vpop.f32.mrb[0].mxu0
        %v1308 = vadd.f32 0.0, %v1307
        %v1309 = vpop.f32.mrb[0].mxu0
        %1310 = vmatprep.mubr.bf16.mxu0 %v1268
        %1311 = vmatmul.mubr.bf16.gmra.mrb[0].mxu0 %v1165
        %v1312 = vpop.f32.mrb[0].mxu0
        %v1313 = vadd.f32 0.0, %v1312
        %v1314 = vpop.f32.mrb[0].mxu0
        %v1315 = vpop.f32.mrb[0].mxu0
        %v1316 = vadd.f32 0.0, %v1315
        %v1317 = vpop.f32.mrb[0].mxu0
        %1318 = vdwg.mxu0
        %v1319 = vadd.f32 %v1076, %v1305
        %v1320 = vadd.f32 %v1079, %v1308
        %v1321 = vadd.f32 %v1084, %v1313
        %v1322 = vadd.f32 %v1087, %v1316
        %v1323 = vadd.s32 %v592, 2
        %v1324 = vadd.s32 %v593, 2
        %v1325 = vadd.s32 %v594, 2
        %v1326 = vadd.s32 %v595, 2
        %vm1327 = vcmp.eq.s32.totalorder %v591, %v1323
        %vm1328 = vcmp.eq.s32.totalorder %v591, %v1324
        %vm1329 = vcmp.eq.s32.totalorder %v591, %v1325
        %vm1330 = vcmp.eq.s32.totalorder %v591, %v1326
        %v1331 = vsel %vm1327, 1.0, 0.0
        %v1332 = vsel %vm1328, 1.0, 0.0
        %v1333 = vsel %vm1329, 1.0, 0.0
        %v1334 = vsel %vm1330, 1.0, 0.0
        %v1335 = vpack.c.bf16 %v1332, %v1331
        %v1336 = vpack.c.bf16 %v1334, %v1333
        %v1338 = vsel %vm650, %v1335, 0
        %v1341 = vsel %vm650, %v1336, 0
        %1343 = vmatprep.subr.bf16.mxu0 %v635
        %1344 = vmatpush1.bf16.msra.mxu0 %v634
        %1345 = vmatprep.subr.bf16.mxu0 %v637
        %1346 = vmatpush1.bf16.msra.mxu0 %v636
        %1347 = vmatprep.subr.bf16.mxu0 %v639
        %1348 = vmatpush1.bf16.msra.mxu0 %v638
        %1349 = vmatprep.subr.bf16.mxu0 %v641
        %1350 = vmatpush1.bf16.msra.mxu0 %v640
        %1351 = vmatprep.subr.bf16.mxu0 0
        %1352 = vmatpush1.bf16.msra.mxu0 0
        %1353 = vmatprep.subr.bf16.mxu0 0
        %1354 = vmatpush1.bf16.msra.mxu0 0
        %1355 = vmatprep.subr.bf16.mxu0 0
        %1356 = vmatpush1.bf16.msra.mxu0 0
        %1357 = vmatprep.subr.bf16.mxu0 0
        %1358 = vmatpush1.bf16.msra.mxu0 0
        %1359 = vmatprep.subr.bf16.mxu0 0
        %1360 = vmatpush1.bf16.msra.mxu0 0
        %1361 = vmatprep.subr.bf16.mxu0 0
        %1362 = vmatpush1.bf16.msra.mxu0 0
        %1363 = vmatprep.subr.bf16.mxu0 0
        %1364 = vmatpush1.bf16.msra.mxu0 0
        %1365 = vmatprep.subr.bf16.mxu0 0
        %1366 = vmatpush1.bf16.msra.mxu0 0
        %1367 = vmatprep.subr.bf16.mxu0 0
        %1368 = vmatpush1.bf16.msra.mxu0 0
        %1369 = vmatprep.subr.bf16.mxu0 0
        %1370 = vmatpush1.bf16.msra.mxu0 0
        %1371 = vmatprep.subr.bf16.mxu0 0
        %1372 = vmatpush1.bf16.msra.mxu0 0
        %1373 = vmatprep.subr.bf16.mxu0 0
        %1374 = vmatpush1.bf16.msra.mxu0 0
        %1375 = vmatprep.mubr.bf16.mxu0 0
        %1376 = vmatmul.mubr.bf16.gmra.mrb[0].mxu0 %v1338
        %v1377 = vpop.f32.mrb[0].mxu0
        %v1378 = vadd.f32 0.0, %v1377
        %v1379 = vpop.f32.mrb[0].mxu0
        %v1380 = vadd.f32 0.0, %v1379
        %v1381 = vpop.f32.mrb[0].mxu0
        %v1382 = vadd.f32 0.0, %v1381
        %v1383 = vpop.f32.mrb[0].mxu0
        %v1384 = vadd.f32 0.0, %v1383
        %1385 = vmatprep.mubr.bf16.mxu0 0
        %1386 = vmatmul.mubr.bf16.gmra.mrb[0].mxu0 %v1341
        %v1387 = vpop.f32.mrb[0].mxu0
        %v1388 = vadd.f32 0.0, %v1387
        %v1389 = vpop.f32.mrb[0].mxu0
        %v1390 = vadd.f32 0.0, %v1389
        %v1391 = vpop.f32.mrb[0].mxu0
        %v1392 = vadd.f32 0.0, %v1391
        %v1393 = vpop.f32.mrb[0].mxu0
        %v1394 = vadd.f32 0.0, %v1393
        %1395 = vdwg.mxu0
        %v1396 = vpack.c.bf16 %v1382, %v1378
        %v1397 = vpack.c.bf16 %v1384, %v1380
        %v1398 = vpack.c.bf16 %v1392, %v1388
        %v1399 = vpack.c.bf16 %v1394, %v1390
        %s1400 = scalar_lea.vmem %s1, 288
        %v1401 = vld [vmem:[%s1400] sm:$0xf]
        %v1402 = vld [vmem:[%s1400 + $0x4] sm:$0xf]
        %v1403 = vld [vmem:[%s1400 + $0x8] sm:$0xf]
        %v1404 = vld [vmem:[%s1400 + $0xc] sm:$0xf]
        %v1405 = vld [vmem:[%s1400 + $0x10] sm:$0xf]
        %v1406 = vld [vmem:[%s1400 + $0x14] sm:$0xf]
        %v1407 = vld [vmem:[%s1400 + $0x18] sm:$0xf]
        %v1408 = vld [vmem:[%s1400 + $0x1c] sm:$0xf]
        %v1409 = vld [vmem:[%s1400 + $0x20] sm:$0xf]
        %v1410 = vld [vmem:[%s1400 + $0x24] sm:$0xf]
        %v1411 = vld [vmem:[%s1400 + $0x28] sm:$0xf]
        %v1412 = vld [vmem:[%s1400 + $0x2c] sm:$0xf]
        %v1413 = vld [vmem:[%s1400 + $0x30] sm:$0xf]
        %v1414 = vld [vmem:[%s1400 + $0x34] sm:$0xf]
        %v1415 = vld [vmem:[%s1400 + $0x38] sm:$0xf]
        %v1416 = vld [vmem:[%s1400 + $0x3c] sm:$0xf]
        %v1417 = vld [vmem:[%s1400 + $0x40] sm:$0xf]
        %v1418 = vld [vmem:[%s1400 + $0x44] sm:$0xf]
        %v1419 = vld [vmem:[%s1400 + $0x48] sm:$0xf]
        %v1420 = vld [vmem:[%s1400 + $0x4c] sm:$0xf]
        %v1421 = vld [vmem:[%s1400 + $0x50] sm:$0xf]
        %v1422 = vld [vmem:[%s1400 + $0x54] sm:$0xf]
        %v1423 = vld [vmem:[%s1400 + $0x58] sm:$0xf]
        %v1424 = vld [vmem:[%s1400 + $0x5c] sm:$0xf]
        %v1449 = vunpack.c.l.b16 %v1401
        %v1450 = vunpack.c.l.b16 %v1402
        %v1451 = vunpack.c.l.b16 %v1403
        %v1452 = vunpack.c.l.b16 %v1404
        %v1453 = vunpack.c.l.b16 %v1405
        %v1454 = vunpack.c.l.b16 %v1406
        %v1455 = vunpack.c.l.b16 %v1407
        %v1456 = vunpack.c.l.b16 %v1408
        %v1457 = vunpack.c.l.b16 %v1409
        %v1458 = vunpack.c.l.b16 %v1410
        %v1459 = vunpack.c.l.b16 %v1411
        %v1460 = vunpack.c.l.b16 %v1412
        %v1461 = vunpack.c.l.b16 %v1413
        %v1462 = vunpack.c.l.b16 %v1414
        %v1463 = vunpack.c.l.b16 %v1415
        %v1464 = vunpack.c.l.b16 %v1416
        %v1465 = vunpack.c.l.b16 %v1417
        %v1466 = vunpack.c.l.b16 %v1418
        %v1467 = vunpack.c.l.b16 %v1419
        %v1468 = vunpack.c.l.b16 %v1420
        %v1469 = vunpack.c.l.b16 %v1421
        %v1470 = vunpack.c.l.b16 %v1422
        %v1471 = vunpack.c.l.b16 %v1423
        %v1472 = vunpack.c.l.b16 %v1424
        %v1473 = vpack.c.b16 %v1450, %v1449
        %v1474 = vpack.c.b16 %v1452, %v1451
        %v1475 = vpack.c.b16 %v1454, %v1453
        %v1476 = vpack.c.b16 %v1456, %v1455
        %v1477 = vpack.c.b16 %v1458, %v1457
        %v1478 = vpack.c.b16 %v1460, %v1459
        %v1479 = vpack.c.b16 %v1462, %v1461
        %v1480 = vpack.c.b16 %v1464, %v1463
        %v1481 = vpack.c.b16 %v1466, %v1465
        %v1482 = vpack.c.b16 %v1468, %v1467
        %v1483 = vpack.c.b16 %v1470, %v1469
        %v1484 = vpack.c.b16 %v1472, %v1471
        %v1498 = vsel %vm650, %v1397, 0
        %v1501 = vsel %vm650, %v1399, 0
        %1503 = vmatprep.subr.bf16.mxu0 0
        %1504 = vmatpush1.bf16.msra.mxu0 %v1473
        %1505 = vmatprep.subr.bf16.mxu0 0
        %1506 = vmatpush1.bf16.msra.mxu0 %v1474
        %1507 = vmatprep.subr.bf16.mxu0 0
        %1508 = vmatpush1.bf16.msra.mxu0 %v1475
        %1509 = vmatprep.subr.bf16.mxu0 0
        %1510 = vmatpush1.bf16.msra.mxu0 %v1476
        %1511 = vmatprep.subr.bf16.mxu0 0
        %1512 = vmatpush1.bf16.msra.mxu0 %v1477
        %1513 = vmatprep.subr.bf16.mxu0 0
        %1514 = vmatpush1.bf16.msra.mxu0 %v1478
        %1515 = vmatprep.subr.bf16.mxu0 0
        %1516 = vmatpush1.bf16.msra.mxu0 %v1479
        %1517 = vmatprep.subr.bf16.mxu0 0
        %1518 = vmatpush1.bf16.msra.mxu0 %v1480
        %1519 = vmatprep.subr.bf16.mxu0 0
        %1520 = vmatpush1.bf16.msra.mxu0 %v1481
        %1521 = vmatprep.subr.bf16.mxu0 0
        %1522 = vmatpush1.bf16.msra.mxu0 %v1482
        %1523 = vmatprep.subr.bf16.mxu0 0
        %1524 = vmatpush1.bf16.msra.mxu0 %v1483
        %1525 = vmatprep.subr.bf16.mxu0 0
        %1526 = vmatpush1.bf16.msra.mxu0 %v1484
        %1527 = vmatprep.subr.bf16.mxu0 0
        %1528 = vmatpush1.bf16.msra.mxu0 0
        %1529 = vmatprep.subr.bf16.mxu0 0
        %1530 = vmatpush1.bf16.msra.mxu0 0
        %1531 = vmatprep.subr.bf16.mxu0 0
        %1532 = vmatpush1.bf16.msra.mxu0 0
        %1533 = vmatprep.subr.bf16.mxu0 0
        %1534 = vmatpush1.bf16.msra.mxu0 0
        %1535 = vmatprep.mubr.bf16.mxu0 %v1498
        %1536 = vmatmul.mubr.bf16.gmra.mrb[0].mxu0 %v1396
        %v1537 = vpop.f32.mrb[0].mxu0
        %v1538 = vadd.f32 0.0, %v1537
        %v1539 = vpop.f32.mrb[0].mxu0
        %v1540 = vpop.f32.mrb[0].mxu0
        %v1541 = vadd.f32 0.0, %v1540
        %v1542 = vpop.f32.mrb[0].mxu0
        %1543 = vmatprep.mubr.bf16.mxu0 %v1501
        %1544 = vmatmul.mubr.bf16.gmra.mrb[0].mxu0 %v1398
        %v1545 = vpop.f32.mrb[0].mxu0
        %v1546 = vadd.f32 0.0, %v1545
        %v1547 = vpop.f32.mrb[0].mxu0
        %v1548 = vpop.f32.mrb[0].mxu0
        %v1549 = vadd.f32 0.0, %v1548
        %v1550 = vpop.f32.mrb[0].mxu0
        %1551 = vdwg.mxu0
        %v1552 = vadd.f32 %v1319, %v1538
        %v1553 = vadd.f32 %v1320, %v1541
        %v1554 = vadd.f32 %v1321, %v1546
        %v1555 = vadd.f32 %v1322, %v1549
        %v1556 = vld [vmem:[%s2] sm:$0x1]
        %v1558 = vlaneseq
        %v1559 = vshrl.u32 %v1558, 7
        %v1560 = vsub.s32 0, %v1559
        %v1561 = vrot.slane %v1556, %v1560
        %v1563 = vadd.f32 %v1552, %v1561
        %v1564 = vadd.f32 %v1553, %v1561
        %v1565 = vadd.f32 %v1554, %v1561
        %v1566 = vadd.f32 %v1555, %v1561
        %v1567 = vmul.f32 %v1563, 0.2
        %v1568 = vmul.f32 %v1564, 0.2
        %v1569 = vmul.f32 %v1565, 0.2
        %v1570 = vmul.f32 %v1566, 0.2
        %v1571 = vmax.f32 %v1563, %v1567
        %v1572 = vmax.f32 %v1564, %v1568
        %v1573 = vmax.f32 %v1565, %v1569
        %v1574 = vmax.f32 %v1566, %v1570
        %v1575 = vpack.c.bf16 %v1572, %v1571
        %v1576 = vpack.c.bf16 %v1574, %v1573
        %vm1577 = vcmask 261120
        %v1578 = vsel %vm1577, %v608, 0
        %1580 = vmatprep.subr.bf16.mxu0 0
        %1581 = vmatpush1.bf16.msra.mxu0 %v1575
        %1582 = vmatprep.subr.bf16.mxu0 0
        %1583 = vmatpush1.bf16.msra.mxu0 %v1576
        %1584 = vmatprep.subr.bf16.mxu0 0
        %1585 = vmatpush1.bf16.msra.mxu0 0
        %1586 = vmatprep.subr.bf16.mxu0 0
        %1587 = vmatpush1.bf16.msra.mxu0 0
        %1588 = vmatprep.subr.bf16.mxu0 0
        %1589 = vmatpush1.bf16.msra.mxu0 0
        %1590 = vmatprep.subr.bf16.mxu0 0
        %1591 = vmatpush1.bf16.msra.mxu0 0
        %1592 = vmatprep.subr.bf16.mxu0 0
        %1593 = vmatpush1.bf16.msra.mxu0 0
        %1594 = vmatprep.subr.bf16.mxu0 0
        %1595 = vmatpush1.bf16.msra.mxu0 0
        %1596 = vmatprep.subr.bf16.mxu0 0
        %1597 = vmatpush1.bf16.msra.mxu0 0
        %1598 = vmatprep.subr.bf16.mxu0 0
        %1599 = vmatpush1.bf16.msra.mxu0 0
        %1600 = vmatprep.subr.bf16.mxu0 0
        %1601 = vmatpush1.bf16.msra.mxu0 0
        %1602 = vmatprep.subr.bf16.mxu0 0
        %1603 = vmatpush1.bf16.msra.mxu0 0
        %1604 = vmatprep.subr.bf16.mxu0 0
        %1605 = vmatpush1.bf16.msra.mxu0 0
        %1606 = vmatprep.subr.bf16.mxu0 0
        %1607 = vmatpush1.bf16.msra.mxu0 0
        %1608 = vmatprep.subr.bf16.mxu0 0
        %1609 = vmatpush1.bf16.msra.mxu0 0
        %1610 = vmatprep.subr.bf16.mxu0 0
        %1611 = vmatpush1.bf16.msra.mxu0 0
        %1612 = vmatprep.mubr.bf16.mxu0 0
        %1613 = vmatmul.mubr.bf16.gmra.mrb[0].mxu0 %v1578
        %v1614 = vpop.f32.mrb[0].mxu0
        %v1615 = vadd.f32 0.0, %v1614
        %v1616 = vpop.f32.mrb[0].mxu0
        %v1617 = vpop.f32.mrb[0].mxu0
        %v1618 = vadd.f32 0.0, %v1617
        %v1619 = vpop.f32.mrb[0].mxu0
        %1620 = vdwg.mxu0
        %v1621 = vpack.c.bf16 %v1618, %v1615
        %v1622 = vld [vmem:[%s3] sm:$0xf]
        %v1623 = vld [vmem:[%s3 + $0x4] sm:$0xf]
        %v1624 = vld [vmem:[%s3 + $0x8] sm:$0xf]
        %v1625 = vld [vmem:[%s3 + $0xc] sm:$0xf]
        %v1626 = vld [vmem:[%s3 + $0x10] sm:$0xf]
        %v1627 = vld [vmem:[%s3 + $0x14] sm:$0xf]
        %v1628 = vld [vmem:[%s3 + $0x18] sm:$0xf]
        %v1629 = vld [vmem:[%s3 + $0x1c] sm:$0xf]
        %v1630 = vld [vmem:[%s3 + $0x20] sm:$0xf]
        %v1631 = vld [vmem:[%s3 + $0x24] sm:$0xf]
        %v1632 = vld [vmem:[%s3 + $0x28] sm:$0xf]
        %v1633 = vld [vmem:[%s3 + $0x2c] sm:$0xf]
        %v1634 = vld [vmem:[%s3 + $0x30] sm:$0xf]
        %v1635 = vld [vmem:[%s3 + $0x34] sm:$0xf]
        %v1636 = vld [vmem:[%s3 + $0x38] sm:$0xf]
        %v1637 = vld [vmem:[%s3 + $0x3c] sm:$0xf]
        %v1638 = vsel %vm1577, %v746, 0
        %1640 = vmatprep.subr.bf16.mxu0 0
        %1641 = vmatpush1.bf16.msra.mxu0 %v1575
        %1642 = vmatprep.subr.bf16.mxu0 0
        %1643 = vmatpush1.bf16.msra.mxu0 %v1576
        %1644 = vmatprep.subr.bf16.mxu0 0
        %1645 = vmatpush1.bf16.msra.mxu0 0
        %1646 = vmatprep.subr.bf16.mxu0 0
        %1647 = vmatpush1.bf16.msra.mxu0 0
        %1648 = vmatprep.subr.bf16.mxu0 0
        %1649 = vmatpush1.bf16.msra.mxu0 0
        %1650 = vmatprep.subr.bf16.mxu0 0
        %1651 = vmatpush1.bf16.msra.mxu0 0
        %1652 = vmatprep.subr.bf16.mxu0 0
        %1653 = vmatpush1.bf16.msra.mxu0 0
        %1654 = vmatprep.subr.bf16.mxu0 0
        %1655 = vmatpush1.bf16.msra.mxu0 0
        %1656 = vmatprep.subr.bf16.mxu0 0
        %1657 = vmatpush1.bf16.msra.mxu0 0
        %1658 = vmatprep.subr.bf16.mxu0 0
        %1659 = vmatpush1.bf16.msra.mxu0 0
        %1660 = vmatprep.subr.bf16.mxu0 0
        %1661 = vmatpush1.bf16.msra.mxu0 0
        %1662 = vmatprep.subr.bf16.mxu0 0
        %1663 = vmatpush1.bf16.msra.mxu0 0
        %1664 = vmatprep.subr.bf16.mxu0 0
        %1665 = vmatpush1.bf16.msra.mxu0 0
        %1666 = vmatprep.subr.bf16.mxu0 0
        %1667 = vmatpush1.bf16.msra.mxu0 0
        %1668 = vmatprep.subr.bf16.mxu0 0
        %1669 = vmatpush1.bf16.msra.mxu0 0
        %1670 = vmatprep.subr.bf16.mxu0 0
        %1671 = vmatpush1.bf16.msra.mxu0 0
        %1672 = vmatprep.mubr.bf16.mxu0 0
        %1673 = vmatmul.mubr.bf16.gmra.mrb[0].mxu0 %v1638
        %v1674 = vpop.f32.mrb[0].mxu0
        %v1675 = vadd.f32 0.0, %v1674
        %v1676 = vpop.f32.mrb[0].mxu0
        %v1677 = vpop.f32.mrb[0].mxu0
        %v1678 = vadd.f32 0.0, %v1677
        %v1679 = vpop.f32.mrb[0].mxu0
        %1680 = vdwg.mxu0
        %v1681 = vpack.c.bf16 %v1678, %v1675
        %s1682 = scalar_lea.vmem %s3, 64
        %v1683 = vld [vmem:[%s1682] sm:$0xf]
        %v1684 = vld [vmem:[%s1682 + $0x4] sm:$0xf]
        %v1685 = vld [vmem:[%s1682 + $0x8] sm:$0xf]
        %v1686 = vld [vmem:[%s1682 + $0xc] sm:$0xf]
        %v1687 = vld [vmem:[%s1682 + $0x10] sm:$0xf]
        %v1688 = vld [vmem:[%s1682 + $0x14] sm:$0xf]
        %v1689 = vld [vmem:[%s1682 + $0x18] sm:$0xf]
        %v1690 = vld [vmem:[%s1682 + $0x1c] sm:$0xf]
        %v1691 = vld [vmem:[%s1682 + $0x20] sm:$0xf]
        %v1692 = vld [vmem:[%s1682 + $0x24] sm:$0xf]
        %v1693 = vld [vmem:[%s1682 + $0x28] sm:$0xf]
        %v1694 = vld [vmem:[%s1682 + $0x2c] sm:$0xf]
        %v1695 = vld [vmem:[%s1682 + $0x30] sm:$0xf]
        %v1696 = vld [vmem:[%s1682 + $0x34] sm:$0xf]
        %v1697 = vld [vmem:[%s1682 + $0x38] sm:$0xf]
        %v1698 = vld [vmem:[%s1682 + $0x3c] sm:$0xf]
        %v1715 = vunpack.c.l.b16 %v1683
        %v1716 = vunpack.c.l.b16 %v1684
        %v1717 = vunpack.c.l.b16 %v1685
        %v1718 = vunpack.c.l.b16 %v1686
        %v1719 = vunpack.c.l.b16 %v1687
        %v1720 = vunpack.c.l.b16 %v1688
        %v1721 = vunpack.c.l.b16 %v1689
        %v1722 = vunpack.c.l.b16 %v1690
        %v1723 = vunpack.c.l.b16 %v1691
        %v1724 = vunpack.c.l.b16 %v1692
        %v1725 = vunpack.c.l.b16 %v1693
        %v1726 = vunpack.c.l.b16 %v1694
        %v1727 = vunpack.c.l.b16 %v1695
        %v1728 = vunpack.c.l.b16 %v1696
        %v1729 = vunpack.c.l.b16 %v1697
        %v1730 = vunpack.c.l.b16 %v1698
        %v1731 = vpack.c.b16 %v1716, %v1715
        %v1732 = vpack.c.b16 %v1718, %v1717
        %v1733 = vpack.c.b16 %v1720, %v1719
        %v1734 = vpack.c.b16 %v1722, %v1721
        %v1735 = vpack.c.b16 %v1724, %v1723
        %v1736 = vpack.c.b16 %v1726, %v1725
        %v1737 = vpack.c.b16 %v1728, %v1727
        %v1738 = vpack.c.b16 %v1730, %v1729
        %1747 = vmatprep.subr.bf16.mxu0 0
        %1748 = vmatpush1.bf16.msra.mxu0 %v1731
        %1749 = vmatprep.subr.bf16.mxu0 0
        %1750 = vmatpush1.bf16.msra.mxu0 %v1732
        %1751 = vmatprep.subr.bf16.mxu0 0
        %1752 = vmatpush1.bf16.msra.mxu0 %v1733
        %1753 = vmatprep.subr.bf16.mxu0 0
        %1754 = vmatpush1.bf16.msra.mxu0 %v1734
        %1755 = vmatprep.subr.bf16.mxu0 0
        %1756 = vmatpush1.bf16.msra.mxu0 %v1735
        %1757 = vmatprep.subr.bf16.mxu0 0
        %1758 = vmatpush1.bf16.msra.mxu0 %v1736
        %1759 = vmatprep.subr.bf16.mxu0 0
        %1760 = vmatpush1.bf16.msra.mxu0 %v1737
        %1761 = vmatprep.subr.bf16.mxu0 0
        %1762 = vmatpush1.bf16.msra.mxu0 %v1738
        %1763 = vmatprep.subr.bf16.mxu0 0
        %1764 = vmatpush1.bf16.msra.mxu0 0
        %1765 = vmatprep.subr.bf16.mxu0 0
        %1766 = vmatpush1.bf16.msra.mxu0 0
        %1767 = vmatprep.subr.bf16.mxu0 0
        %1768 = vmatpush1.bf16.msra.mxu0 0
        %1769 = vmatprep.subr.bf16.mxu0 0
        %1770 = vmatpush1.bf16.msra.mxu0 0
        %1771 = vmatprep.subr.bf16.mxu0 0
        %1772 = vmatpush1.bf16.msra.mxu0 0
        %1773 = vmatprep.subr.bf16.mxu0 0
        %1774 = vmatpush1.bf16.msra.mxu0 0
        %1775 = vmatprep.subr.bf16.mxu0 0
        %1776 = vmatpush1.bf16.msra.mxu0 0
        %1777 = vmatprep.subr.bf16.mxu0 0
        %1778 = vmatpush1.bf16.msra.mxu0 0
        %1779 = vmatprep.mubr.bf16.mxu0 0
        %1780 = vmatmul.mubr.bf16.gmra.mrb[0].mxu0 %v1681
        %v1781 = vpop.f32.mrb[0].mxu0
        %v1782 = vadd.f32 0.0, %v1781
        %v1783 = vpop.f32.mrb[0].mxu0
        %v1784 = vpop.f32.mrb[0].mxu0
        %v1785 = vadd.f32 0.0, %v1784
        %v1786 = vpop.f32.mrb[0].mxu0
        %1787 = vdwg.mxu0
        %v1804 = vunpack.c.l.b16 %v1622
        %v1805 = vunpack.c.l.b16 %v1623
        %v1806 = vunpack.c.l.b16 %v1624
        %v1807 = vunpack.c.l.b16 %v1625
        %v1808 = vunpack.c.l.b16 %v1626
        %v1809 = vunpack.c.l.b16 %v1627
        %v1810 = vunpack.c.l.b16 %v1628
        %v1811 = vunpack.c.l.b16 %v1629
        %v1812 = vunpack.c.l.b16 %v1630
        %v1813 = vunpack.c.l.b16 %v1631
        %v1814 = vunpack.c.l.b16 %v1632
        %v1815 = vunpack.c.l.b16 %v1633
        %v1816 = vunpack.c.l.b16 %v1634
        %v1817 = vunpack.c.l.b16 %v1635
        %v1818 = vunpack.c.l.b16 %v1636
        %v1819 = vunpack.c.l.b16 %v1637
        %v1820 = vpack.c.b16 %v1805, %v1804
        %v1821 = vpack.c.b16 %v1807, %v1806
        %v1822 = vpack.c.b16 %v1809, %v1808
        %v1823 = vpack.c.b16 %v1811, %v1810
        %v1824 = vpack.c.b16 %v1813, %v1812
        %v1825 = vpack.c.b16 %v1815, %v1814
        %v1826 = vpack.c.b16 %v1817, %v1816
        %v1827 = vpack.c.b16 %v1819, %v1818
        %1836 = vmatprep.subr.bf16.mxu0 0
        %1837 = vmatpush1.bf16.msra.mxu0 %v1820
        %1838 = vmatprep.subr.bf16.mxu0 0
        %1839 = vmatpush1.bf16.msra.mxu0 %v1821
        %1840 = vmatprep.subr.bf16.mxu0 0
        %1841 = vmatpush1.bf16.msra.mxu0 %v1822
        %1842 = vmatprep.subr.bf16.mxu0 0
        %1843 = vmatpush1.bf16.msra.mxu0 %v1823
        %1844 = vmatprep.subr.bf16.mxu0 0
        %1845 = vmatpush1.bf16.msra.mxu0 %v1824
        %1846 = vmatprep.subr.bf16.mxu0 0
        %1847 = vmatpush1.bf16.msra.mxu0 %v1825
        %1848 = vmatprep.subr.bf16.mxu0 0
        %1849 = vmatpush1.bf16.msra.mxu0 %v1826
        %1850 = vmatprep.subr.bf16.mxu0 0
        %1851 = vmatpush1.bf16.msra.mxu0 %v1827
        %1852 = vmatprep.subr.bf16.mxu0 0
        %1853 = vmatpush1.bf16.msra.mxu0 0
        %1854 = vmatprep.subr.bf16.mxu0 0
        %1855 = vmatpush1.bf16.msra.mxu0 0
        %1856 = vmatprep.subr.bf16.mxu0 0
        %1857 = vmatpush1.bf16.msra.mxu0 0
        %1858 = vmatprep.subr.bf16.mxu0 0
        %1859 = vmatpush1.bf16.msra.mxu0 0
        %1860 = vmatprep.subr.bf16.mxu0 0
        %1861 = vmatpush1.bf16.msra.mxu0 0
        %1862 = vmatprep.subr.bf16.mxu0 0
        %1863 = vmatpush1.bf16.msra.mxu0 0
        %1864 = vmatprep.subr.bf16.mxu0 0
        %1865 = vmatpush1.bf16.msra.mxu0 0
        %1866 = vmatprep.subr.bf16.mxu0 0
        %1867 = vmatpush1.bf16.msra.mxu0 0
        %1868 = vmatprep.mubr.bf16.mxu0 0
        %1869 = vmatmul.mubr.bf16.gmra.mrb[0].mxu0 %v1621
        %v1870 = vpop.f32.mrb[0].mxu0
        %v1871 = vadd.f32 %v1782, %v1870
        %v1872 = vpop.f32.mrb[0].mxu0
        %v1873 = vpop.f32.mrb[0].mxu0
        %v1874 = vadd.f32 %v1785, %v1873
        %v1875 = vpop.f32.mrb[0].mxu0
        %1876 = vdwg.mxu0
        %v1877 = vsel %vm1577, %v1102, 0
        %1879 = vmatprep.subr.bf16.mxu0 0
        %1880 = vmatpush1.bf16.msra.mxu0 %v1575
        %1881 = vmatprep.subr.bf16.mxu0 0
        %1882 = vmatpush1.bf16.msra.mxu0 %v1576
        %1883 = vmatprep.subr.bf16.mxu0 0
        %1884 = vmatpush1.bf16.msra.mxu0 0
        %1885 = vmatprep.subr.bf16.mxu0 0
        %1886 = vmatpush1.bf16.msra.mxu0 0
        %1887 = vmatprep.subr.bf16.mxu0 0
        %1888 = vmatpush1.bf16.msra.mxu0 0
        %1889 = vmatprep.subr.bf16.mxu0 0
        %1890 = vmatpush1.bf16.msra.mxu0 0
        %1891 = vmatprep.subr.bf16.mxu0 0
        %1892 = vmatpush1.bf16.msra.mxu0 0
        %1893 = vmatprep.subr.bf16.mxu0 0
        %1894 = vmatpush1.bf16.msra.mxu0 0
        %1895 = vmatprep.subr.bf16.mxu0 0
        %1896 = vmatpush1.bf16.msra.mxu0 0
        %1897 = vmatprep.subr.bf16.mxu0 0
        %1898 = vmatpush1.bf16.msra.mxu0 0
        %1899 = vmatprep.subr.bf16.mxu0 0
        %1900 = vmatpush1.bf16.msra.mxu0 0
        %1901 = vmatprep.subr.bf16.mxu0 0
        %1902 = vmatpush1.bf16.msra.mxu0 0
        %1903 = vmatprep.subr.bf16.mxu0 0
        %1904 = vmatpush1.bf16.msra.mxu0 0
        %1905 = vmatprep.subr.bf16.mxu0 0
        %1906 = vmatpush1.bf16.msra.mxu0 0
        %1907 = vmatprep.subr.bf16.mxu0 0
        %1908 = vmatpush1.bf16.msra.mxu0 0
        %1909 = vmatprep.subr.bf16.mxu0 0
        %1910 = vmatpush1.bf16.msra.mxu0 0
        %1911 = vmatprep.mubr.bf16.mxu0 0
        %1912 = vmatmul.mubr.bf16.gmra.mrb[0].mxu0 %v1877
        %v1913 = vpop.f32.mrb[0].mxu0
        %v1914 = vadd.f32 0.0, %v1913
        %v1915 = vpop.f32.mrb[0].mxu0
        %v1916 = vpop.f32.mrb[0].mxu0
        %v1917 = vadd.f32 0.0, %v1916
        %v1918 = vpop.f32.mrb[0].mxu0
        %1919 = vdwg.mxu0
        %v1920 = vpack.c.bf16 %v1917, %v1914
        %s1921 = scalar_lea.vmem %s3, 128
        %v1922 = vld [vmem:[%s1921] sm:$0xf]
        %v1923 = vld [vmem:[%s1921 + $0x4] sm:$0xf]
        %v1924 = vld [vmem:[%s1921 + $0x8] sm:$0xf]
        %v1925 = vld [vmem:[%s1921 + $0xc] sm:$0xf]
        %v1926 = vld [vmem:[%s1921 + $0x10] sm:$0xf]
        %v1927 = vld [vmem:[%s1921 + $0x14] sm:$0xf]
        %v1928 = vld [vmem:[%s1921 + $0x18] sm:$0xf]
        %v1929 = vld [vmem:[%s1921 + $0x1c] sm:$0xf]
        %v1930 = vld [vmem:[%s1921 + $0x20] sm:$0xf]
        %v1931 = vld [vmem:[%s1921 + $0x24] sm:$0xf]
        %v1932 = vld [vmem:[%s1921 + $0x28] sm:$0xf]
        %v1933 = vld [vmem:[%s1921 + $0x2c] sm:$0xf]
        %v1934 = vld [vmem:[%s1921 + $0x30] sm:$0xf]
        %v1935 = vld [vmem:[%s1921 + $0x34] sm:$0xf]
        %v1936 = vld [vmem:[%s1921 + $0x38] sm:$0xf]
        %v1937 = vld [vmem:[%s1921 + $0x3c] sm:$0xf]
        %v1954 = vunpack.c.l.b16 %v1922
        %v1955 = vunpack.c.l.b16 %v1923
        %v1956 = vunpack.c.l.b16 %v1924
        %v1957 = vunpack.c.l.b16 %v1925
        %v1958 = vunpack.c.l.b16 %v1926
        %v1959 = vunpack.c.l.b16 %v1927
        %v1960 = vunpack.c.l.b16 %v1928
        %v1961 = vunpack.c.l.b16 %v1929
        %v1962 = vunpack.c.l.b16 %v1930
        %v1963 = vunpack.c.l.b16 %v1931
        %v1964 = vunpack.c.l.b16 %v1932
        %v1965 = vunpack.c.l.b16 %v1933
        %v1966 = vunpack.c.l.b16 %v1934
        %v1967 = vunpack.c.l.b16 %v1935
        %v1968 = vunpack.c.l.b16 %v1936
        %v1969 = vunpack.c.l.b16 %v1937
        %v1970 = vpack.c.b16 %v1955, %v1954
        %v1971 = vpack.c.b16 %v1957, %v1956
        %v1972 = vpack.c.b16 %v1959, %v1958
        %v1973 = vpack.c.b16 %v1961, %v1960
        %v1974 = vpack.c.b16 %v1963, %v1962
        %v1975 = vpack.c.b16 %v1965, %v1964
        %v1976 = vpack.c.b16 %v1967, %v1966
        %v1977 = vpack.c.b16 %v1969, %v1968
        %1986 = vmatprep.subr.bf16.mxu0 0
        %1987 = vmatpush1.bf16.msra.mxu0 %v1970
        %1988 = vmatprep.subr.bf16.mxu0 0
        %1989 = vmatpush1.bf16.msra.mxu0 %v1971
        %1990 = vmatprep.subr.bf16.mxu0 0
        %1991 = vmatpush1.bf16.msra.mxu0 %v1972
        %1992 = vmatprep.subr.bf16.mxu0 0
        %1993 = vmatpush1.bf16.msra.mxu0 %v1973
        %1994 = vmatprep.subr.bf16.mxu0 0
        %1995 = vmatpush1.bf16.msra.mxu0 %v1974
        %1996 = vmatprep.subr.bf16.mxu0 0
        %1997 = vmatpush1.bf16.msra.mxu0 %v1975
        %1998 = vmatprep.subr.bf16.mxu0 0
        %1999 = vmatpush1.bf16.msra.mxu0 %v1976
        %2000 = vmatprep.subr.bf16.mxu0 0
        %2001 = vmatpush1.bf16.msra.mxu0 %v1977
        %2002 = vmatprep.subr.bf16.mxu0 0
        %2003 = vmatpush1.bf16.msra.mxu0 0
        %2004 = vmatprep.subr.bf16.mxu0 0
        %2005 = vmatpush1.bf16.msra.mxu0 0
        %2006 = vmatprep.subr.bf16.mxu0 0
        %2007 = vmatpush1.bf16.msra.mxu0 0
        %2008 = vmatprep.subr.bf16.mxu0 0
        %2009 = vmatpush1.bf16.msra.mxu0 0
        %2010 = vmatprep.subr.bf16.mxu0 0
        %2011 = vmatpush1.bf16.msra.mxu0 0
        %2012 = vmatprep.subr.bf16.mxu0 0
        %2013 = vmatpush1.bf16.msra.mxu0 0
        %2014 = vmatprep.subr.bf16.mxu0 0
        %2015 = vmatpush1.bf16.msra.mxu0 0
        %2016 = vmatprep.subr.bf16.mxu0 0
        %2017 = vmatpush1.bf16.msra.mxu0 0
        %2018 = vmatprep.mubr.bf16.mxu0 0
        %2019 = vmatmul.mubr.bf16.gmra.mrb[0].mxu0 %v1920
        %v2020 = vpop.f32.mrb[0].mxu0
        %v2021 = vadd.f32 0.0, %v2020
        %v2022 = vpop.f32.mrb[0].mxu0
        %v2023 = vpop.f32.mrb[0].mxu0
        %v2024 = vadd.f32 0.0, %v2023
        %v2025 = vpop.f32.mrb[0].mxu0
        %2026 = vdwg.mxu0
        %v2027 = vadd.f32 %v1871, %v2021
        %v2028 = vadd.f32 %v1874, %v2024
        %v2029 = vsel %vm1577, %v1335, 0
        %2031 = vmatprep.subr.bf16.mxu0 0
        %2032 = vmatpush1.bf16.msra.mxu0 %v1575
        %2033 = vmatprep.subr.bf16.mxu0 0
        %2034 = vmatpush1.bf16.msra.mxu0 %v1576
        %2035 = vmatprep.subr.bf16.mxu0 0
        %2036 = vmatpush1.bf16.msra.mxu0 0
        %2037 = vmatprep.subr.bf16.mxu0 0
        %2038 = vmatpush1.bf16.msra.mxu0 0
        %2039 = vmatprep.subr.bf16.mxu0 0
        %2040 = vmatpush1.bf16.msra.mxu0 0
        %2041 = vmatprep.subr.bf16.mxu0 0
        %2042 = vmatpush1.bf16.msra.mxu0 0
        %2043 = vmatprep.subr.bf16.mxu0 0
        %2044 = vmatpush1.bf16.msra.mxu0 0
        %2045 = vmatprep.subr.bf16.mxu0 0
        %2046 = vmatpush1.bf16.msra.mxu0 0
        %2047 = vmatprep.subr.bf16.mxu0 0
        %2048 = vmatpush1.bf16.msra.mxu0 0
        %2049 = vmatprep.subr.bf16.mxu0 0
        %2050 = vmatpush1.bf16.msra.mxu0 0
        %2051 = vmatprep.subr.bf16.mxu0 0
        %2052 = vmatpush1.bf16.msra.mxu0 0
        %2053 = vmatprep.subr.bf16.mxu0 0
        %2054 = vmatpush1.bf16.msra.mxu0 0
        %2055 = vmatprep.subr.bf16.mxu0 0
        %2056 = vmatpush1.bf16.msra.mxu0 0
        %2057 = vmatprep.subr.bf16.mxu0 0
        %2058 = vmatpush1.bf16.msra.mxu0 0
        %2059 = vmatprep.subr.bf16.mxu0 0
        %2060 = vmatpush1.bf16.msra.mxu0 0
        %2061 = vmatprep.subr.bf16.mxu0 0
        %2062 = vmatpush1.bf16.msra.mxu0 0
        %2063 = vmatprep.mubr.bf16.mxu0 0
        %2064 = vmatmul.mubr.bf16.gmra.mrb[0].mxu0 %v2029
        %v2065 = vpop.f32.mrb[0].mxu0
        %v2066 = vadd.f32 0.0, %v2065
        %v2067 = vpop.f32.mrb[0].mxu0
        %v2068 = vpop.f32.mrb[0].mxu0
        %v2069 = vadd.f32 0.0, %v2068
        %v2070 = vpop.f32.mrb[0].mxu0
        %2071 = vdwg.mxu0
        %v2072 = vpack.c.bf16 %v2069, %v2066
        %s2073 = scalar_lea.vmem %s3, 192
        %v2074 = vld [vmem:[%s2073] sm:$0xf]
        %v2075 = vld [vmem:[%s2073 + $0x4] sm:$0xf]
        %v2076 = vld [vmem:[%s2073 + $0x8] sm:$0xf]
        %v2077 = vld [vmem:[%s2073 + $0xc] sm:$0xf]
        %v2078 = vld [vmem:[%s2073 + $0x10] sm:$0xf]
        %v2079 = vld [vmem:[%s2073 + $0x14] sm:$0xf]
        %v2080 = vld [vmem:[%s2073 + $0x18] sm:$0xf]
        %v2081 = vld [vmem:[%s2073 + $0x1c] sm:$0xf]
        %v2082 = vld [vmem:[%s2073 + $0x20] sm:$0xf]
        %v2083 = vld [vmem:[%s2073 + $0x24] sm:$0xf]
        %v2084 = vld [vmem:[%s2073 + $0x28] sm:$0xf]
        %v2085 = vld [vmem:[%s2073 + $0x2c] sm:$0xf]
        %v2086 = vld [vmem:[%s2073 + $0x30] sm:$0xf]
        %v2087 = vld [vmem:[%s2073 + $0x34] sm:$0xf]
        %v2088 = vld [vmem:[%s2073 + $0x38] sm:$0xf]
        %v2089 = vld [vmem:[%s2073 + $0x3c] sm:$0xf]
        %v2106 = vunpack.c.l.b16 %v2074
        %v2107 = vunpack.c.l.b16 %v2075
        %v2108 = vunpack.c.l.b16 %v2076
        %v2109 = vunpack.c.l.b16 %v2077
        %v2110 = vunpack.c.l.b16 %v2078
        %v2111 = vunpack.c.l.b16 %v2079
        %v2112 = vunpack.c.l.b16 %v2080
        %v2113 = vunpack.c.l.b16 %v2081
        %v2114 = vunpack.c.l.b16 %v2082
        %v2115 = vunpack.c.l.b16 %v2083
        %v2116 = vunpack.c.l.b16 %v2084
        %v2117 = vunpack.c.l.b16 %v2085
        %v2118 = vunpack.c.l.b16 %v2086
        %v2119 = vunpack.c.l.b16 %v2087
        %v2120 = vunpack.c.l.b16 %v2088
        %v2121 = vunpack.c.l.b16 %v2089
        %v2122 = vpack.c.b16 %v2107, %v2106
        %v2123 = vpack.c.b16 %v2109, %v2108
        %v2124 = vpack.c.b16 %v2111, %v2110
        %v2125 = vpack.c.b16 %v2113, %v2112
        %v2126 = vpack.c.b16 %v2115, %v2114
        %v2127 = vpack.c.b16 %v2117, %v2116
        %v2128 = vpack.c.b16 %v2119, %v2118
        %v2129 = vpack.c.b16 %v2121, %v2120
        %2138 = vmatprep.subr.bf16.mxu0 0
        %2139 = vmatpush1.bf16.msra.mxu0 %v2122
        %2140 = vmatprep.subr.bf16.mxu0 0
        %2141 = vmatpush1.bf16.msra.mxu0 %v2123
        %2142 = vmatprep.subr.bf16.mxu0 0
        %2143 = vmatpush1.bf16.msra.mxu0 %v2124
        %2144 = vmatprep.subr.bf16.mxu0 0
        %2145 = vmatpush1.bf16.msra.mxu0 %v2125
        %2146 = vmatprep.subr.bf16.mxu0 0
        %2147 = vmatpush1.bf16.msra.mxu0 %v2126
        %2148 = vmatprep.subr.bf16.mxu0 0
        %2149 = vmatpush1.bf16.msra.mxu0 %v2127
        %2150 = vmatprep.subr.bf16.mxu0 0
        %2151 = vmatpush1.bf16.msra.mxu0 %v2128
        %2152 = vmatprep.subr.bf16.mxu0 0
        %2153 = vmatpush1.bf16.msra.mxu0 %v2129
        %2154 = vmatprep.subr.bf16.mxu0 0
        %2155 = vmatpush1.bf16.msra.mxu0 0
        %2156 = vmatprep.subr.bf16.mxu0 0
        %2157 = vmatpush1.bf16.msra.mxu0 0
        %2158 = vmatprep.subr.bf16.mxu0 0
        %2159 = vmatpush1.bf16.msra.mxu0 0
        %2160 = vmatprep.subr.bf16.mxu0 0
        %2161 = vmatpush1.bf16.msra.mxu0 0
        %2162 = vmatprep.subr.bf16.mxu0 0
        %2163 = vmatpush1.bf16.msra.mxu0 0
        %2164 = vmatprep.subr.bf16.mxu0 0
        %2165 = vmatpush1.bf16.msra.mxu0 0
        %2166 = vmatprep.subr.bf16.mxu0 0
        %2167 = vmatpush1.bf16.msra.mxu0 0
        %2168 = vmatprep.subr.bf16.mxu0 0
        %2169 = vmatpush1.bf16.msra.mxu0 0
        %2170 = vmatprep.mubr.bf16.mxu0 0
        %2171 = vmatmul.mubr.bf16.gmra.mrb[0].mxu0 %v2072
        %v2172 = vpop.f32.mrb[0].mxu0
        %v2173 = vadd.f32 0.0, %v2172
        %v2174 = vpop.f32.mrb[0].mxu0
        %v2175 = vpop.f32.mrb[0].mxu0
        %v2176 = vadd.f32 0.0, %v2175
        %v2177 = vpop.f32.mrb[0].mxu0
        %2178 = vdwg.mxu0
        %v2179 = vadd.f32 %v2027, %v2173
        %v2180 = vadd.f32 %v2028, %v2176
        %v2181 = vld [vmem:[%s4] sm:$0x1]
        %v2183 = vlaneseq
        %v2184 = vshrl.u32 %v2183, 7
        %v2185 = vsub.s32 0, %v2184
        %v2186 = vrot.slane %v2181, %v2185
        %v2188 = vadd.f32 %v2179, %v2186
        %v2189 = vadd.f32 %v2180, %v2186
        %v2190 = vmul.f32 %v2188, 0.2
        %v2191 = vmul.f32 %v2189, 0.2
        %v2192 = vmax.f32 %v2188, %v2190
        %v2193 = vmax.f32 %v2189, %v2191
        %v2194 = vpack.c.bf16 %v2193, %v2192
        %v2195 = vpack.c.bf16 %v604, %v604
        %vm2196 = vcmask 130048
        %v2198 = vsel %vm2196, %v2195, 0
        %2200 = vmatprep.subr.bf16.mxu0 0
        %2201 = vmatpush1.bf16.msra.mxu0 %v2194
        %2202 = vmatprep.subr.bf16.mxu0 0
        %2203 = vmatpush1.bf16.msra.mxu0 0
        %2204 = vmatprep.subr.bf16.mxu0 0
        %2205 = vmatpush1.bf16.msra.mxu0 0
        %2206 = vmatprep.subr.bf16.mxu0 0
        %2207 = vmatpush1.bf16.msra.mxu0 0
        %2208 = vmatprep.subr.bf16.mxu0 0
        %2209 = vmatpush1.bf16.msra.mxu0 0
        %2210 = vmatprep.subr.bf16.mxu0 0
        %2211 = vmatpush1.bf16.msra.mxu0 0
        %2212 = vmatprep.subr.bf16.mxu0 0
        %2213 = vmatpush1.bf16.msra.mxu0 0
        %2214 = vmatprep.subr.bf16.mxu0 0
        %2215 = vmatpush1.bf16.msra.mxu0 0
        %2216 = vmatprep.subr.bf16.mxu0 0
        %2217 = vmatpush1.bf16.msra.mxu0 0
        %2218 = vmatprep.subr.bf16.mxu0 0
        %2219 = vmatpush1.bf16.msra.mxu0 0
        %2220 = vmatprep.subr.bf16.mxu0 0
        %2221 = vmatpush1.bf16.msra.mxu0 0
        %2222 = vmatprep.subr.bf16.mxu0 0
        %2223 = vmatpush1.bf16.msra.mxu0 0
        %2224 = vmatprep.subr.bf16.mxu0 0
        %2225 = vmatpush1.bf16.msra.mxu0 0
        %2226 = vmatprep.subr.bf16.mxu0 0
        %2227 = vmatpush1.bf16.msra.mxu0 0
        %2228 = vmatprep.subr.bf16.mxu0 0
        %2229 = vmatpush1.bf16.msra.mxu0 0
        %2230 = vmatprep.subr.bf16.mxu0 0
        %2231 = vmatpush1.bf16.msra.mxu0 0
        %2232 = vmatprep.mubr.bf16.mxu0 0
        %2233 = vmatmul.mubr.bf16.gmra.mrb[0].mxu0 %v2198
        %v2234 = vpop.f32.mrb[0].mxu0
        %v2235 = vadd.f32 0.0, %v2234
        %v2236 = vpop.f32.mrb[0].mxu0
        %v2237 = vpop.f32.mrb[0].mxu0
        %v2238 = vpop.f32.mrb[0].mxu0
        %2239 = vdwg.mxu0
        %v2240 = vpack.c.bf16 %v2235, %v2235
        %v2241 = vld [vmem:[#allocation2] sm:$0xf]
        %v2242 = vld [vmem:[#allocation2 + $0x4] sm:$0xf]
        %v2243 = vld [vmem:[#allocation2 + $0x8] sm:$0xf]
        %v2244 = vld [vmem:[#allocation2 + $0xc] sm:$0xf]
        %v2245 = vld [vmem:[#allocation2 + $0x10] sm:$0xf]
        %v2246 = vld [vmem:[#allocation2 + $0x14] sm:$0xf]
        %v2247 = vld [vmem:[#allocation2 + $0x18] sm:$0xf]
        %v2248 = vld [vmem:[#allocation2 + $0x1c] sm:$0xf]
        %v2249 = vld [vmem:[#allocation2 + $0x20] sm:$0xf]
        %v2250 = vld [vmem:[#allocation2 + $0x24] sm:$0xf]
        %v2251 = vld [vmem:[#allocation2 + $0x28] sm:$0xf]
        %v2252 = vld [vmem:[#allocation2 + $0x2c] sm:$0xf]
        %v2253 = vld [vmem:[#allocation2 + $0x30] sm:$0xf]
        %v2254 = vld [vmem:[#allocation2 + $0x34] sm:$0xf]
        %v2255 = vld [vmem:[#allocation2 + $0x38] sm:$0xf]
        %v2256 = vld [vmem:[#allocation2 + $0x3c] sm:$0xf]
        %v2257 = vpack.c.bf16 %v742, %v742
        %v2259 = vsel %vm2196, %v2257, 0
        %2261 = vmatprep.subr.bf16.mxu0 0
        %2262 = vmatpush1.bf16.msra.mxu0 %v2194
        %2263 = vmatprep.subr.bf16.mxu0 0
        %2264 = vmatpush1.bf16.msra.mxu0 0
        %2265 = vmatprep.subr.bf16.mxu0 0
        %2266 = vmatpush1.bf16.msra.mxu0 0
        %2267 = vmatprep.subr.bf16.mxu0 0
        %2268 = vmatpush1.bf16.msra.mxu0 0
        %2269 = vmatprep.subr.bf16.mxu0 0
        %2270 = vmatpush1.bf16.msra.mxu0 0
        %2271 = vmatprep.subr.bf16.mxu0 0
        %2272 = vmatpush1.bf16.msra.mxu0 0
        %2273 = vmatprep.subr.bf16.mxu0 0
        %2274 = vmatpush1.bf16.msra.mxu0 0
        %2275 = vmatprep.subr.bf16.mxu0 0
        %2276 = vmatpush1.bf16.msra.mxu0 0
        %2277 = vmatprep.subr.bf16.mxu0 0
        %2278 = vmatpush1.bf16.msra.mxu0 0
        %2279 = vmatprep.subr.bf16.mxu0 0
        %2280 = vmatpush1.bf16.msra.mxu0 0
        %2281 = vmatprep.subr.bf16.mxu0 0
        %2282 = vmatpush1.bf16.msra.mxu0 0
        %2283 = vmatprep.subr.bf16.mxu0 0
        %2284 = vmatpush1.bf16.msra.mxu0 0
        %2285 = vmatprep.subr.bf16.mxu0 0
        %2286 = vmatpush1.bf16.msra.mxu0 0
        %2287 = vmatprep.subr.bf16.mxu0 0
        %2288 = vmatpush1.bf16.msra.mxu0 0
        %2289 = vmatprep.subr.bf16.mxu0 0
        %2290 = vmatpush1.bf16.msra.mxu0 0
        %2291 = vmatprep.subr.bf16.mxu0 0
        %2292 = vmatpush1.bf16.msra.mxu0 0
        %2293 = vmatprep.mubr.bf16.mxu0 0
        %2294 = vmatmul.mubr.bf16.gmra.mrb[0].mxu0 %v2259
        %v2295 = vpop.f32.mrb[0].mxu0
        %v2296 = vadd.f32 0.0, %v2295
        %v2297 = vpop.f32.mrb[0].mxu0
        %v2298 = vpop.f32.mrb[0].mxu0
        %v2299 = vpop.f32.mrb[0].mxu0
        %2300 = vdwg.mxu0
        %v2301 = vpack.c.bf16 %v2296, %v2296
        %s2302 = scalar_lea.vmem [#allocation2], 64
        %v2303 = vld [vmem:[%s2302] sm:$0xf]
        %v2304 = vld [vmem:[%s2302 + $0x4] sm:$0xf]
        %v2305 = vld [vmem:[%s2302 + $0x8] sm:$0xf]
        %v2306 = vld [vmem:[%s2302 + $0xc] sm:$0xf]
        %v2307 = vld [vmem:[%s2302 + $0x10] sm:$0xf]
        %v2308 = vld [vmem:[%s2302 + $0x14] sm:$0xf]
        %v2309 = vld [vmem:[%s2302 + $0x18] sm:$0xf]
        %v2310 = vld [vmem:[%s2302 + $0x1c] sm:$0xf]
        %v2311 = vld [vmem:[%s2302 + $0x20] sm:$0xf]
        %v2312 = vld [vmem:[%s2302 + $0x24] sm:$0xf]
        %v2313 = vld [vmem:[%s2302 + $0x28] sm:$0xf]
        %v2314 = vld [vmem:[%s2302 + $0x2c] sm:$0xf]
        %v2315 = vld [vmem:[%s2302 + $0x30] sm:$0xf]
        %v2316 = vld [vmem:[%s2302 + $0x34] sm:$0xf]
        %v2317 = vld [vmem:[%s2302 + $0x38] sm:$0xf]
        %v2318 = vld [vmem:[%s2302 + $0x3c] sm:$0xf]
        %v2335 = vunpack.c.l.b16 %v2303
        %v2336 = vunpack.c.l.b16 %v2304
        %v2337 = vunpack.c.l.b16 %v2305
        %v2338 = vunpack.c.l.b16 %v2306
        %v2339 = vunpack.c.l.b16 %v2307
        %v2340 = vunpack.c.l.b16 %v2308
        %v2341 = vunpack.c.l.b16 %v2309
        %v2342 = vunpack.c.l.b16 %v2310
        %v2343 = vunpack.c.l.b16 %v2311
        %v2344 = vunpack.c.l.b16 %v2312
        %v2345 = vunpack.c.l.b16 %v2313
        %v2346 = vunpack.c.l.b16 %v2314
        %v2347 = vunpack.c.l.b16 %v2315
        %v2348 = vunpack.c.l.b16 %v2316
        %v2349 = vunpack.c.l.b16 %v2317
        %v2350 = vunpack.c.l.b16 %v2318
        %v2351 = vpack.c.b16 %v2336, %v2335
        %v2352 = vpack.c.b16 %v2338, %v2337
        %v2353 = vpack.c.b16 %v2340, %v2339
        %v2354 = vpack.c.b16 %v2342, %v2341
        %v2355 = vpack.c.b16 %v2344, %v2343
        %v2356 = vpack.c.b16 %v2346, %v2345
        %v2357 = vpack.c.b16 %v2348, %v2347
        %v2358 = vpack.c.b16 %v2350, %v2349
        %2367 = vmatprep.subr.bf16.mxu0 0
        %2368 = vmatpush1.bf16.msra.mxu0 %v2351
        %2369 = vmatprep.subr.bf16.mxu0 0
        %2370 = vmatpush1.bf16.msra.mxu0 %v2352
        %2371 = vmatprep.subr.bf16.mxu0 0
        %2372 = vmatpush1.bf16.msra.mxu0 %v2353
        %2373 = vmatprep.subr.bf16.mxu0 0
        %2374 = vmatpush1.bf16.msra.mxu0 %v2354
        %2375 = vmatprep.subr.bf16.mxu0 0
        %2376 = vmatpush1.bf16.msra.mxu0 %v2355
        %2377 = vmatprep.subr.bf16.mxu0 0
        %2378 = vmatpush1.bf16.msra.mxu0 %v2356
        %2379 = vmatprep.subr.bf16.mxu0 0
        %2380 = vmatpush1.bf16.msra.mxu0 %v2357
        %2381 = vmatprep.subr.bf16.mxu0 0
        %2382 = vmatpush1.bf16.msra.mxu0 %v2358
        %2383 = vmatprep.subr.bf16.mxu0 0
        %2384 = vmatpush1.bf16.msra.mxu0 0
        %2385 = vmatprep.subr.bf16.mxu0 0
        %2386 = vmatpush1.bf16.msra.mxu0 0
        %2387 = vmatprep.subr.bf16.mxu0 0
        %2388 = vmatpush1.bf16.msra.mxu0 0
        %2389 = vmatprep.subr.bf16.mxu0 0
        %2390 = vmatpush1.bf16.msra.mxu0 0
        %2391 = vmatprep.subr.bf16.mxu0 0
        %2392 = vmatpush1.bf16.msra.mxu0 0
        %2393 = vmatprep.subr.bf16.mxu0 0
        %2394 = vmatpush1.bf16.msra.mxu0 0
        %2395 = vmatprep.subr.bf16.mxu0 0
        %2396 = vmatpush1.bf16.msra.mxu0 0
        %2397 = vmatprep.subr.bf16.mxu0 0
        %2398 = vmatpush1.bf16.msra.mxu0 0
        %2399 = vmatprep.mubr.bf16.mxu0 0
        %2400 = vmatmul.mubr.bf16.gmra.mrb[0].mxu0 %v2301
        %v2401 = vpop.f32.mrb[0].mxu0
        %v2402 = vadd.f32 0.0, %v2401
        %v2403 = vpop.f32.mrb[0].mxu0
        %v2404 = vpop.f32.mrb[0].mxu0
        %v2405 = vpop.f32.mrb[0].mxu0
        %2406 = vdwg.mxu0
        %v2423 = vunpack.c.l.b16 %v2241
        %v2424 = vunpack.c.l.b16 %v2242
        %v2425 = vunpack.c.l.b16 %v2243
        %v2426 = vunpack.c.l.b16 %v2244
        %v2427 = vunpack.c.l.b16 %v2245
        %v2428 = vunpack.c.l.b16 %v2246
        %v2429 = vunpack.c.l.b16 %v2247
        %v2430 = vunpack.c.l.b16 %v2248
        %v2431 = vunpack.c.l.b16 %v2249
        %v2432 = vunpack.c.l.b16 %v2250
        %v2433 = vunpack.c.l.b16 %v2251
        %v2434 = vunpack.c.l.b16 %v2252
        %v2435 = vunpack.c.l.b16 %v2253
        %v2436 = vunpack.c.l.b16 %v2254
        %v2437 = vunpack.c.l.b16 %v2255
        %v2438 = vunpack.c.l.b16 %v2256
        %v2439 = vpack.c.b16 %v2424, %v2423
        %v2440 = vpack.c.b16 %v2426, %v2425
        %v2441 = vpack.c.b16 %v2428, %v2427
        %v2442 = vpack.c.b16 %v2430, %v2429
        %v2443 = vpack.c.b16 %v2432, %v2431
        %v2444 = vpack.c.b16 %v2434, %v2433
        %v2445 = vpack.c.b16 %v2436, %v2435
        %v2446 = vpack.c.b16 %v2438, %v2437
        %2455 = vmatprep.subr.bf16.mxu0 0
        %2456 = vmatpush1.bf16.msra.mxu0 %v2439
        %2457 = vmatprep.subr.bf16.mxu0 0
        %2458 = vmatpush1.bf16.msra.mxu0 %v2440
        %2459 = vmatprep.subr.bf16.mxu0 0
        %2460 = vmatpush1.bf16.msra.mxu0 %v2441
        %2461 = vmatprep.subr.bf16.mxu0 0
        %2462 = vmatpush1.bf16.msra.mxu0 %v2442
        %2463 = vmatprep.subr.bf16.mxu0 0
        %2464 = vmatpush1.bf16.msra.mxu0 %v2443
        %2465 = vmatprep.subr.bf16.mxu0 0
        %2466 = vmatpush1.bf16.msra.mxu0 %v2444
        %2467 = vmatprep.subr.bf16.mxu0 0
        %2468 = vmatpush1.bf16.msra.mxu0 %v2445
        %2469 = vmatprep.subr.bf16.mxu0 0
        %2470 = vmatpush1.bf16.msra.mxu0 %v2446
        %2471 = vmatprep.subr.bf16.mxu0 0
        %2472 = vmatpush1.bf16.msra.mxu0 0
        %2473 = vmatprep.subr.bf16.mxu0 0
        %2474 = vmatpush1.bf16.msra.mxu0 0
        %2475 = vmatprep.subr.bf16.mxu0 0
        %2476 = vmatpush1.bf16.msra.mxu0 0
        %2477 = vmatprep.subr.bf16.mxu0 0
        %2478 = vmatpush1.bf16.msra.mxu0 0
        %2479 = vmatprep.subr.bf16.mxu0 0
        %2480 = vmatpush1.bf16.msra.mxu0 0
        %2481 = vmatprep.subr.bf16.mxu0 0
        %2482 = vmatpush1.bf16.msra.mxu0 0
        %2483 = vmatprep.subr.bf16.mxu0 0
        %2484 = vmatpush1.bf16.msra.mxu0 0
        %2485 = vmatprep.subr.bf16.mxu0 0
        %2486 = vmatpush1.bf16.msra.mxu0 0
        %2487 = vmatprep.mubr.bf16.mxu0 0
        %2488 = vmatmul.mubr.bf16.gmra.mrb[0].mxu0 %v2240
        %v2489 = vpop.f32.mrb[0].mxu0
        %v2490 = vadd.f32 %v2402, %v2489
        %v2491 = vpop.f32.mrb[0].mxu0
        %v2492 = vpop.f32.mrb[0].mxu0
        %v2493 = vpop.f32.mrb[0].mxu0
        %2494 = vdwg.mxu0
        %v2495 = vpack.c.bf16 %v1098, %v1098
        %v2497 = vsel %vm2196, %v2495, 0
        %2499 = vmatprep.subr.bf16.mxu0 0
        %2500 = vmatpush1.bf16.msra.mxu0 %v2194
        %2501 = vmatprep.subr.bf16.mxu0 0
        %2502 = vmatpush1.bf16.msra.mxu0 0
        %2503 = vmatprep.subr.bf16.mxu0 0
        %2504 = vmatpush1.bf16.msra.mxu0 0
        %2505 = vmatprep.subr.bf16.mxu0 0
        %2506 = vmatpush1.bf16.msra.mxu0 0
        %2507 = vmatprep.subr.bf16.mxu0 0
        %2508 = vmatpush1.bf16.msra.mxu0 0
        %2509 = vmatprep.subr.bf16.mxu0 0
        %2510 = vmatpush1.bf16.msra.mxu0 0
        %2511 = vmatprep.subr.bf16.mxu0 0
        %2512 = vmatpush1.bf16.msra.mxu0 0
        %2513 = vmatprep.subr.bf16.mxu0 0
        %2514 = vmatpush1.bf16.msra.mxu0 0
        %2515 = vmatprep.subr.bf16.mxu0 0
        %2516 = vmatpush1.bf16.msra.mxu0 0
        %2517 = vmatprep.subr.bf16.mxu0 0
        %2518 = vmatpush1.bf16.msra.mxu0 0
        %2519 = vmatprep.subr.bf16.mxu0 0
        %2520 = vmatpush1.bf16.msra.mxu0 0
        %2521 = vmatprep.subr.bf16.mxu0 0
        %2522 = vmatpush1.bf16.msra.mxu0 0
        %2523 = vmatprep.subr.bf16.mxu0 0
        %2524 = vmatpush1.bf16.msra.mxu0 0
        %2525 = vmatprep.subr.bf16.mxu0 0
        %2526 = vmatpush1.bf16.msra.mxu0 0
        %2527 = vmatprep.subr.bf16.mxu0 0
        %2528 = vmatpush1.bf16.msra.mxu0 0
        %2529 = vmatprep.subr.bf16.mxu0 0
        %2530 = vmatpush1.bf16.msra.mxu0 0
        %2531 = vmatprep.mubr.bf16.mxu0 0
        %2532 = vmatmul.mubr.bf16.gmra.mrb[0].mxu0 %v2497
        %v2533 = vpop.f32.mrb[0].mxu0
        %v2534 = vadd.f32 0.0, %v2533
        %v2535 = vpop.f32.mrb[0].mxu0
        %v2536 = vpop.f32.mrb[0].mxu0
        %v2537 = vpop.f32.mrb[0].mxu0
        %2538 = vdwg.mxu0
        %v2539 = vpack.c.bf16 %v2534, %v2534
        %s2540 = scalar_lea.vmem [#allocation2], 128
        %v2541 = vld [vmem:[%s2540] sm:$0xf]
        %v2542 = vld [vmem:[%s2540 + $0x4] sm:$0xf]
        %v2543 = vld [vmem:[%s2540 + $0x8] sm:$0xf]
        %v2544 = vld [vmem:[%s2540 + $0xc] sm:$0xf]
        %v2545 = vld [vmem:[%s2540 + $0x10] sm:$0xf]
        %v2546 = vld [vmem:[%s2540 + $0x14] sm:$0xf]
        %v2547 = vld [vmem:[%s2540 + $0x18] sm:$0xf]
        %v2548 = vld [vmem:[%s2540 + $0x1c] sm:$0xf]
        %v2549 = vld [vmem:[%s2540 + $0x20] sm:$0xf]
        %v2550 = vld [vmem:[%s2540 + $0x24] sm:$0xf]
        %v2551 = vld [vmem:[%s2540 + $0x28] sm:$0xf]
        %v2552 = vld [vmem:[%s2540 + $0x2c] sm:$0xf]
        %v2553 = vld [vmem:[%s2540 + $0x30] sm:$0xf]
        %v2554 = vld [vmem:[%s2540 + $0x34] sm:$0xf]
        %v2555 = vld [vmem:[%s2540 + $0x38] sm:$0xf]
        %v2556 = vld [vmem:[%s2540 + $0x3c] sm:$0xf]
        %v2573 = vunpack.c.l.b16 %v2541
        %v2574 = vunpack.c.l.b16 %v2542
        %v2575 = vunpack.c.l.b16 %v2543
        %v2576 = vunpack.c.l.b16 %v2544
        %v2577 = vunpack.c.l.b16 %v2545
        %v2578 = vunpack.c.l.b16 %v2546
        %v2579 = vunpack.c.l.b16 %v2547
        %v2580 = vunpack.c.l.b16 %v2548
        %v2581 = vunpack.c.l.b16 %v2549
        %v2582 = vunpack.c.l.b16 %v2550
        %v2583 = vunpack.c.l.b16 %v2551
        %v2584 = vunpack.c.l.b16 %v2552
        %v2585 = vunpack.c.l.b16 %v2553
        %v2586 = vunpack.c.l.b16 %v2554
        %v2587 = vunpack.c.l.b16 %v2555
        %v2588 = vunpack.c.l.b16 %v2556
        %v2589 = vpack.c.b16 %v2574, %v2573
        %v2590 = vpack.c.b16 %v2576, %v2575
        %v2591 = vpack.c.b16 %v2578, %v2577
        %v2592 = vpack.c.b16 %v2580, %v2579
        %v2593 = vpack.c.b16 %v2582, %v2581
        %v2594 = vpack.c.b16 %v2584, %v2583
        %v2595 = vpack.c.b16 %v2586, %v2585
        %v2596 = vpack.c.b16 %v2588, %v2587
        %2605 = vmatprep.subr.bf16.mxu0 0
        %2606 = vmatpush1.bf16.msra.mxu0 %v2589
        %2607 = vmatprep.subr.bf16.mxu0 0
        %2608 = vmatpush1.bf16.msra.mxu0 %v2590
        %2609 = vmatprep.subr.bf16.mxu0 0
        %2610 = vmatpush1.bf16.msra.mxu0 %v2591
        %2611 = vmatprep.subr.bf16.mxu0 0
        %2612 = vmatpush1.bf16.msra.mxu0 %v2592
        %2613 = vmatprep.subr.bf16.mxu0 0
        %2614 = vmatpush1.bf16.msra.mxu0 %v2593
        %2615 = vmatprep.subr.bf16.mxu0 0
        %2616 = vmatpush1.bf16.msra.mxu0 %v2594
        %2617 = vmatprep.subr.bf16.mxu0 0
        %2618 = vmatpush1.bf16.msra.mxu0 %v2595
        %2619 = vmatprep.subr.bf16.mxu0 0
        %2620 = vmatpush1.bf16.msra.mxu0 %v2596
        %2621 = vmatprep.subr.bf16.mxu0 0
        %2622 = vmatpush1.bf16.msra.mxu0 0
        %2623 = vmatprep.subr.bf16.mxu0 0
        %2624 = vmatpush1.bf16.msra.mxu0 0
        %2625 = vmatprep.subr.bf16.mxu0 0
        %2626 = vmatpush1.bf16.msra.mxu0 0
        %2627 = vmatprep.subr.bf16.mxu0 0
        %2628 = vmatpush1.bf16.msra.mxu0 0
        %2629 = vmatprep.subr.bf16.mxu0 0
        %2630 = vmatpush1.bf16.msra.mxu0 0
        %2631 = vmatprep.subr.bf16.mxu0 0
        %2632 = vmatpush1.bf16.msra.mxu0 0
        %2633 = vmatprep.subr.bf16.mxu0 0
        %2634 = vmatpush1.bf16.msra.mxu0 0
        %2635 = vmatprep.subr.bf16.mxu0 0
        %2636 = vmatpush1.bf16.msra.mxu0 0
        %2637 = vmatprep.mubr.bf16.mxu0 0
        %2638 = vmatmul.mubr.bf16.gmra.mrb[0].mxu0 %v2539
        %v2639 = vpop.f32.mrb[0].mxu0
        %v2640 = vadd.f32 0.0, %v2639
        %v2641 = vpop.f32.mrb[0].mxu0
        %v2642 = vpop.f32.mrb[0].mxu0
        %v2643 = vpop.f32.mrb[0].mxu0
        %2644 = vdwg.mxu0
        %v2645 = vadd.f32 %v2490, %v2640
        %v2646 = vpack.c.bf16 %v1331, %v1331
        %v2648 = vsel %vm2196, %v2646, 0
        %2650 = vmatprep.subr.bf16.mxu0 0
        %2651 = vmatpush1.bf16.msra.mxu0 %v2194
        %2652 = vmatprep.subr.bf16.mxu0 0
        %2653 = vmatpush1.bf16.msra.mxu0 0
        %2654 = vmatprep.subr.bf16.mxu0 0
        %2655 = vmatpush1.bf16.msra.mxu0 0
        %2656 = vmatprep.subr.bf16.mxu0 0
        %2657 = vmatpush1.bf16.msra.mxu0 0
        %2658 = vmatprep.subr.bf16.mxu0 0
        %2659 = vmatpush1.bf16.msra.mxu0 0
        %2660 = vmatprep.subr.bf16.mxu0 0
        %2661 = vmatpush1.bf16.msra.mxu0 0
        %2662 = vmatprep.subr.bf16.mxu0 0
        %2663 = vmatpush1.bf16.msra.mxu0 0
        %2664 = vmatprep.subr.bf16.mxu0 0
        %2665 = vmatpush1.bf16.msra.mxu0 0
        %2666 = vmatprep.subr.bf16.mxu0 0
        %2667 = vmatpush1.bf16.msra.mxu0 0
        %2668 = vmatprep.subr.bf16.mxu0 0
        %2669 = vmatpush1.bf16.msra.mxu0 0
        %2670 = vmatprep.subr.bf16.mxu0 0
        %2671 = vmatpush1.bf16.msra.mxu0 0
        %2672 = vmatprep.subr.bf16.mxu0 0
        %2673 = vmatpush1.bf16.msra.mxu0 0
        %2674 = vmatprep.subr.bf16.mxu0 0
        %2675 = vmatpush1.bf16.msra.mxu0 0
        %2676 = vmatprep.subr.bf16.mxu0 0
        %2677 = vmatpush1.bf16.msra.mxu0 0
        %2678 = vmatprep.subr.bf16.mxu0 0
        %2679 = vmatpush1.bf16.msra.mxu0 0
        %2680 = vmatprep.subr.bf16.mxu0 0
        %2681 = vmatpush1.bf16.msra.mxu0 0
        %2682 = vmatprep.mubr.bf16.mxu0 0
        %2683 = vmatmul.mubr.bf16.gmra.mrb[0].mxu0 %v2648
        %v2684 = vpop.f32.mrb[0].mxu0
        %v2685 = vadd.f32 0.0, %v2684
        %v2686 = vpop.f32.mrb[0].mxu0
        %v2687 = vpop.f32.mrb[0].mxu0
        %v2688 = vpop.f32.mrb[0].mxu0
        %2689 = vdwg.mxu0
        %v2690 = vpack.c.bf16 %v2685, %v2685
        %s2691 = scalar_lea.vmem [#allocation2], 192
        %v2692 = vld [vmem:[%s2691] sm:$0xf]
        %v2693 = vld [vmem:[%s2691 + $0x4] sm:$0xf]
        %v2694 = vld [vmem:[%s2691 + $0x8] sm:$0xf]
        %v2695 = vld [vmem:[%s2691 + $0xc] sm:$0xf]
        %v2696 = vld [vmem:[%s2691 + $0x10] sm:$0xf]
        %v2697 = vld [vmem:[%s2691 + $0x14] sm:$0xf]
        %v2698 = vld [vmem:[%s2691 + $0x18] sm:$0xf]
        %v2699 = vld [vmem:[%s2691 + $0x1c] sm:$0xf]
        %v2700 = vld [vmem:[%s2691 + $0x20] sm:$0xf]
        %v2701 = vld [vmem:[%s2691 + $0x24] sm:$0xf]
        %v2702 = vld [vmem:[%s2691 + $0x28] sm:$0xf]
        %v2703 = vld [vmem:[%s2691 + $0x2c] sm:$0xf]
        %v2704 = vld [vmem:[%s2691 + $0x30] sm:$0xf]
        %v2705 = vld [vmem:[%s2691 + $0x34] sm:$0xf]
        %v2706 = vld [vmem:[%s2691 + $0x38] sm:$0xf]
        %v2707 = vld [vmem:[%s2691 + $0x3c] sm:$0xf]
        %v2724 = vunpack.c.l.b16 %v2692
        %v2725 = vunpack.c.l.b16 %v2693
        %v2726 = vunpack.c.l.b16 %v2694
        %v2727 = vunpack.c.l.b16 %v2695
        %v2728 = vunpack.c.l.b16 %v2696
        %v2729 = vunpack.c.l.b16 %v2697
        %v2730 = vunpack.c.l.b16 %v2698
        %v2731 = vunpack.c.l.b16 %v2699
        %v2732 = vunpack.c.l.b16 %v2700
        %v2733 = vunpack.c.l.b16 %v2701
        %v2734 = vunpack.c.l.b16 %v2702
        %v2735 = vunpack.c.l.b16 %v2703
        %v2736 = vunpack.c.l.b16 %v2704
        %v2737 = vunpack.c.l.b16 %v2705
        %v2738 = vunpack.c.l.b16 %v2706
        %v2739 = vunpack.c.l.b16 %v2707
        %v2740 = vpack.c.b16 %v2725, %v2724
        %v2741 = vpack.c.b16 %v2727, %v2726
        %v2742 = vpack.c.b16 %v2729, %v2728
        %v2743 = vpack.c.b16 %v2731, %v2730
        %v2744 = vpack.c.b16 %v2733, %v2732
        %v2745 = vpack.c.b16 %v2735, %v2734
        %v2746 = vpack.c.b16 %v2737, %v2736
        %v2747 = vpack.c.b16 %v2739, %v2738
        %2756 = vmatprep.subr.bf16.mxu0 0
        %2757 = vmatpush1.bf16.msra.mxu0 %v2740
        %2758 = vmatprep.subr.bf16.mxu0 0
        %2759 = vmatpush1.bf16.msra.mxu0 %v2741
        %2760 = vmatprep.subr.bf16.mxu0 0
        %2761 = vmatpush1.bf16.msra.mxu0 %v2742
        %2762 = vmatprep.subr.bf16.mxu0 0
        %2763 = vmatpush1.bf16.msra.mxu0 %v2743
        %2764 = vmatprep.subr.bf16.mxu0 0
        %2765 = vmatpush1.bf16.msra.mxu0 %v2744
        %2766 = vmatprep.subr.bf16.mxu0 0
        %2767 = vmatpush1.bf16.msra.mxu0 %v2745
        %2768 = vmatprep.subr.bf16.mxu0 0
        %2769 = vmatpush1.bf16.msra.mxu0 %v2746
        %2770 = vmatprep.subr.bf16.mxu0 0
        %2771 = vmatpush1.bf16.msra.mxu0 %v2747
        %2772 = vmatprep.subr.bf16.mxu0 0
        %2773 = vmatpush1.bf16.msra.mxu0 0
        %2774 = vmatprep.subr.bf16.mxu0 0
        %2775 = vmatpush1.bf16.msra.mxu0 0
        %2776 = vmatprep.subr.bf16.mxu0 0
        %2777 = vmatpush1.bf16.msra.mxu0 0
        %2778 = vmatprep.subr.bf16.mxu0 0
        %2779 = vmatpush1.bf16.msra.mxu0 0
        %2780 = vmatprep.subr.bf16.mxu0 0
        %2781 = vmatpush1.bf16.msra.mxu0 0
        %2782 = vmatprep.subr.bf16.mxu0 0
        %2783 = vmatpush1.bf16.msra.mxu0 0
        %2784 = vmatprep.subr.bf16.mxu0 0
        %2785 = vmatpush1.bf16.msra.mxu0 0
        %2786 = vmatprep.subr.bf16.mxu0 0
        %2787 = vmatpush1.bf16.msra.mxu0 0
        %2788 = vmatprep.mubr.bf16.mxu0 0
        %2789 = vmatmul.mubr.bf16.gmra.mrb[0].mxu0 %v2690
        %v2790 = vpop.f32.mrb[0].mxu0
        %v2791 = vadd.f32 0.0, %v2790
        %v2792 = vpop.f32.mrb[0].mxu0
        %v2793 = vpop.f32.mrb[0].mxu0
        %v2794 = vpop.f32.mrb[0].mxu0
        %2795 = vdwg.mxu0
        %v2796 = vadd.f32 %v2645, %v2791
        %v2797 = vld [vmem:[%s6] sm:$0x1]
        %v2799 = vlaneseq
        %v2800 = vshrl.u32 %v2799, 7
        %v2801 = vsub.s32 0, %v2800
        %v2802 = vrot.slane %v2797, %v2801
        %v2804 = vadd.f32 %v2796, %v2802
        %v2805 = vmul.f32 %v2804, 0.2
        %v2806 = vmax.f32 %v2804, %v2805
        %v2807 = vpack.c.bf16 %v2806, %v2806
        %vm2808 = vcmask 64512
        %v2809 = vsel %vm2808, %v2195, 0
        %vm2811 = vcmask 1043456
        %v2813 = vsel %vm2811, %v2807, 0
        %2815 = vmatprep.subr.bf16.mxu0 0
        %2816 = vmatpush1.bf16.msra.mxu0 %v2813
        %2817 = vmatprep.subr.bf16.mxu0 0
        %2818 = vmatpush1.bf16.msra.mxu0 0
        %2819 = vmatprep.subr.bf16.mxu0 0
        %2820 = vmatpush1.bf16.msra.mxu0 0
        %2821 = vmatprep.subr.bf16.mxu0 0
        %2822 = vmatpush1.bf16.msra.mxu0 0
        %2823 = vmatprep.subr.bf16.mxu0 0
        %2824 = vmatpush1.bf16.msra.mxu0 0
        %2825 = vmatprep.subr.bf16.mxu0 0
        %2826 = vmatpush1.bf16.msra.mxu0 0
        %2827 = vmatprep.subr.bf16.mxu0 0
        %2828 = vmatpush1.bf16.msra.mxu0 0
        %2829 = vmatprep.subr.bf16.mxu0 0
        %2830 = vmatpush1.bf16.msra.mxu0 0
        %2831 = vmatprep.subr.bf16.mxu0 0
        %2832 = vmatpush1.bf16.msra.mxu0 0
        %2833 = vmatprep.subr.bf16.mxu0 0
        %2834 = vmatpush1.bf16.msra.mxu0 0
        %2835 = vmatprep.subr.bf16.mxu0 0
        %2836 = vmatpush1.bf16.msra.mxu0 0
        %2837 = vmatprep.subr.bf16.mxu0 0
        %2838 = vmatpush1.bf16.msra.mxu0 0
        %2839 = vmatprep.subr.bf16.mxu0 0
        %2840 = vmatpush1.bf16.msra.mxu0 0
        %2841 = vmatprep.subr.bf16.mxu0 0
        %2842 = vmatpush1.bf16.msra.mxu0 0
        %2843 = vmatprep.subr.bf16.mxu0 0
        %2844 = vmatpush1.bf16.msra.mxu0 0
        %2845 = vmatprep.subr.bf16.mxu0 0
        %2846 = vmatpush1.bf16.msra.mxu0 0
        %2847 = vmatprep.mubr.bf16.mxu0 0
        %2848 = vmatmul.mubr.bf16.gmra.mrb[0].mxu0 %v2809
        %v2849 = vpop.f32.mrb[0].mxu0
        %v2850 = vadd.f32 0.0, %v2849
        %v2851 = vpop.f32.mrb[0].mxu0
        %v2852 = vpop.f32.mrb[0].mxu0
        %v2853 = vpop.f32.mrb[0].mxu0
        %2854 = vdwg.mxu0
        %v2855 = vpack.c.bf16 %v2850, %v2850
        %v2856 = vld [vmem:[#allocation5] sm:$0xf]
        %v2857 = vld [vmem:[#allocation5 + $0x4] sm:$0xf]
        %v2858 = vld [vmem:[#allocation5 + $0x8] sm:$0xf]
        %v2859 = vld [vmem:[#allocation5 + $0xc] sm:$0xf]
        %v2860 = vld [vmem:[#allocation5 + $0x10] sm:$0xf]
        %v2861 = vld [vmem:[#allocation5 + $0x14] sm:$0xf]
        %v2862 = vld [vmem:[#allocation5 + $0x18] sm:$0xf]
        %v2863 = vld [vmem:[#allocation5 + $0x1c] sm:$0xf]
        %v2864 = vld [vmem:[#allocation5 + $0x20] sm:$0xf]
        %v2865 = vld [vmem:[#allocation5 + $0x24] sm:$0xf]
        %v2866 = vld [vmem:[#allocation5 + $0x28] sm:$0xf]
        %v2867 = vld [vmem:[#allocation5 + $0x2c] sm:$0xf]
        %v2868 = vld [vmem:[#allocation5 + $0x30] sm:$0xf]
        %v2869 = vld [vmem:[#allocation5 + $0x34] sm:$0xf]
        %v2870 = vld [vmem:[#allocation5 + $0x38] sm:$0xf]
        %v2871 = vld [vmem:[#allocation5 + $0x3c] sm:$0xf]
        %v2872 = vsel %vm2808, %v2257, 0
        %2874 = vmatprep.subr.bf16.mxu0 0
        %2875 = vmatpush1.bf16.msra.mxu0 %v2813
        %2876 = vmatprep.subr.bf16.mxu0 0
        %2877 = vmatpush1.bf16.msra.mxu0 0
        %2878 = vmatprep.subr.bf16.mxu0 0
        %2879 = vmatpush1.bf16.msra.mxu0 0
        %2880 = vmatprep.subr.bf16.mxu0 0
        %2881 = vmatpush1.bf16.msra.mxu0 0
        %2882 = vmatprep.subr.bf16.mxu0 0
        %2883 = vmatpush1.bf16.msra.mxu0 0
        %2884 = vmatprep.subr.bf16.mxu0 0
        %2885 = vmatpush1.bf16.msra.mxu0 0
        %2886 = vmatprep.subr.bf16.mxu0 0
        %2887 = vmatpush1.bf16.msra.mxu0 0
        %2888 = vmatprep.subr.bf16.mxu0 0
        %2889 = vmatpush1.bf16.msra.mxu0 0
        %2890 = vmatprep.subr.bf16.mxu0 0
        %2891 = vmatpush1.bf16.msra.mxu0 0
        %2892 = vmatprep.subr.bf16.mxu0 0
        %2893 = vmatpush1.bf16.msra.mxu0 0
        %2894 = vmatprep.subr.bf16.mxu0 0
        %2895 = vmatpush1.bf16.msra.mxu0 0
        %2896 = vmatprep.subr.bf16.mxu0 0
        %2897 = vmatpush1.bf16.msra.mxu0 0
        %2898 = vmatprep.subr.bf16.mxu0 0
        %2899 = vmatpush1.bf16.msra.mxu0 0
        %2900 = vmatprep.subr.bf16.mxu0 0
        %2901 = vmatpush1.bf16.msra.mxu0 0
        %2902 = vmatprep.subr.bf16.mxu0 0
        %2903 = vmatpush1.bf16.msra.mxu0 0
        %2904 = vmatprep.subr.bf16.mxu0 0
        %2905 = vmatpush1.bf16.msra.mxu0 0
        %2906 = vmatprep.mubr.bf16.mxu0 0
        %2907 = vmatmul.mubr.bf16.gmra.mrb[0].mxu0 %v2872
        %v2908 = vpop.f32.mrb[0].mxu0
        %v2909 = vadd.f32 0.0, %v2908
        %v2910 = vpop.f32.mrb[0].mxu0
        %v2911 = vpop.f32.mrb[0].mxu0
        %v2912 = vpop.f32.mrb[0].mxu0
        %2913 = vdwg.mxu0
        %v2914 = vpack.c.bf16 %v2909, %v2909
        %s2915 = scalar_lea.vmem [#allocation5], 64
        %v2916 = vld [vmem:[%s2915] sm:$0xf]
        %v2917 = vld [vmem:[%s2915 + $0x4] sm:$0xf]
        %v2918 = vld [vmem:[%s2915 + $0x8] sm:$0xf]
        %v2919 = vld [vmem:[%s2915 + $0xc] sm:$0xf]
        %v2920 = vld [vmem:[%s2915 + $0x10] sm:$0xf]
        %v2921 = vld [vmem:[%s2915 + $0x14] sm:$0xf]
        %v2922 = vld [vmem:[%s2915 + $0x18] sm:$0xf]
        %v2923 = vld [vmem:[%s2915 + $0x1c] sm:$0xf]
        %v2924 = vld [vmem:[%s2915 + $0x20] sm:$0xf]
        %v2925 = vld [vmem:[%s2915 + $0x24] sm:$0xf]
        %v2926 = vld [vmem:[%s2915 + $0x28] sm:$0xf]
        %v2927 = vld [vmem:[%s2915 + $0x2c] sm:$0xf]
        %v2928 = vld [vmem:[%s2915 + $0x30] sm:$0xf]
        %v2929 = vld [vmem:[%s2915 + $0x34] sm:$0xf]
        %v2930 = vld [vmem:[%s2915 + $0x38] sm:$0xf]
        %v2931 = vld [vmem:[%s2915 + $0x3c] sm:$0xf]
        %v2948 = vunpack.c.l.b16 %v2916
        %v2949 = vunpack.c.l.b16 %v2917
        %v2950 = vunpack.c.l.b16 %v2918
        %v2951 = vunpack.c.l.b16 %v2919
        %v2952 = vunpack.c.l.b16 %v2920
        %v2953 = vunpack.c.l.b16 %v2921
        %v2954 = vunpack.c.l.b16 %v2922
        %v2955 = vunpack.c.l.b16 %v2923
        %v2956 = vunpack.c.l.b16 %v2924
        %v2957 = vunpack.c.l.b16 %v2925
        %v2958 = vunpack.c.l.b16 %v2926
        %v2959 = vunpack.c.l.b16 %v2927
        %v2960 = vunpack.c.l.b16 %v2928
        %v2961 = vunpack.c.l.b16 %v2929
        %v2962 = vunpack.c.l.b16 %v2930
        %v2963 = vunpack.c.l.b16 %v2931
        %v2964 = vpack.c.b16 %v2949, %v2948
        %v2965 = vpack.c.b16 %v2951, %v2950
        %v2966 = vpack.c.b16 %v2953, %v2952
        %v2967 = vpack.c.b16 %v2955, %v2954
        %v2968 = vpack.c.b16 %v2957, %v2956
        %v2969 = vpack.c.b16 %v2959, %v2958
        %v2970 = vpack.c.b16 %v2961, %v2960
        %v2971 = vpack.c.b16 %v2963, %v2962
        %2980 = vmatprep.subr.bf16.mxu0 0
        %2981 = vmatpush1.bf16.msra.mxu0 %v2964
        %2982 = vmatprep.subr.bf16.mxu0 0
        %2983 = vmatpush1.bf16.msra.mxu0 %v2965
        %2984 = vmatprep.subr.bf16.mxu0 0
        %2985 = vmatpush1.bf16.msra.mxu0 %v2966
        %2986 = vmatprep.subr.bf16.mxu0 0
        %2987 = vmatpush1.bf16.msra.mxu0 %v2967
        %2988 = vmatprep.subr.bf16.mxu0 0
        %2989 = vmatpush1.bf16.msra.mxu0 %v2968
        %2990 = vmatprep.subr.bf16.mxu0 0
        %2991 = vmatpush1.bf16.msra.mxu0 %v2969
        %2992 = vmatprep.subr.bf16.mxu0 0
        %2993 = vmatpush1.bf16.msra.mxu0 %v2970
        %2994 = vmatprep.subr.bf16.mxu0 0
        %2995 = vmatpush1.bf16.msra.mxu0 %v2971
        %2996 = vmatprep.subr.bf16.mxu0 0
        %2997 = vmatpush1.bf16.msra.mxu0 0
        %2998 = vmatprep.subr.bf16.mxu0 0
        %2999 = vmatpush1.bf16.msra.mxu0 0
        %3000 = vmatprep.subr.bf16.mxu0 0
        %3001 = vmatpush1.bf16.msra.mxu0 0
        %3002 = vmatprep.subr.bf16.mxu0 0
        %3003 = vmatpush1.bf16.msra.mxu0 0
        %3004 = vmatprep.subr.bf16.mxu0 0
        %3005 = vmatpush1.bf16.msra.mxu0 0
        %3006 = vmatprep.subr.bf16.mxu0 0
        %3007 = vmatpush1.bf16.msra.mxu0 0
        %3008 = vmatprep.subr.bf16.mxu0 0
        %3009 = vmatpush1.bf16.msra.mxu0 0
        %3010 = vmatprep.subr.bf16.mxu0 0
        %3011 = vmatpush1.bf16.msra.mxu0 0
        %3012 = vmatprep.mubr.bf16.mxu0 0
        %3013 = vmatmul.mubr.bf16.gmra.mrb[0].mxu0 %v2914
        %v3014 = vpop.f32.mrb[0].mxu0
        %v3015 = vadd.f32 0.0, %v3014
        %v3016 = vpop.f32.mrb[0].mxu0
        %v3017 = vpop.f32.mrb[0].mxu0
        %v3018 = vpop.f32.mrb[0].mxu0
        %3019 = vdwg.mxu0
        %v3036 = vunpack.c.l.b16 %v2856
        %v3037 = vunpack.c.l.b16 %v2857
        %v3038 = vunpack.c.l.b16 %v2858
        %v3039 = vunpack.c.l.b16 %v2859
        %v3040 = vunpack.c.l.b16 %v2860
        %v3041 = vunpack.c.l.b16 %v2861
        %v3042 = vunpack.c.l.b16 %v2862
        %v3043 = vunpack.c.l.b16 %v2863
        %v3044 = vunpack.c.l.b16 %v2864
        %v3045 = vunpack.c.l.b16 %v2865
        %v3046 = vunpack.c.l.b16 %v2866
        %v3047 = vunpack.c.l.b16 %v2867
        %v3048 = vunpack.c.l.b16 %v2868
        %v3049 = vunpack.c.l.b16 %v2869
        %v3050 = vunpack.c.l.b16 %v2870
        %v3051 = vunpack.c.l.b16 %v2871
        %v3052 = vpack.c.b16 %v3037, %v3036
        %v3053 = vpack.c.b16 %v3039, %v3038
        %v3054 = vpack.c.b16 %v3041, %v3040
        %v3055 = vpack.c.b16 %v3043, %v3042
        %v3056 = vpack.c.b16 %v3045, %v3044
        %v3057 = vpack.c.b16 %v3047, %v3046
        %v3058 = vpack.c.b16 %v3049, %v3048
        %v3059 = vpack.c.b16 %v3051, %v3050
        %3068 = vmatprep.subr.bf16.mxu0 0
        %3069 = vmatpush1.bf16.msra.mxu0 %v3052
        %3070 = vmatprep.subr.bf16.mxu0 0
        %3071 = vmatpush1.bf16.msra.mxu0 %v3053
        %3072 = vmatprep.subr.bf16.mxu0 0
        %3073 = vmatpush1.bf16.msra.mxu0 %v3054
        %3074 = vmatprep.subr.bf16.mxu0 0
        %3075 = vmatpush1.bf16.msra.mxu0 %v3055
        %3076 = vmatprep.subr.bf16.mxu0 0
        %3077 = vmatpush1.bf16.msra.mxu0 %v3056
        %3078 = vmatprep.subr.bf16.mxu0 0
        %3079 = vmatpush1.bf16.msra.mxu0 %v3057
        %3080 = vmatprep.subr.bf16.mxu0 0
        %3081 = vmatpush1.bf16.msra.mxu0 %v3058
        %3082 = vmatprep.subr.bf16.mxu0 0
        %3083 = vmatpush1.bf16.msra.mxu0 %v3059
        %3084 = vmatprep.subr.bf16.mxu0 0
        %3085 = vmatpush1.bf16.msra.mxu0 0
        %3086 = vmatprep.subr.bf16.mxu0 0
        %3087 = vmatpush1.bf16.msra.mxu0 0
        %3088 = vmatprep.subr.bf16.mxu0 0
        %3089 = vmatpush1.bf16.msra.mxu0 0
        %3090 = vmatprep.subr.bf16.mxu0 0
        %3091 = vmatpush1.bf16.msra.mxu0 0
        %3092 = vmatprep.subr.bf16.mxu0 0
        %3093 = vmatpush1.bf16.msra.mxu0 0
        %3094 = vmatprep.subr.bf16.mxu0 0
        %3095 = vmatpush1.bf16.msra.mxu0 0
        %3096 = vmatprep.subr.bf16.mxu0 0
        %3097 = vmatpush1.bf16.msra.mxu0 0
        %3098 = vmatprep.subr.bf16.mxu0 0
        %3099 = vmatpush1.bf16.msra.mxu0 0
        %3100 = vmatprep.mubr.bf16.mxu0 0
        %3101 = vmatmul.mubr.bf16.gmra.mrb[0].mxu0 %v2855
        %v3102 = vpop.f32.mrb[0].mxu0
        %v3103 = vadd.f32 %v3015, %v3102
        %v3104 = vpop.f32.mrb[0].mxu0
        %v3105 = vpop.f32.mrb[0].mxu0
        %v3106 = vpop.f32.mrb[0].mxu0
        %3107 = vdwg.mxu0
        %v3108 = vsel %vm2808, %v2495, 0
        %3110 = vmatprep.subr.bf16.mxu0 0
        %3111 = vmatpush1.bf16.msra.mxu0 %v2813
        %3112 = vmatprep.subr.bf16.mxu0 0
        %3113 = vmatpush1.bf16.msra.mxu0 0
        %3114 = vmatprep.subr.bf16.mxu0 0
        %3115 = vmatpush1.bf16.msra.mxu0 0
        %3116 = vmatprep.subr.bf16.mxu0 0
        %3117 = vmatpush1.bf16.msra.mxu0 0
        %3118 = vmatprep.subr.bf16.mxu0 0
        %3119 = vmatpush1.bf16.msra.mxu0 0
        %3120 = vmatprep.subr.bf16.mxu0 0
        %3121 = vmatpush1.bf16.msra.mxu0 0
        %3122 = vmatprep.subr.bf16.mxu0 0
        %3123 = vmatpush1.bf16.msra.mxu0 0
        %3124 = vmatprep.subr.bf16.mxu0 0
        %3125 = vmatpush1.bf16.msra.mxu0 0
        %3126 = vmatprep.subr.bf16.mxu0 0
        %3127 = vmatpush1.bf16.msra.mxu0 0
        %3128 = vmatprep.subr.bf16.mxu0 0
        %3129 = vmatpush1.bf16.msra.mxu0 0
        %3130 = vmatprep.subr.bf16.mxu0 0
        %3131 = vmatpush1.bf16.msra.mxu0 0
        %3132 = vmatprep.subr.bf16.mxu0 0
        %3133 = vmatpush1.bf16.msra.mxu0 0
        %3134 = vmatprep.subr.bf16.mxu0 0
        %3135 = vmatpush1.bf16.msra.mxu0 0
        %3136 = vmatprep.subr.bf16.mxu0 0
        %3137 = vmatpush1.bf16.msra.mxu0 0
        %3138 = vmatprep.subr.bf16.mxu0 0
        %3139 = vmatpush1.bf16.msra.mxu0 0
        %3140 = vmatprep.subr.bf16.mxu0 0
        %3141 = vmatpush1.bf16.msra.mxu0 0
        %3142 = vmatprep.mubr.bf16.mxu0 0
        %3143 = vmatmul.mubr.bf16.gmra.mrb[0].mxu0 %v3108
        %v3144 = vpop.f32.mrb[0].mxu0
        %v3145 = vadd.f32 0.0, %v3144
        %v3146 = vpop.f32.mrb[0].mxu0
        %v3147 = vpop.f32.mrb[0].mxu0
        %v3148 = vpop.f32.mrb[0].mxu0
        %3149 = vdwg.mxu0
        %v3150 = vpack.c.bf16 %v3145, %v3145
        %s3151 = scalar_lea.vmem [#allocation5], 128
        %v3152 = vld [vmem:[%s3151] sm:$0xf]
        %v3153 = vld [vmem:[%s3151 + $0x4] sm:$0xf]
        %v3154 = vld [vmem:[%s3151 + $0x8] sm:$0xf]
        %v3155 = vld [vmem:[%s3151 + $0xc] sm:$0xf]
        %v3156 = vld [vmem:[%s3151 + $0x10] sm:$0xf]
        %v3157 = vld [vmem:[%s3151 + $0x14] sm:$0xf]
        %v3158 = vld [vmem:[%s3151 + $0x18] sm:$0xf]
        %v3159 = vld [vmem:[%s3151 + $0x1c] sm:$0xf]
        %v3160 = vld [vmem:[%s3151 + $0x20] sm:$0xf]
        %v3161 = vld [vmem:[%s3151 + $0x24] sm:$0xf]
        %v3162 = vld [vmem:[%s3151 + $0x28] sm:$0xf]
        %v3163 = vld [vmem:[%s3151 + $0x2c] sm:$0xf]
        %v3164 = vld [vmem:[%s3151 + $0x30] sm:$0xf]
        %v3165 = vld [vmem:[%s3151 + $0x34] sm:$0xf]
        %v3166 = vld [vmem:[%s3151 + $0x38] sm:$0xf]
        %v3167 = vld [vmem:[%s3151 + $0x3c] sm:$0xf]
        %v3184 = vunpack.c.l.b16 %v3152
        %v3185 = vunpack.c.l.b16 %v3153
        %v3186 = vunpack.c.l.b16 %v3154
        %v3187 = vunpack.c.l.b16 %v3155
        %v3188 = vunpack.c.l.b16 %v3156
        %v3189 = vunpack.c.l.b16 %v3157
        %v3190 = vunpack.c.l.b16 %v3158
        %v3191 = vunpack.c.l.b16 %v3159
        %v3192 = vunpack.c.l.b16 %v3160
        %v3193 = vunpack.c.l.b16 %v3161
        %v3194 = vunpack.c.l.b16 %v3162
        %v3195 = vunpack.c.l.b16 %v3163
        %v3196 = vunpack.c.l.b16 %v3164
        %v3197 = vunpack.c.l.b16 %v3165
        %v3198 = vunpack.c.l.b16 %v3166
        %v3199 = vunpack.c.l.b16 %v3167
        %v3200 = vpack.c.b16 %v3185, %v3184
        %v3201 = vpack.c.b16 %v3187, %v3186
        %v3202 = vpack.c.b16 %v3189, %v3188
        %v3203 = vpack.c.b16 %v3191, %v3190
        %v3204 = vpack.c.b16 %v3193, %v3192
        %v3205 = vpack.c.b16 %v3195, %v3194
        %v3206 = vpack.c.b16 %v3197, %v3196
        %v3207 = vpack.c.b16 %v3199, %v3198
        %3216 = vmatprep.subr.bf16.mxu0 0
        %3217 = vmatpush1.bf16.msra.mxu0 %v3200
        %3218 = vmatprep.subr.bf16.mxu0 0
        %3219 = vmatpush1.bf16.msra.mxu0 %v3201
        %3220 = vmatprep.subr.bf16.mxu0 0
        %3221 = vmatpush1.bf16.msra.mxu0 %v3202
        %3222 = vmatprep.subr.bf16.mxu0 0
        %3223 = vmatpush1.bf16.msra.mxu0 %v3203
        %3224 = vmatprep.subr.bf16.mxu0 0
        %3225 = vmatpush1.bf16.msra.mxu0 %v3204
        %3226 = vmatprep.subr.bf16.mxu0 0
        %3227 = vmatpush1.bf16.msra.mxu0 %v3205
        %3228 = vmatprep.subr.bf16.mxu0 0
        %3229 = vmatpush1.bf16.msra.mxu0 %v3206
        %3230 = vmatprep.subr.bf16.mxu0 0
        %3231 = vmatpush1.bf16.msra.mxu0 %v3207
        %3232 = vmatprep.subr.bf16.mxu0 0
        %3233 = vmatpush1.bf16.msra.mxu0 0
        %3234 = vmatprep.subr.bf16.mxu0 0
        %3235 = vmatpush1.bf16.msra.mxu0 0
        %3236 = vmatprep.subr.bf16.mxu0 0
        %3237 = vmatpush1.bf16.msra.mxu0 0
        %3238 = vmatprep.subr.bf16.mxu0 0
        %3239 = vmatpush1.bf16.msra.mxu0 0
        %3240 = vmatprep.subr.bf16.mxu0 0
        %3241 = vmatpush1.bf16.msra.mxu0 0
        %3242 = vmatprep.subr.bf16.mxu0 0
        %3243 = vmatpush1.bf16.msra.mxu0 0
        %3244 = vmatprep.subr.bf16.mxu0 0
        %3245 = vmatpush1.bf16.msra.mxu0 0
        %3246 = vmatprep.subr.bf16.mxu0 0
        %3247 = vmatpush1.bf16.msra.mxu0 0
        %3248 = vmatprep.mubr.bf16.mxu0 0
        %3249 = vmatmul.mubr.bf16.gmra.mrb[0].mxu0 %v3150
        %v3250 = vpop.f32.mrb[0].mxu0
        %v3251 = vadd.f32 0.0, %v3250
        %v3252 = vpop.f32.mrb[0].mxu0
        %v3253 = vpop.f32.mrb[0].mxu0
        %v3254 = vpop.f32.mrb[0].mxu0
        %3255 = vdwg.mxu0
        %v3256 = vadd.f32 %v3103, %v3251
        %v3257 = vsel %vm2808, %v2646, 0
        %3259 = vmatprep.subr.bf16.mxu0 0
        %3260 = vmatpush1.bf16.msra.mxu0 %v2813
        %3261 = vmatprep.subr.bf16.mxu0 0
        %3262 = vmatpush1.bf16.msra.mxu0 0
        %3263 = vmatprep.subr.bf16.mxu0 0
        %3264 = vmatpush1.bf16.msra.mxu0 0
        %3265 = vmatprep.subr.bf16.mxu0 0
        %3266 = vmatpush1.bf16.msra.mxu0 0
        %3267 = vmatprep.subr.bf16.mxu0 0
        %3268 = vmatpush1.bf16.msra.mxu0 0
        %3269 = vmatprep.subr.bf16.mxu0 0
        %3270 = vmatpush1.bf16.msra.mxu0 0
        %3271 = vmatprep.subr.bf16.mxu0 0
        %3272 = vmatpush1.bf16.msra.mxu0 0
        %3273 = vmatprep.subr.bf16.mxu0 0
        %3274 = vmatpush1.bf16.msra.mxu0 0
        %3275 = vmatprep.subr.bf16.mxu0 0
        %3276 = vmatpush1.bf16.msra.mxu0 0
        %3277 = vmatprep.subr.bf16.mxu0 0
        %3278 = vmatpush1.bf16.msra.mxu0 0
        %3279 = vmatprep.subr.bf16.mxu0 0
        %3280 = vmatpush1.bf16.msra.mxu0 0
        %3281 = vmatprep.subr.bf16.mxu0 0
        %3282 = vmatpush1.bf16.msra.mxu0 0
        %3283 = vmatprep.subr.bf16.mxu0 0
        %3284 = vmatpush1.bf16.msra.mxu0 0
        %3285 = vmatprep.subr.bf16.mxu0 0
        %3286 = vmatpush1.bf16.msra.mxu0 0
        %3287 = vmatprep.subr.bf16.mxu0 0
        %3288 = vmatpush1.bf16.msra.mxu0 0
        %3289 = vmatprep.subr.bf16.mxu0 0
        %3290 = vmatpush1.bf16.msra.mxu0 0
        %3291 = vmatprep.mubr.bf16.mxu0 0
        %3292 = vmatmul.mubr.bf16.gmra.mrb[0].mxu0 %v3257
        %v3293 = vpop.f32.mrb[0].mxu0
        %v3294 = vadd.f32 0.0, %v3293
        %v3295 = vpop.f32.mrb[0].mxu0
        %v3296 = vpop.f32.mrb[0].mxu0
        %v3297 = vpop.f32.mrb[0].mxu0
        %3298 = vdwg.mxu0
        %v3299 = vpack.c.bf16 %v3294, %v3294
        %s3300 = scalar_lea.vmem [#allocation5], 192
        %v3301 = vld [vmem:[%s3300] sm:$0xf]
        %v3302 = vld [vmem:[%s3300 + $0x4] sm:$0xf]
        %v3303 = vld [vmem:[%s3300 + $0x8] sm:$0xf]
        %v3304 = vld [vmem:[%s3300 + $0xc] sm:$0xf]
        %v3305 = vld [vmem:[%s3300 + $0x10] sm:$0xf]
        %v3306 = vld [vmem:[%s3300 + $0x14] sm:$0xf]
        %v3307 = vld [vmem:[%s3300 + $0x18] sm:$0xf]
        %v3308 = vld [vmem:[%s3300 + $0x1c] sm:$0xf]
        %v3309 = vld [vmem:[%s3300 + $0x20] sm:$0xf]
        %v3310 = vld [vmem:[%s3300 + $0x24] sm:$0xf]
        %v3311 = vld [vmem:[%s3300 + $0x28] sm:$0xf]
        %v3312 = vld [vmem:[%s3300 + $0x2c] sm:$0xf]
        %v3313 = vld [vmem:[%s3300 + $0x30] sm:$0xf]
        %v3314 = vld [vmem:[%s3300 + $0x34] sm:$0xf]
        %v3315 = vld [vmem:[%s3300 + $0x38] sm:$0xf]
        %v3316 = vld [vmem:[%s3300 + $0x3c] sm:$0xf]
        %v3333 = vunpack.c.l.b16 %v3301
        %v3334 = vunpack.c.l.b16 %v3302
        %v3335 = vunpack.c.l.b16 %v3303
        %v3336 = vunpack.c.l.b16 %v3304
        %v3337 = vunpack.c.l.b16 %v3305
        %v3338 = vunpack.c.l.b16 %v3306
        %v3339 = vunpack.c.l.b16 %v3307
        %v3340 = vunpack.c.l.b16 %v3308
        %v3341 = vunpack.c.l.b16 %v3309
        %v3342 = vunpack.c.l.b16 %v3310
        %v3343 = vunpack.c.l.b16 %v3311
        %v3344 = vunpack.c.l.b16 %v3312
        %v3345 = vunpack.c.l.b16 %v3313
        %v3346 = vunpack.c.l.b16 %v3314
        %v3347 = vunpack.c.l.b16 %v3315
        %v3348 = vunpack.c.l.b16 %v3316
        %v3349 = vpack.c.b16 %v3334, %v3333
        %v3350 = vpack.c.b16 %v3336, %v3335
        %v3351 = vpack.c.b16 %v3338, %v3337
        %v3352 = vpack.c.b16 %v3340, %v3339
        %v3353 = vpack.c.b16 %v3342, %v3341
        %v3354 = vpack.c.b16 %v3344, %v3343
        %v3355 = vpack.c.b16 %v3346, %v3345
        %v3356 = vpack.c.b16 %v3348, %v3347
        %3365 = vmatprep.subr.bf16.mxu0 0
        %3366 = vmatpush1.bf16.msra.mxu0 %v3349
        %3367 = vmatprep.subr.bf16.mxu0 0
        %3368 = vmatpush1.bf16.msra.mxu0 %v3350
        %3369 = vmatprep.subr.bf16.mxu0 0
        %3370 = vmatpush1.bf16.msra.mxu0 %v3351
        %3371 = vmatprep.subr.bf16.mxu0 0
        %3372 = vmatpush1.bf16.msra.mxu0 %v3352
        %3373 = vmatprep.subr.bf16.mxu0 0
        %3374 = vmatpush1.bf16.msra.mxu0 %v3353
        %3375 = vmatprep.subr.bf16.mxu0 0
        %3376 = vmatpush1.bf16.msra.mxu0 %v3354
        %3377 = vmatprep.subr.bf16.mxu0 0
        %3378 = vmatpush1.bf16.msra.mxu0 %v3355
        %3379 = vmatprep.subr.bf16.mxu0 0
        %3380 = vmatpush1.bf16.msra.mxu0 %v3356
        %3381 = vmatprep.subr.bf16.mxu0 0
        %3382 = vmatpush1.bf16.msra.mxu0 0
        %3383 = vmatprep.subr.bf16.mxu0 0
        %3384 = vmatpush1.bf16.msra.mxu0 0
        %3385 = vmatprep.subr.bf16.mxu0 0
        %3386 = vmatpush1.bf16.msra.mxu0 0
        %3387 = vmatprep.subr.bf16.mxu0 0
        %3388 = vmatpush1.bf16.msra.mxu0 0
        %3389 = vmatprep.subr.bf16.mxu0 0
        %3390 = vmatpush1.bf16.msra.mxu0 0
        %3391 = vmatprep.subr.bf16.mxu0 0
        %3392 = vmatpush1.bf16.msra.mxu0 0
        %3393 = vmatprep.subr.bf16.mxu0 0
        %3394 = vmatpush1.bf16.msra.mxu0 0
        %3395 = vmatprep.subr.bf16.mxu0 0
        %3396 = vmatpush1.bf16.msra.mxu0 0
        %3397 = vmatprep.mubr.bf16.mxu0 0
        %3398 = vmatmul.mubr.bf16.gmra.mrb[0].mxu0 %v3299
        %v3399 = vpop.f32.mrb[0].mxu0
        %v3400 = vadd.f32 0.0, %v3399
        %v3401 = vpop.f32.mrb[0].mxu0
        %v3402 = vpop.f32.mrb[0].mxu0
        %v3403 = vpop.f32.mrb[0].mxu0
        %3404 = vdwg.mxu0
        %v3405 = vadd.f32 %v3256, %v3400
        %v3406 = vld [vmem:[%s8] sm:$0x1]
        %v3408 = vlaneseq
        %v3409 = vshrl.u32 %v3408, 7
        %v3410 = vsub.s32 0, %v3409
        %v3411 = vrot.slane %v3406, %v3410
        %v3413 = vadd.f32 %v3405, %v3411
        %v3414 = vmul.f32 %v3413, 0.2
        %v3415 = vmax.f32 %v3413, %v3414
        %v3416 = vpack.c.bf16 %v3415, %v3415
        %vm3417 = vcmask 31744
        %v3418 = vsel %vm3417, %v2195, 0
        %vm3420 = vcmask 1041408
        %v3422 = vsel %vm3420, %v3416, 0
        %3424 = vmatprep.subr.bf16.mxu0 0
        %3425 = vmatpush1.bf16.msra.mxu0 %v3422
        %3426 = vmatprep.subr.bf16.mxu0 0
        %3427 = vmatpush1.bf16.msra.mxu0 0
        %3428 = vmatprep.subr.bf16.mxu0 0
        %3429 = vmatpush1.bf16.msra.mxu0 0
        %3430 = vmatprep.subr.bf16.mxu0 0
        %3431 = vmatpush1.bf16.msra.mxu0 0
        %3432 = vmatprep.subr.bf16.mxu0 0
        %3433 = vmatpush1.bf16.msra.mxu0 0
        %3434 = vmatprep.subr.bf16.mxu0 0
        %3435 = vmatpush1.bf16.msra.mxu0 0
        %3436 = vmatprep.subr.bf16.mxu0 0
        %3437 = vmatpush1.bf16.msra.mxu0 0
        %3438 = vmatprep.subr.bf16.mxu0 0
        %3439 = vmatpush1.bf16.msra.mxu0 0
        %3440 = vmatprep.subr.bf16.mxu0 0
        %3441 = vmatpush1.bf16.msra.mxu0 0
        %3442 = vmatprep.subr.bf16.mxu0 0
        %3443 = vmatpush1.bf16.msra.mxu0 0
        %3444 = vmatprep.subr.bf16.mxu0 0
        %3445 = vmatpush1.bf16.msra.mxu0 0
        %3446 = vmatprep.subr.bf16.mxu0 0
        %3447 = vmatpush1.bf16.msra.mxu0 0
        %3448 = vmatprep.subr.bf16.mxu0 0
        %3449 = vmatpush1.bf16.msra.mxu0 0
        %3450 = vmatprep.subr.bf16.mxu0 0
        %3451 = vmatpush1.bf16.msra.mxu0 0
        %3452 = vmatprep.subr.bf16.mxu0 0
        %3453 = vmatpush1.bf16.msra.mxu0 0
        %3454 = vmatprep.subr.bf16.mxu0 0
        %3455 = vmatpush1.bf16.msra.mxu0 0
        %3456 = vmatprep.mubr.bf16.mxu0 0
        %3457 = vmatmul.mubr.bf16.gmra.mrb[0].mxu0 %v3418
        %v3458 = vpop.f32.mrb[0].mxu0
        %v3459 = vadd.f32 0.0, %v3458
        %v3460 = vpop.f32.mrb[0].mxu0
        %v3461 = vpop.f32.mrb[0].mxu0
        %v3462 = vpop.f32.mrb[0].mxu0
        %3463 = vdwg.mxu0
        %v3464 = vpack.c.bf16 %v3459, %v3459
        %v3465 = vld [vmem:[%s9] sm:$0xf]
        %v3466 = vld [vmem:[%s9 + $0x4] sm:$0xf]
        %v3467 = vld [vmem:[%s9 + $0x8] sm:$0xf]
        %v3468 = vld [vmem:[%s9 + $0xc] sm:$0xf]
        %v3469 = vld [vmem:[%s9 + $0x10] sm:$0xf]
        %v3470 = vld [vmem:[%s9 + $0x14] sm:$0xf]
        %v3471 = vld [vmem:[%s9 + $0x18] sm:$0xf]
        %v3472 = vld [vmem:[%s9 + $0x1c] sm:$0xf]
        %v3473 = vld [vmem:[%s9 + $0x20] sm:$0xf]
        %v3474 = vld [vmem:[%s9 + $0x24] sm:$0xf]
        %v3475 = vld [vmem:[%s9 + $0x28] sm:$0xf]
        %v3476 = vld [vmem:[%s9 + $0x2c] sm:$0xf]
        %v3477 = vld [vmem:[%s9 + $0x30] sm:$0xf]
        %v3478 = vld [vmem:[%s9 + $0x34] sm:$0xf]
        %v3479 = vld [vmem:[%s9 + $0x38] sm:$0xf]
        %v3480 = vld [vmem:[%s9 + $0x3c] sm:$0xf]
        %v3481 = vsel %vm3417, %v2257, 0
        %3483 = vmatprep.subr.bf16.mxu0 0
        %3484 = vmatpush1.bf16.msra.mxu0 %v3422
        %3485 = vmatprep.subr.bf16.mxu0 0
        %3486 = vmatpush1.bf16.msra.mxu0 0
        %3487 = vmatprep.subr.bf16.mxu0 0
        %3488 = vmatpush1.bf16.msra.mxu0 0
        %3489 = vmatprep.subr.bf16.mxu0 0
        %3490 = vmatpush1.bf16.msra.mxu0 0
        %3491 = vmatprep.subr.bf16.mxu0 0
        %3492 = vmatpush1.bf16.msra.mxu0 0
        %3493 = vmatprep.subr.bf16.mxu0 0
        %3494 = vmatpush1.bf16.msra.mxu0 0
        %3495 = vmatprep.subr.bf16.mxu0 0
        %3496 = vmatpush1.bf16.msra.mxu0 0
        %3497 = vmatprep.subr.bf16.mxu0 0
        %3498 = vmatpush1.bf16.msra.mxu0 0
        %3499 = vmatprep.subr.bf16.mxu0 0
        %3500 = vmatpush1.bf16.msra.mxu0 0
        %3501 = vmatprep.subr.bf16.mxu0 0
        %3502 = vmatpush1.bf16.msra.mxu0 0
        %3503 = vmatprep.subr.bf16.mxu0 0
        %3504 = vmatpush1.bf16.msra.mxu0 0
        %3505 = vmatprep.subr.bf16.mxu0 0
        %3506 = vmatpush1.bf16.msra.mxu0 0
        %3507 = vmatprep.subr.bf16.mxu0 0
        %3508 = vmatpush1.bf16.msra.mxu0 0
        %3509 = vmatprep.subr.bf16.mxu0 0
        %3510 = vmatpush1.bf16.msra.mxu0 0
        %3511 = vmatprep.subr.bf16.mxu0 0
        %3512 = vmatpush1.bf16.msra.mxu0 0
        %3513 = vmatprep.subr.bf16.mxu0 0
        %3514 = vmatpush1.bf16.msra.mxu0 0
        %3515 = vmatprep.mubr.bf16.mxu0 0
        %3516 = vmatmul.mubr.bf16.gmra.mrb[0].mxu0 %v3481
        %v3517 = vpop.f32.mrb[0].mxu0
        %v3518 = vadd.f32 0.0, %v3517
        %v3519 = vpop.f32.mrb[0].mxu0
        %v3520 = vpop.f32.mrb[0].mxu0
        %v3521 = vpop.f32.mrb[0].mxu0
        %3522 = vdwg.mxu0
        %v3523 = vpack.c.bf16 %v3518, %v3518
        %s3524 = scalar_lea.vmem %s9, 64
        %v3525 = vld [vmem:[%s3524] sm:$0xf]
        %v3526 = vld [vmem:[%s3524 + $0x4] sm:$0xf]
        %v3527 = vld [vmem:[%s3524 + $0x8] sm:$0xf]
        %v3528 = vld [vmem:[%s3524 + $0xc] sm:$0xf]
        %v3529 = vld [vmem:[%s3524 + $0x10] sm:$0xf]
        %v3530 = vld [vmem:[%s3524 + $0x14] sm:$0xf]
        %v3531 = vld [vmem:[%s3524 + $0x18] sm:$0xf]
        %v3532 = vld [vmem:[%s3524 + $0x1c] sm:$0xf]
        %v3533 = vld [vmem:[%s3524 + $0x20] sm:$0xf]
        %v3534 = vld [vmem:[%s3524 + $0x24] sm:$0xf]
        %v3535 = vld [vmem:[%s3524 + $0x28] sm:$0xf]
        %v3536 = vld [vmem:[%s3524 + $0x2c] sm:$0xf]
        %v3537 = vld [vmem:[%s3524 + $0x30] sm:$0xf]
        %v3538 = vld [vmem:[%s3524 + $0x34] sm:$0xf]
        %v3539 = vld [vmem:[%s3524 + $0x38] sm:$0xf]
        %v3540 = vld [vmem:[%s3524 + $0x3c] sm:$0xf]
        %v3557 = vunpack.c.l.b16 %v3525
        %v3558 = vunpack.c.l.b16 %v3526
        %v3559 = vunpack.c.l.b16 %v3527
        %v3560 = vunpack.c.l.b16 %v3528
        %v3561 = vunpack.c.l.b16 %v3529
        %v3562 = vunpack.c.l.b16 %v3530
        %v3563 = vunpack.c.l.b16 %v3531
        %v3564 = vunpack.c.l.b16 %v3532
        %v3565 = vunpack.c.l.b16 %v3533
        %v3566 = vunpack.c.l.b16 %v3534
        %v3567 = vunpack.c.l.b16 %v3535
        %v3568 = vunpack.c.l.b16 %v3536
        %v3569 = vunpack.c.l.b16 %v3537
        %v3570 = vunpack.c.l.b16 %v3538
        %v3571 = vunpack.c.l.b16 %v3539
        %v3572 = vunpack.c.l.b16 %v3540
        %v3573 = vpack.c.b16 %v3558, %v3557
        %v3574 = vpack.c.b16 %v3560, %v3559
        %v3575 = vpack.c.b16 %v3562, %v3561
        %v3576 = vpack.c.b16 %v3564, %v3563
        %v3577 = vpack.c.b16 %v3566, %v3565
        %v3578 = vpack.c.b16 %v3568, %v3567
        %v3579 = vpack.c.b16 %v3570, %v3569
        %v3580 = vpack.c.b16 %v3572, %v3571
        %3589 = vmatprep.subr.bf16.mxu0 0
        %3590 = vmatpush1.bf16.msra.mxu0 %v3573
        %3591 = vmatprep.subr.bf16.mxu0 0
        %3592 = vmatpush1.bf16.msra.mxu0 %v3574
        %3593 = vmatprep.subr.bf16.mxu0 0
        %3594 = vmatpush1.bf16.msra.mxu0 %v3575
        %3595 = vmatprep.subr.bf16.mxu0 0
        %3596 = vmatpush1.bf16.msra.mxu0 %v3576
        %3597 = vmatprep.subr.bf16.mxu0 0
        %3598 = vmatpush1.bf16.msra.mxu0 %v3577
        %3599 = vmatprep.subr.bf16.mxu0 0
        %3600 = vmatpush1.bf16.msra.mxu0 %v3578
        %3601 = vmatprep.subr.bf16.mxu0 0
        %3602 = vmatpush1.bf16.msra.mxu0 %v3579
        %3603 = vmatprep.subr.bf16.mxu0 0
        %3604 = vmatpush1.bf16.msra.mxu0 %v3580
        %3605 = vmatprep.subr.bf16.mxu0 0
        %3606 = vmatpush1.bf16.msra.mxu0 0
        %3607 = vmatprep.subr.bf16.mxu0 0
        %3608 = vmatpush1.bf16.msra.mxu0 0
        %3609 = vmatprep.subr.bf16.mxu0 0
        %3610 = vmatpush1.bf16.msra.mxu0 0
        %3611 = vmatprep.subr.bf16.mxu0 0
        %3612 = vmatpush1.bf16.msra.mxu0 0
        %3613 = vmatprep.subr.bf16.mxu0 0
        %3614 = vmatpush1.bf16.msra.mxu0 0
        %3615 = vmatprep.subr.bf16.mxu0 0
        %3616 = vmatpush1.bf16.msra.mxu0 0
        %3617 = vmatprep.subr.bf16.mxu0 0
        %3618 = vmatpush1.bf16.msra.mxu0 0
        %3619 = vmatprep.subr.bf16.mxu0 0
        %3620 = vmatpush1.bf16.msra.mxu0 0
        %3621 = vmatprep.mubr.bf16.mxu0 0
        %3622 = vmatmul.mubr.bf16.gmra.mrb[0].mxu0 %v3523
        %v3623 = vpop.f32.mrb[0].mxu0
        %v3624 = vadd.f32 0.0, %v3623
        %v3625 = vpop.f32.mrb[0].mxu0
        %v3626 = vpop.f32.mrb[0].mxu0
        %v3627 = vpop.f32.mrb[0].mxu0
        %3628 = vdwg.mxu0
        %v3645 = vunpack.c.l.b16 %v3465
        %v3646 = vunpack.c.l.b16 %v3466
        %v3647 = vunpack.c.l.b16 %v3467
        %v3648 = vunpack.c.l.b16 %v3468
        %v3649 = vunpack.c.l.b16 %v3469
        %v3650 = vunpack.c.l.b16 %v3470
        %v3651 = vunpack.c.l.b16 %v3471
        %v3652 = vunpack.c.l.b16 %v3472
        %v3653 = vunpack.c.l.b16 %v3473
        %v3654 = vunpack.c.l.b16 %v3474
        %v3655 = vunpack.c.l.b16 %v3475
        %v3656 = vunpack.c.l.b16 %v3476
        %v3657 = vunpack.c.l.b16 %v3477
        %v3658 = vunpack.c.l.b16 %v3478
        %v3659 = vunpack.c.l.b16 %v3479
        %v3660 = vunpack.c.l.b16 %v3480
        %v3661 = vpack.c.b16 %v3646, %v3645
        %v3662 = vpack.c.b16 %v3648, %v3647
        %v3663 = vpack.c.b16 %v3650, %v3649
        %v3664 = vpack.c.b16 %v3652, %v3651
        %v3665 = vpack.c.b16 %v3654, %v3653
        %v3666 = vpack.c.b16 %v3656, %v3655
        %v3667 = vpack.c.b16 %v3658, %v3657
        %v3668 = vpack.c.b16 %v3660, %v3659
        %3677 = vmatprep.subr.bf16.mxu0 0
        %3678 = vmatpush1.bf16.msra.mxu0 %v3661
        %3679 = vmatprep.subr.bf16.mxu0 0
        %3680 = vmatpush1.bf16.msra.mxu0 %v3662
        %3681 = vmatprep.subr.bf16.mxu0 0
        %3682 = vmatpush1.bf16.msra.mxu0 %v3663
        %3683 = vmatprep.subr.bf16.mxu0 0
        %3684 = vmatpush1.bf16.msra.mxu0 %v3664
        %3685 = vmatprep.subr.bf16.mxu0 0
        %3686 = vmatpush1.bf16.msra.mxu0 %v3665
        %3687 = vmatprep.subr.bf16.mxu0 0
        %3688 = vmatpush1.bf16.msra.mxu0 %v3666
        %3689 = vmatprep.subr.bf16.mxu0 0
        %3690 = vmatpush1.bf16.msra.mxu0 %v3667
        %3691 = vmatprep.subr.bf16.mxu0 0
        %3692 = vmatpush1.bf16.msra.mxu0 %v3668
        %3693 = vmatprep.subr.bf16.mxu0 0
        %3694 = vmatpush1.bf16.msra.mxu0 0
        %3695 = vmatprep.subr.bf16.mxu0 0
        %3696 = vmatpush1.bf16.msra.mxu0 0
        %3697 = vmatprep.subr.bf16.mxu0 0
        %3698 = vmatpush1.bf16.msra.mxu0 0
        %3699 = vmatprep.subr.bf16.mxu0 0
        %3700 = vmatpush1.bf16.msra.mxu0 0
        %3701 = vmatprep.subr.bf16.mxu0 0
        %3702 = vmatpush1.bf16.msra.mxu0 0
        %3703 = vmatprep.subr.bf16.mxu0 0
        %3704 = vmatpush1.bf16.msra.mxu0 0
        %3705 = vmatprep.subr.bf16.mxu0 0
        %3706 = vmatpush1.bf16.msra.mxu0 0
        %3707 = vmatprep.subr.bf16.mxu0 0
        %3708 = vmatpush1.bf16.msra.mxu0 0
        %3709 = vmatprep.mubr.bf16.mxu0 0
        %3710 = vmatmul.mubr.bf16.gmra.mrb[0].mxu0 %v3464
        %v3711 = vpop.f32.mrb[0].mxu0
        %v3712 = vadd.f32 %v3624, %v3711
        %v3713 = vpop.f32.mrb[0].mxu0
        %v3714 = vpop.f32.mrb[0].mxu0
        %v3715 = vpop.f32.mrb[0].mxu0
        %3716 = vdwg.mxu0
        %v3717 = vsel %vm3417, %v2495, 0
        %3719 = vmatprep.subr.bf16.mxu0 0
        %3720 = vmatpush1.bf16.msra.mxu0 %v3422
        %3721 = vmatprep.subr.bf16.mxu0 0
        %3722 = vmatpush1.bf16.msra.mxu0 0
        %3723 = vmatprep.subr.bf16.mxu0 0
        %3724 = vmatpush1.bf16.msra.mxu0 0
        %3725 = vmatprep.subr.bf16.mxu0 0
        %3726 = vmatpush1.bf16.msra.mxu0 0
        %3727 = vmatprep.subr.bf16.mxu0 0
        %3728 = vmatpush1.bf16.msra.mxu0 0
        %3729 = vmatprep.subr.bf16.mxu0 0
        %3730 = vmatpush1.bf16.msra.mxu0 0
        %3731 = vmatprep.subr.bf16.mxu0 0
        %3732 = vmatpush1.bf16.msra.mxu0 0
        %3733 = vmatprep.subr.bf16.mxu0 0
        %3734 = vmatpush1.bf16.msra.mxu0 0
        %3735 = vmatprep.subr.bf16.mxu0 0
        %3736 = vmatpush1.bf16.msra.mxu0 0
        %3737 = vmatprep.subr.bf16.mxu0 0
        %3738 = vmatpush1.bf16.msra.mxu0 0
        %3739 = vmatprep.subr.bf16.mxu0 0
        %3740 = vmatpush1.bf16.msra.mxu0 0
        %3741 = vmatprep.subr.bf16.mxu0 0
        %3742 = vmatpush1.bf16.msra.mxu0 0
        %3743 = vmatprep.subr.bf16.mxu0 0
        %3744 = vmatpush1.bf16.msra.mxu0 0
        %3745 = vmatprep.subr.bf16.mxu0 0
        %3746 = vmatpush1.bf16.msra.mxu0 0
        %3747 = vmatprep.subr.bf16.mxu0 0
        %3748 = vmatpush1.bf16.msra.mxu0 0
        %3749 = vmatprep.subr.bf16.mxu0 0
        %3750 = vmatpush1.bf16.msra.mxu0 0
        %3751 = vmatprep.mubr.bf16.mxu0 0
        %3752 = vmatmul.mubr.bf16.gmra.mrb[0].mxu0 %v3717
        %v3753 = vpop.f32.mrb[0].mxu0
        %v3754 = vadd.f32 0.0, %v3753
        %v3755 = vpop.f32.mrb[0].mxu0
        %v3756 = vpop.f32.mrb[0].mxu0
        %v3757 = vpop.f32.mrb[0].mxu0
        %3758 = vdwg.mxu0
        %v3759 = vpack.c.bf16 %v3754, %v3754
        %s3760 = scalar_lea.vmem %s9, 128
        %v3761 = vld [vmem:[%s3760] sm:$0xf]
        %v3762 = vld [vmem:[%s3760 + $0x4] sm:$0xf]
        %v3763 = vld [vmem:[%s3760 + $0x8] sm:$0xf]
        %v3764 = vld [vmem:[%s3760 + $0xc] sm:$0xf]
        %v3765 = vld [vmem:[%s3760 + $0x10] sm:$0xf]
        %v3766 = vld [vmem:[%s3760 + $0x14] sm:$0xf]
        %v3767 = vld [vmem:[%s3760 + $0x18] sm:$0xf]
        %v3768 = vld [vmem:[%s3760 + $0x1c] sm:$0xf]
        %v3769 = vld [vmem:[%s3760 + $0x20] sm:$0xf]
        %v3770 = vld [vmem:[%s3760 + $0x24] sm:$0xf]
        %v3771 = vld [vmem:[%s3760 + $0x28] sm:$0xf]
        %v3772 = vld [vmem:[%s3760 + $0x2c] sm:$0xf]
        %v3773 = vld [vmem:[%s3760 + $0x30] sm:$0xf]
        %v3774 = vld [vmem:[%s3760 + $0x34] sm:$0xf]
        %v3775 = vld [vmem:[%s3760 + $0x38] sm:$0xf]
        %v3776 = vld [vmem:[%s3760 + $0x3c] sm:$0xf]
        %v3793 = vunpack.c.l.b16 %v3761
        %v3794 = vunpack.c.l.b16 %v3762
        %v3795 = vunpack.c.l.b16 %v3763
        %v3796 = vunpack.c.l.b16 %v3764
        %v3797 = vunpack.c.l.b16 %v3765
        %v3798 = vunpack.c.l.b16 %v3766
        %v3799 = vunpack.c.l.b16 %v3767
        %v3800 = vunpack.c.l.b16 %v3768
        %v3801 = vunpack.c.l.b16 %v3769
        %v3802 = vunpack.c.l.b16 %v3770
        %v3803 = vunpack.c.l.b16 %v3771
        %v3804 = vunpack.c.l.b16 %v3772
        %v3805 = vunpack.c.l.b16 %v3773
        %v3806 = vunpack.c.l.b16 %v3774
        %v3807 = vunpack.c.l.b16 %v3775
        %v3808 = vunpack.c.l.b16 %v3776
        %v3809 = vpack.c.b16 %v3794, %v3793
        %v3810 = vpack.c.b16 %v3796, %v3795
        %v3811 = vpack.c.b16 %v3798, %v3797
        %v3812 = vpack.c.b16 %v3800, %v3799
        %v3813 = vpack.c.b16 %v3802, %v3801
        %v3814 = vpack.c.b16 %v3804, %v3803
        %v3815 = vpack.c.b16 %v3806, %v3805
        %v3816 = vpack.c.b16 %v3808, %v3807
        %3825 = vmatprep.subr.bf16.mxu0 0
        %3826 = vmatpush1.bf16.msra.mxu0 %v3809
        %3827 = vmatprep.subr.bf16.mxu0 0
        %3828 = vmatpush1.bf16.msra.mxu0 %v3810
        %3829 = vmatprep.subr.bf16.mxu0 0
        %3830 = vmatpush1.bf16.msra.mxu0 %v3811
        %3831 = vmatprep.subr.bf16.mxu0 0
        %3832 = vmatpush1.bf16.msra.mxu0 %v3812
        %3833 = vmatprep.subr.bf16.mxu0 0
        %3834 = vmatpush1.bf16.msra.mxu0 %v3813
        %3835 = vmatprep.subr.bf16.mxu0 0
        %3836 = vmatpush1.bf16.msra.mxu0 %v3814
        %3837 = vmatprep.subr.bf16.mxu0 0
        %3838 = vmatpush1.bf16.msra.mxu0 %v3815
        %3839 = vmatprep.subr.bf16.mxu0 0
        %3840 = vmatpush1.bf16.msra.mxu0 %v3816
        %3841 = vmatprep.subr.bf16.mxu0 0
        %3842 = vmatpush1.bf16.msra.mxu0 0
        %3843 = vmatprep.subr.bf16.mxu0 0
        %3844 = vmatpush1.bf16.msra.mxu0 0
        %3845 = vmatprep.subr.bf16.mxu0 0
        %3846 = vmatpush1.bf16.msra.mxu0 0
        %3847 = vmatprep.subr.bf16.mxu0 0
        %3848 = vmatpush1.bf16.msra.mxu0 0
        %3849 = vmatprep.subr.bf16.mxu0 0
        %3850 = vmatpush1.bf16.msra.mxu0 0
        %3851 = vmatprep.subr.bf16.mxu0 0
        %3852 = vmatpush1.bf16.msra.mxu0 0
        %3853 = vmatprep.subr.bf16.mxu0 0
        %3854 = vmatpush1.bf16.msra.mxu0 0
        %3855 = vmatprep.subr.bf16.mxu0 0
        %3856 = vmatpush1.bf16.msra.mxu0 0
        %3857 = vmatprep.mubr.bf16.mxu0 0
        %3858 = vmatmul.mubr.bf16.gmra.mrb[0].mxu0 %v3759
        %v3859 = vpop.f32.mrb[0].mxu0
        %v3860 = vadd.f32 0.0, %v3859
        %v3861 = vpop.f32.mrb[0].mxu0
        %v3862 = vpop.f32.mrb[0].mxu0
        %v3863 = vpop.f32.mrb[0].mxu0
        %3864 = vdwg.mxu0
        %v3865 = vadd.f32 %v3712, %v3860
        %v3866 = vsel %vm3417, %v2646, 0
        %3868 = vmatprep.subr.bf16.mxu0 0
        %3869 = vmatpush1.bf16.msra.mxu0 %v3422
        %3870 = vmatprep.subr.bf16.mxu0 0
        %3871 = vmatpush1.bf16.msra.mxu0 0
        %3872 = vmatprep.subr.bf16.mxu0 0
        %3873 = vmatpush1.bf16.msra.mxu0 0
        %3874 = vmatprep.subr.bf16.mxu0 0
        %3875 = vmatpush1.bf16.msra.mxu0 0
        %3876 = vmatprep.subr.bf16.mxu0 0
        %3877 = vmatpush1.bf16.msra.mxu0 0
        %3878 = vmatprep.subr.bf16.mxu0 0
        %3879 = vmatpush1.bf16.msra.mxu0 0
        %3880 = vmatprep.subr.bf16.mxu0 0
        %3881 = vmatpush1.bf16.msra.mxu0 0
        %3882 = vmatprep.subr.bf16.mxu0 0
        %3883 = vmatpush1.bf16.msra.mxu0 0
        %3884 = vmatprep.subr.bf16.mxu0 0
        %3885 = vmatpush1.bf16.msra.mxu0 0
        %3886 = vmatprep.subr.bf16.mxu0 0
        %3887 = vmatpush1.bf16.msra.mxu0 0
        %3888 = vmatprep.subr.bf16.mxu0 0
        %3889 = vmatpush1.bf16.msra.mxu0 0
        %3890 = vmatprep.subr.bf16.mxu0 0
        %3891 = vmatpush1.bf16.msra.mxu0 0
        %3892 = vmatprep.subr.bf16.mxu0 0
        %3893 = vmatpush1.bf16.msra.mxu0 0
        %3894 = vmatprep.subr.bf16.mxu0 0
        %3895 = vmatpush1.bf16.msra.mxu0 0
        %3896 = vmatprep.subr.bf16.mxu0 0
        %3897 = vmatpush1.bf16.msra.mxu0 0
        %3898 = vmatprep.subr.bf16.mxu0 0
        %3899 = vmatpush1.bf16.msra.mxu0 0
        %3900 = vmatprep.mubr.bf16.mxu0 0
        %3901 = vmatmul.mubr.bf16.gmra.mrb[0].mxu0 %v3866
        %v3902 = vpop.f32.mrb[0].mxu0
        %v3903 = vadd.f32 0.0, %v3902
        %v3904 = vpop.f32.mrb[0].mxu0
        %v3905 = vpop.f32.mrb[0].mxu0
        %v3906 = vpop.f32.mrb[0].mxu0
        %3907 = vdwg.mxu0
        %v3908 = vpack.c.bf16 %v3903, %v3903
        %s3909 = scalar_lea.vmem %s9, 192
        %v3910 = vld [vmem:[%s3909] sm:$0xf]
        %v3911 = vld [vmem:[%s3909 + $0x4] sm:$0xf]
        %v3912 = vld [vmem:[%s3909 + $0x8] sm:$0xf]
        %v3913 = vld [vmem:[%s3909 + $0xc] sm:$0xf]
        %v3914 = vld [vmem:[%s3909 + $0x10] sm:$0xf]
        %v3915 = vld [vmem:[%s3909 + $0x14] sm:$0xf]
        %v3916 = vld [vmem:[%s3909 + $0x18] sm:$0xf]
        %v3917 = vld [vmem:[%s3909 + $0x1c] sm:$0xf]
        %v3918 = vld [vmem:[%s3909 + $0x20] sm:$0xf]
        %v3919 = vld [vmem:[%s3909 + $0x24] sm:$0xf]
        %v3920 = vld [vmem:[%s3909 + $0x28] sm:$0xf]
        %v3921 = vld [vmem:[%s3909 + $0x2c] sm:$0xf]
        %v3922 = vld [vmem:[%s3909 + $0x30] sm:$0xf]
        %v3923 = vld [vmem:[%s3909 + $0x34] sm:$0xf]
        %v3924 = vld [vmem:[%s3909 + $0x38] sm:$0xf]
        %v3925 = vld [vmem:[%s3909 + $0x3c] sm:$0xf]
        %v3942 = vunpack.c.l.b16 %v3910
        %v3943 = vunpack.c.l.b16 %v3911
        %v3944 = vunpack.c.l.b16 %v3912
        %v3945 = vunpack.c.l.b16 %v3913
        %v3946 = vunpack.c.l.b16 %v3914
        %v3947 = vunpack.c.l.b16 %v3915
        %v3948 = vunpack.c.l.b16 %v3916
        %v3949 = vunpack.c.l.b16 %v3917
        %v3950 = vunpack.c.l.b16 %v3918
        %v3951 = vunpack.c.l.b16 %v3919
        %v3952 = vunpack.c.l.b16 %v3920
        %v3953 = vunpack.c.l.b16 %v3921
        %v3954 = vunpack.c.l.b16 %v3922
        %v3955 = vunpack.c.l.b16 %v3923
        %v3956 = vunpack.c.l.b16 %v3924
        %v3957 = vunpack.c.l.b16 %v3925
        %v3958 = vpack.c.b16 %v3943, %v3942
        %v3959 = vpack.c.b16 %v3945, %v3944
        %v3960 = vpack.c.b16 %v3947, %v3946
        %v3961 = vpack.c.b16 %v3949, %v3948
        %v3962 = vpack.c.b16 %v3951, %v3950
        %v3963 = vpack.c.b16 %v3953, %v3952
        %v3964 = vpack.c.b16 %v3955, %v3954
        %v3965 = vpack.c.b16 %v3957, %v3956
        %3974 = vmatprep.subr.bf16.mxu0 0
        %3975 = vmatpush1.bf16.msra.mxu0 %v3958
        %3976 = vmatprep.subr.bf16.mxu0 0
        %3977 = vmatpush1.bf16.msra.mxu0 %v3959
        %3978 = vmatprep.subr.bf16.mxu0 0
        %3979 = vmatpush1.bf16.msra.mxu0 %v3960
        %3980 = vmatprep.subr.bf16.mxu0 0
        %3981 = vmatpush1.bf16.msra.mxu0 %v3961
        %3982 = vmatprep.subr.bf16.mxu0 0
        %3983 = vmatpush1.bf16.msra.mxu0 %v3962
        %3984 = vmatprep.subr.bf16.mxu0 0
        %3985 = vmatpush1.bf16.msra.mxu0 %v3963
        %3986 = vmatprep.subr.bf16.mxu0 0
        %3987 = vmatpush1.bf16.msra.mxu0 %v3964
        %3988 = vmatprep.subr.bf16.mxu0 0
        %3989 = vmatpush1.bf16.msra.mxu0 %v3965
        %3990 = vmatprep.subr.bf16.mxu0 0
        %3991 = vmatpush1.bf16.msra.mxu0 0
        %3992 = vmatprep.subr.bf16.mxu0 0
        %3993 = vmatpush1.bf16.msra.mxu0 0
        %3994 = vmatprep.subr.bf16.mxu0 0
        %3995 = vmatpush1.bf16.msra.mxu0 0
        %3996 = vmatprep.subr.bf16.mxu0 0
        %3997 = vmatpush1.bf16.msra.mxu0 0
        %3998 = vmatprep.subr.bf16.mxu0 0
        %3999 = vmatpush1.bf16.msra.mxu0 0
        %4000 = vmatprep.subr.bf16.mxu0 0
        %4001 = vmatpush1.bf16.msra.mxu0 0
        %4002 = vmatprep.subr.bf16.mxu0 0
        %4003 = vmatpush1.bf16.msra.mxu0 0
        %4004 = vmatprep.subr.bf16.mxu0 0
        %4005 = vmatpush1.bf16.msra.mxu0 0
        %4006 = vmatprep.mubr.bf16.mxu0 0
        %4007 = vmatmul.mubr.bf16.gmra.mrb[0].mxu0 %v3908
        %v4008 = vpop.f32.mrb[0].mxu0
        %v4009 = vadd.f32 0.0, %v4008
        %v4010 = vpop.f32.mrb[0].mxu0
        %v4011 = vpop.f32.mrb[0].mxu0
        %v4012 = vpop.f32.mrb[0].mxu0
        %4013 = vdwg.mxu0
        %v4014 = vadd.f32 %v3865, %v4009
        %v4015 = vld [vmem:[%s10] sm:$0x1]
        %v4017 = vlaneseq
        %v4018 = vshrl.u32 %v4017, 7
        %v4019 = vsub.s32 0, %v4018
        %v4020 = vrot.slane %v4015, %v4019
        %v4022 = vadd.f32 %v4014, %v4020
        %v4023 = vmul.f32 %v4022, 0.2
        %v4024 = vmax.f32 %v4022, %v4023
        %v4025 = vpack.c.bf16 %v4024, %v4024
        %s4026 = scalar_lea.vmem %s11, 64
        %v4027 = vld [vmem:[%s4026] sm:$0xf]
        %v4028 = vld [vmem:[%s4026 + $0x4] sm:$0xf]
        %v4029 = vld [vmem:[%s4026 + $0x8] sm:$0xf]
        %v4030 = vld [vmem:[%s4026 + $0xc] sm:$0xf]
        %v4031 = vld [vmem:[%s4026 + $0x10] sm:$0xf]
        %v4032 = vld [vmem:[%s4026 + $0x14] sm:$0xf]
        %v4033 = vld [vmem:[%s4026 + $0x18] sm:$0xf]
        %v4034 = vld [vmem:[%s4026 + $0x1c] sm:$0xf]
        %v4035 = vld [vmem:[%s4026 + $0x20] sm:$0xf]
        %v4036 = vld [vmem:[%s4026 + $0x24] sm:$0xf]
        %v4037 = vld [vmem:[%s4026 + $0x28] sm:$0xf]
        %v4038 = vld [vmem:[%s4026 + $0x2c] sm:$0xf]
        %v4039 = vld [vmem:[%s4026 + $0x30] sm:$0xf]
        %v4040 = vld [vmem:[%s4026 + $0x34] sm:$0xf]
        %v4041 = vld [vmem:[%s4026 + $0x38] sm:$0xf]
        %v4042 = vld [vmem:[%s4026 + $0x3c] sm:$0xf]
        %s4043 = scalar_lea.vmem %s11, 128
        %v4044 = vld [vmem:[%s4043] sm:$0xf]
        %v4045 = vld [vmem:[%s4043 + $0x4] sm:$0xf]
        %v4046 = vld [vmem:[%s4043 + $0x8] sm:$0xf]
        %v4047 = vld [vmem:[%s4043 + $0xc] sm:$0xf]
        %v4048 = vld [vmem:[%s4043 + $0x10] sm:$0xf]
        %v4049 = vld [vmem:[%s4043 + $0x14] sm:$0xf]
        %v4050 = vld [vmem:[%s4043 + $0x18] sm:$0xf]
        %v4051 = vld [vmem:[%s4043 + $0x1c] sm:$0xf]
        %v4052 = vld [vmem:[%s4043 + $0x20] sm:$0xf]
        %v4053 = vld [vmem:[%s4043 + $0x24] sm:$0xf]
        %v4054 = vld [vmem:[%s4043 + $0x28] sm:$0xf]
        %v4055 = vld [vmem:[%s4043 + $0x2c] sm:$0xf]
        %v4056 = vld [vmem:[%s4043 + $0x30] sm:$0xf]
        %v4057 = vld [vmem:[%s4043 + $0x34] sm:$0xf]
        %v4058 = vld [vmem:[%s4043 + $0x38] sm:$0xf]
        %v4059 = vld [vmem:[%s4043 + $0x3c] sm:$0xf]
        %v4061 = vshrl.u32 %v4025, 16
        %v4080 = vunpack.c.l.b16 %v4044
        %v4081 = vunpack.c.l.b16 %v4045
        %v4082 = vunpack.c.l.b16 %v4046
        %v4083 = vunpack.c.l.b16 %v4047
        %v4084 = vunpack.c.l.b16 %v4048
        %v4085 = vunpack.c.l.b16 %v4049
        %v4086 = vunpack.c.l.b16 %v4050
        %v4087 = vunpack.c.l.b16 %v4051
        %v4088 = vunpack.c.l.b16 %v4052
        %v4089 = vunpack.c.l.b16 %v4053
        %v4090 = vunpack.c.l.b16 %v4054
        %v4091 = vunpack.c.l.b16 %v4055
        %v4092 = vunpack.c.l.b16 %v4056
        %v4093 = vunpack.c.l.b16 %v4057
        %v4094 = vunpack.c.l.b16 %v4058
        %v4095 = vunpack.c.l.b16 %v4059
        %v4096 = vpack.c.b16 %v4081, %v4080
        %v4097 = vpack.c.b16 %v4083, %v4082
        %v4098 = vpack.c.b16 %v4085, %v4084
        %v4099 = vpack.c.b16 %v4087, %v4086
        %v4100 = vpack.c.b16 %v4089, %v4088
        %v4101 = vpack.c.b16 %v4091, %v4090
        %v4102 = vpack.c.b16 %v4093, %v4092
        %v4103 = vpack.c.b16 %v4095, %v4094
        %4112 = vmatprep.subr.bf16.mxu0 0
        %4113 = vmatpush1.bf16.msra.mxu0 %v4096
        %4114 = vmatprep.subr.bf16.mxu0 0
        %4115 = vmatpush1.bf16.msra.mxu0 %v4097
        %4116 = vmatprep.subr.bf16.mxu0 0
        %4117 = vmatpush1.bf16.msra.mxu0 %v4098
        %4118 = vmatprep.subr.bf16.mxu0 0
        %4119 = vmatpush1.bf16.msra.mxu0 %v4099
        %4120 = vmatprep.subr.bf16.mxu0 0
        %4121 = vmatpush1.bf16.msra.mxu0 %v4100
        %4122 = vmatprep.subr.bf16.mxu0 0
        %4123 = vmatpush1.bf16.msra.mxu0 %v4101
        %4124 = vmatprep.subr.bf16.mxu0 0
        %4125 = vmatpush1.bf16.msra.mxu0 %v4102
        %4126 = vmatprep.subr.bf16.mxu0 0
        %4127 = vmatpush1.bf16.msra.mxu0 %v4103
        %4128 = vmatprep.subr.bf16.mxu0 0
        %4129 = vmatpush1.bf16.msra.mxu0 0
        %4130 = vmatprep.subr.bf16.mxu0 0
        %4131 = vmatpush1.bf16.msra.mxu0 0
        %4132 = vmatprep.subr.bf16.mxu0 0
        %4133 = vmatpush1.bf16.msra.mxu0 0
        %4134 = vmatprep.subr.bf16.mxu0 0
        %4135 = vmatpush1.bf16.msra.mxu0 0
        %4136 = vmatprep.subr.bf16.mxu0 0
        %4137 = vmatpush1.bf16.msra.mxu0 0
        %4138 = vmatprep.subr.bf16.mxu0 0
        %4139 = vmatpush1.bf16.msra.mxu0 0
        %4140 = vmatprep.subr.bf16.mxu0 0
        %4141 = vmatpush1.bf16.msra.mxu0 0
        %4142 = vmatprep.subr.bf16.mxu0 0
        %4143 = vmatpush1.bf16.msra.mxu0 0
        %4144 = vmatprep.mubr.bf16.mxu0 0
        %4145 = vmatmul.mubr.bf16.gmra.mrb[0].mxu0 %v4061
        %v4146 = vpop.f32.mrb[0].mxu0
        %v4147 = vadd.f32 0.0, %v4146
        %v4148 = vpop.f32.mrb[0].mxu0
        %v4149 = vpop.f32.mrb[0].mxu0
        %v4150 = vpop.f32.mrb[0].mxu0
        %4151 = vdwg.mxu0
        %v4168 = vunpack.c.l.b16 %v4027
        %v4169 = vunpack.c.l.b16 %v4028
        %v4170 = vunpack.c.l.b16 %v4029
        %v4171 = vunpack.c.l.b16 %v4030
        %v4172 = vunpack.c.l.b16 %v4031
        %v4173 = vunpack.c.l.b16 %v4032
        %v4174 = vunpack.c.l.b16 %v4033
        %v4175 = vunpack.c.l.b16 %v4034
        %v4176 = vunpack.c.l.b16 %v4035
        %v4177 = vunpack.c.l.b16 %v4036
        %v4178 = vunpack.c.l.b16 %v4037
        %v4179 = vunpack.c.l.b16 %v4038
        %v4180 = vunpack.c.l.b16 %v4039
        %v4181 = vunpack.c.l.b16 %v4040
        %v4182 = vunpack.c.l.b16 %v4041
        %v4183 = vunpack.c.l.b16 %v4042
        %v4184 = vpack.c.b16 %v4169, %v4168
        %v4185 = vpack.c.b16 %v4171, %v4170
        %v4186 = vpack.c.b16 %v4173, %v4172
        %v4187 = vpack.c.b16 %v4175, %v4174
        %v4188 = vpack.c.b16 %v4177, %v4176
        %v4189 = vpack.c.b16 %v4179, %v4178
        %v4190 = vpack.c.b16 %v4181, %v4180
        %v4191 = vpack.c.b16 %v4183, %v4182
        %4200 = vmatprep.subr.bf16.mxu0 0
        %4201 = vmatpush1.bf16.msra.mxu0 %v4184
        %4202 = vmatprep.subr.bf16.mxu0 0
        %4203 = vmatpush1.bf16.msra.mxu0 %v4185
        %4204 = vmatprep.subr.bf16.mxu0 0
        %4205 = vmatpush1.bf16.msra.mxu0 %v4186
        %4206 = vmatprep.subr.bf16.mxu0 0
        %4207 = vmatpush1.bf16.msra.mxu0 %v4187
        %4208 = vmatprep.subr.bf16.mxu0 0
        %4209 = vmatpush1.bf16.msra.mxu0 %v4188
        %4210 = vmatprep.subr.bf16.mxu0 0
        %4211 = vmatpush1.bf16.msra.mxu0 %v4189
        %4212 = vmatprep.subr.bf16.mxu0 0
        %4213 = vmatpush1.bf16.msra.mxu0 %v4190
        %4214 = vmatprep.subr.bf16.mxu0 0
        %4215 = vmatpush1.bf16.msra.mxu0 %v4191
        %4216 = vmatprep.subr.bf16.mxu0 0
        %4217 = vmatpush1.bf16.msra.mxu0 0
        %4218 = vmatprep.subr.bf16.mxu0 0
        %4219 = vmatpush1.bf16.msra.mxu0 0
        %4220 = vmatprep.subr.bf16.mxu0 0
        %4221 = vmatpush1.bf16.msra.mxu0 0
        %4222 = vmatprep.subr.bf16.mxu0 0
        %4223 = vmatpush1.bf16.msra.mxu0 0
        %4224 = vmatprep.subr.bf16.mxu0 0
        %4225 = vmatpush1.bf16.msra.mxu0 0
        %4226 = vmatprep.subr.bf16.mxu0 0
        %4227 = vmatpush1.bf16.msra.mxu0 0
        %4228 = vmatprep.subr.bf16.mxu0 0
        %4229 = vmatpush1.bf16.msra.mxu0 0
        %4230 = vmatprep.subr.bf16.mxu0 0
        %4231 = vmatpush1.bf16.msra.mxu0 0
        %4232 = vmatprep.mubr.bf16.mxu0 0
        %4233 = vmatmul.mubr.bf16.gmra.mrb[0].mxu0 %v4025
        %v4234 = vpop.f32.mrb[0].mxu0
        %v4235 = vadd.f32 %v4147, %v4234
        %v4236 = vpop.f32.mrb[0].mxu0
        %v4237 = vpop.f32.mrb[0].mxu0
        %v4238 = vpop.f32.mrb[0].mxu0
        %4239 = vdwg.mxu0
        %v4240 = vld [vmem:[%s12] sm:$0x1]
        %v4241 = vadd.f32 %v4235, %v4240
        %v4242 = vmul.f32 %v4241, 0.2
        %v4243 = vmax.f32 %v4241, %v4242
        %v4244 = vpack.c.bf16 %v4243, %v4243
        %v4245 = vld [vmem:[%s13] sm:$0xf]
        %v4246 = vld [vmem:[%s13 + $0x4] sm:$0xf]
        %v4247 = vld [vmem:[%s13 + $0x8] sm:$0xf]
        %v4248 = vld [vmem:[%s13 + $0xc] sm:$0xf]
        %v4249 = vld [vmem:[%s13 + $0x10] sm:$0xf]
        %v4250 = vld [vmem:[%s13 + $0x14] sm:$0xf]
        %v4251 = vld [vmem:[%s13 + $0x18] sm:$0xf]
        %v4252 = vld [vmem:[%s13 + $0x1c] sm:$0xf]
        %v4253 = vld [vmem:[%s13 + $0x20] sm:$0xf]
        %v4254 = vld [vmem:[%s13 + $0x24] sm:$0xf]
        %v4255 = vld [vmem:[%s13 + $0x28] sm:$0xf]
        %v4256 = vld [vmem:[%s13 + $0x2c] sm:$0xf]
        %v4257 = vld [vmem:[%s13 + $0x30] sm:$0xf]
        %v4258 = vld [vmem:[%s13 + $0x34] sm:$0xf]
        %v4259 = vld [vmem:[%s13 + $0x38] sm:$0xf]
        %v4260 = vld [vmem:[%s13 + $0x3c] sm:$0xf]
        %v4261 = vld [vmem:[%s14] sm:$0x1]
        %v4278 = vunpack.c.l.b16 %v4245
        %v4279 = vunpack.c.l.b16 %v4246
        %v4280 = vunpack.c.l.b16 %v4247
        %v4281 = vunpack.c.l.b16 %v4248
        %v4282 = vunpack.c.l.b16 %v4249
        %v4283 = vunpack.c.l.b16 %v4250
        %v4284 = vunpack.c.l.b16 %v4251
        %v4285 = vunpack.c.l.b16 %v4252
        %v4286 = vunpack.c.l.b16 %v4253
        %v4287 = vunpack.c.l.b16 %v4254
        %v4288 = vunpack.c.l.b16 %v4255
        %v4289 = vunpack.c.l.b16 %v4256
        %v4290 = vunpack.c.l.b16 %v4257
        %v4291 = vunpack.c.l.b16 %v4258
        %v4292 = vunpack.c.l.b16 %v4259
        %v4293 = vunpack.c.l.b16 %v4260
        %v4294 = vpack.c.b16 %v4279, %v4278
        %v4295 = vpack.c.b16 %v4281, %v4280
        %v4296 = vpack.c.b16 %v4283, %v4282
        %v4297 = vpack.c.b16 %v4285, %v4284
        %v4298 = vpack.c.b16 %v4287, %v4286
        %v4299 = vpack.c.b16 %v4289, %v4288
        %v4300 = vpack.c.b16 %v4291, %v4290
        %v4301 = vpack.c.b16 %v4293, %v4292
        %4310 = vmatprep.subr.bf16.mxu0 0
        %4311 = vmatpush1.bf16.msra.mxu0 %v4294
        %4312 = vmatprep.subr.bf16.mxu0 0
        %4313 = vmatpush1.bf16.msra.mxu0 %v4295
        %4314 = vmatprep.subr.bf16.mxu0 0
        %4315 = vmatpush1.bf16.msra.mxu0 %v4296
        %4316 = vmatprep.subr.bf16.mxu0 0
        %4317 = vmatpush1.bf16.msra.mxu0 %v4297
        %4318 = vmatprep.subr.bf16.mxu0 0
        %4319 = vmatpush1.bf16.msra.mxu0 %v4298
        %4320 = vmatprep.subr.bf16.mxu0 0
        %4321 = vmatpush1.bf16.msra.mxu0 %v4299
        %4322 = vmatprep.subr.bf16.mxu0 0
        %4323 = vmatpush1.bf16.msra.mxu0 %v4300
        %4324 = vmatprep.subr.bf16.mxu0 0
        %4325 = vmatpush1.bf16.msra.mxu0 %v4301
        %4326 = vmatprep.subr.bf16.mxu0 0
        %4327 = vmatpush1.bf16.msra.mxu0 0
        %4328 = vmatprep.subr.bf16.mxu0 0
        %4329 = vmatpush1.bf16.msra.mxu0 0
        %4330 = vmatprep.subr.bf16.mxu0 0
        %4331 = vmatpush1.bf16.msra.mxu0 0
        %4332 = vmatprep.subr.bf16.mxu0 0
        %4333 = vmatpush1.bf16.msra.mxu0 0
        %4334 = vmatprep.subr.bf16.mxu0 0
        %4335 = vmatpush1.bf16.msra.mxu0 0
        %4336 = vmatprep.subr.bf16.mxu0 0
        %4337 = vmatpush1.bf16.msra.mxu0 0
        %4338 = vmatprep.subr.bf16.mxu0 0
        %4339 = vmatpush1.bf16.msra.mxu0 0
        %4340 = vmatprep.subr.bf16.mxu0 0
        %4341 = vmatpush1.bf16.msra.mxu0 0
        %4342 = vmatprep.mubr.bf16.mxu0 0
        %4343 = vmatmul.mubr.bf16.gmra.mrb[0].mxu0 %v4244
        %v4344 = vpop.f32.mrb[0].mxu0
        %v4345 = vadd.f32 %v4261, %v4344
        %v4346 = vpop.f32.mrb[0].mxu0
        %v4347 = vpop.f32.mrb[0].mxu0
        %v4348 = vpop.f32.mrb[0].mxu0
        %4349 = vdwg.mxu0
        %v4350 = vmul.f32 %v4345, 0.2
        %v4351 = vmax.f32 %v4345, %v4350
        %v4352 = vpack.c.bf16 %v4351, %v4351
        %v4353 = vld [vmem:[%s15] sm:$0xf]
        %v4354 = vld [vmem:[%s15 + $0x4] sm:$0xf]
        %v4355 = vld [vmem:[%s15 + $0x8] sm:$0xf]
        %v4356 = vld [vmem:[%s15 + $0xc] sm:$0xf]
        %v4357 = vld [vmem:[%s15 + $0x10] sm:$0xf]
        %v4358 = vld [vmem:[%s15 + $0x14] sm:$0xf]
        %v4359 = vld [vmem:[%s15 + $0x18] sm:$0xf]
        %v4360 = vld [vmem:[%s15 + $0x1c] sm:$0xf]
        %v4361 = vld [vmem:[%s16] sm:$0x1]
        %v4370 = vunpack.c.l.b16 %v4353
        %v4371 = vunpack.c.l.b16 %v4354
        %v4372 = vunpack.c.l.b16 %v4355
        %v4373 = vunpack.c.l.b16 %v4356
        %v4374 = vunpack.c.l.b16 %v4357
        %v4375 = vunpack.c.l.b16 %v4358
        %v4376 = vunpack.c.l.b16 %v4359
        %v4377 = vunpack.c.l.b16 %v4360
        %v4378 = vpack.c.b16 %v4371, %v4370
        %v4379 = vpack.c.b16 %v4373, %v4372
        %v4380 = vpack.c.b16 %v4375, %v4374
        %v4381 = vpack.c.b16 %v4377, %v4376
        %v4387 = vsel %vm650, %v4352, 0
        %4389 = vmatprep.subr.bf16.mxu0 0
        %4390 = vmatpush1.bf16.msra.mxu0 %v4378
        %4391 = vmatprep.subr.bf16.mxu0 0
        %4392 = vmatpush1.bf16.msra.mxu0 %v4379
        %4393 = vmatprep.subr.bf16.mxu0 0
        %4394 = vmatpush1.bf16.msra.mxu0 %v4380
        %4395 = vmatprep.subr.bf16.mxu0 0
        %4396 = vmatpush1.bf16.msra.mxu0 %v4381
        %4397 = vmatprep.subr.bf16.mxu0 0
        %4398 = vmatpush1.bf16.msra.mxu0 0
        %4399 = vmatprep.subr.bf16.mxu0 0
        %4400 = vmatpush1.bf16.msra.mxu0 0
        %4401 = vmatprep.subr.bf16.mxu0 0
        %4402 = vmatpush1.bf16.msra.mxu0 0
        %4403 = vmatprep.subr.bf16.mxu0 0
        %4404 = vmatpush1.bf16.msra.mxu0 0
        %4405 = vmatprep.subr.bf16.mxu0 0
        %4406 = vmatpush1.bf16.msra.mxu0 0
        %4407 = vmatprep.subr.bf16.mxu0 0
        %4408 = vmatpush1.bf16.msra.mxu0 0
        %4409 = vmatprep.subr.bf16.mxu0 0
        %4410 = vmatpush1.bf16.msra.mxu0 0
        %4411 = vmatprep.subr.bf16.mxu0 0
        %4412 = vmatpush1.bf16.msra.mxu0 0
        %4413 = vmatprep.subr.bf16.mxu0 0
        %4414 = vmatpush1.bf16.msra.mxu0 0
        %4415 = vmatprep.subr.bf16.mxu0 0
        %4416 = vmatpush1.bf16.msra.mxu0 0
        %4417 = vmatprep.subr.bf16.mxu0 0
        %4418 = vmatpush1.bf16.msra.mxu0 0
        %4419 = vmatprep.subr.bf16.mxu0 0
        %4420 = vmatpush1.bf16.msra.mxu0 0
        %4421 = vmatprep.mubr.bf16.mxu0 0
        %4422 = vmatmul.mubr.bf16.gmra.mrb[0].mxu0 %v4387
        %v4423 = vpop.f32.mrb[0].mxu0
        %v4424 = vadd.f32 %v4361, %v4423
        %v4425 = vpop.f32.mrb[0].mxu0
        %v4426 = vpop.f32.mrb[0].mxu0
        %v4427 = vpop.f32.mrb[0].mxu0
        %4428 = vdwg.mxu0
        %v4429 = vmul.f32 %v4424, 0.2
        %v4430 = vmax.f32 %v4424, %v4429
        %vm4431 = vcmask 253952
        %4432 = vst.msk [vmem:[%s570] sm:$0x1] %vm4431, %v4430
        %s4433 = sand.u32 %s403, 1
        %s4434 = scalar_lea.sflag [#allocation4], %s4433
        %s4435 = sand.u32 %s403, 1
        %s4436 = scalar_lea.vmem [#allocation7], %s4435
        // Predicated region
        $region97: #{_lambda_.1} parent=87 // pred_check
          %p4437 = pneg %p413
        $region98: #{_lambda_.1} parent=87 // pred_check_branch
          %4439 = sbr.rel (%p4437) target = $region100
        $region99: #{_lambda_.1} parent=87 // pred_region
          %s4441 = ssub.s32 16, 16
          %4442 = vsyncadd %s4434, %s4441
          %s4443 = smul.addr %s33, 16
          %s4444 = scalar_lea.hbm %s17, %s4443
          %s4446 = sshll.u32 %s4436, 4
          %s4447 = int_to_ptr.vmem [resolvable:$true] %s4446
          %4449 = dma.vmem_to_hbm [thread:$0]  %s4447, 16, %s4444, %s4434
        $region100: #{_lambda_.1} parent=87 // pred_fallthru
          _
      $region88: #{_lambda_.1} parent=5 // pred_fallthru
        _
      %p4450 = scmp.le.s32.totalorder 2, %s28
      // Predicated region
      $region101: #{_lambda_.1} parent=5 // pred_check
        %p4451 = pneg %p4450
      $region102: #{_lambda_.1} parent=5 // pred_check_branch
        %4453 = sbr.rel (%p4451) target = $region104
      $region103: #{_lambda_.1} parent=5 // pred_region
        %s4454 = ssub.s32 %s28, 2
        // Predicated region
        $region105: #{_lambda_.1} parent=103 // pred_check
          %p4455 = pneg %p419
        $region106: #{_lambda_.1} parent=103 // pred_check_branch
          %4457 = sbr.rel (%p4455) target = $region108
        $region107: #{_lambda_.1} parent=103 // pred_region
          %s4458 = sand.u32 %s404, 1
          %s4459 = scalar_lea.sflag [#allocation4], %s4458
          %s4460 = sand.u32 %s404, 1
          %s4461 = scalar_lea.vmem [#allocation7], %s4460
          %4462 = dma.done %s4459, 16
        $region108: #{_lambda_.1} parent=103 // pred_fallthru
          _
      $region104: #{_lambda_.1} parent=5 // pred_fallthru
        _
    $region6: #{_lambda_.1} parent=1 // loop_footer
      %s32 = sadd.s32 1, %s28
    $region7: #{_lambda_.1} parent=1 // loop_footer_branch
      %27 = sbr.rel target = $region3
    $region8: #{_lambda_.1} parent=1 // loop_exit
      _
    %4463 = vsyncpa [#allocation3], 1
    %s4464 = scalar_lea.sflag [#allocation3], 1
    %4465 = vsyncpa %s4464, 1
    %4466 = vsyncpa [#allocation6], 1
    %4467 = vsyncpa [#allocation4], 1
    %s4468 = scalar_lea.sflag [#allocation4], 1
    %4469 = vsyncpa %s4468, 1

</llo_original>
